<compile_context>
chip_gen: v7x
topology: tpu7x:2x2x1
jax: 0.10.0
libtpu: 0.0.40
codegen_flags: <defaults>
</compile_context>

<pallas_src>
import functools

import jax
import jax.numpy as jnp
import numpy as np
from jax import lax
from jax.experimental import pallas as pl
from jax.experimental.pallas import tpu as pltpu


def _round_up(x, m):
    return ((x + m - 1) // m) * m


def _vmem_limit_bytes():
    # Default scoped VMEM is 32 MiB on all generations; realistic Tacotron2 sizes
    # (Cp=512, Hp=256, T~600-1000) need more.  Leave headroom below physical capacity
    # (v7x only has 64 MiB per TensorCore).
    try:
        cap = int(pltpu.get_tpu_info().vmem_capacity_bytes)
    except Exception:
        cap = 128 * 1024 * 1024
    return int(min(100 * 1024 * 1024, max(cap - 8 * 1024 * 1024, 32 * 1024 * 1024)))


# ------------------------------------------------------------------------------------------
# Fused per-language encoder kernel (grid = (num_langs,), output is a shared accumulator).
# ------------------------------------------------------------------------------------------
def _multi_encoder_kernel(
    # scalar prefetch
    len_ref,
    # inputs
    x_ref, convw_ref, scale_ref, shift_ref, wih_ref, whh_ref, b_ref, wmix_ref,
    # output (accumulator across the language grid axis)
    out_ref,
    # scratch
    xpad_scr, col_scr, gates_f_scr, gates_b_scr, outf_scr, outb_scr,
    *, num_blocks, K, T, Cp, Hp,
):
    lang = pl.program_id(0)
    pad = (K - 1) // 2
    off = _round_up(pad, 8)          # sublane-aligned start of the live activation rows
    base = off - pad                 # first row read by the shifted conv windows
    # TODO(synk): x_lenghts > T is silently clamped; pack_padded_sequence would error.
    L = jnp.minimum(len_ref[0], T)

    # ---------------- conv stack: all blocks fused, activations stay in VMEM (bf16) --------
    if pad > 0:
        # zero only the halo rows the shifted windows actually read
        xpad_scr[base:off, :] = jnp.zeros((pad, Cp), jnp.bfloat16)
        xpad_scr[off + T:off + T + pad, :] = jnp.zeros((pad, Cp), jnp.bfloat16)
    xpad_scr[off:off + T, :] = x_ref[...].astype(jnp.bfloat16)

    for blk in range(num_blocks):
        # im2col window slab (T, K*Cp): plain bf16 moves, no f32 round trip.
        # TODO(synk): on v5e (128-deep MXU) K shifted accumulating dots would avoid the
        # slab copies entirely; im2col kept here for v6e/v7x contraction fill.
        for k in range(K):
            col_scr[:, k * Cp:(k + 1) * Cp] = xpad_scr[base + k:base + k + T, :]
        y = jnp.dot(col_scr[...], convw_ref[0, blk],
                    preferred_element_type=jnp.float32)
        # folded Conv1d bias + BatchNorm(running stats) + ReLU; Dropout == identity (eval)
        act = jnp.maximum(y * scale_ref[0, blk] + shift_ref[0, blk], 0.0)
        xpad_scr[off:off + T, :] = act.astype(jnp.bfloat16)

    # ---------------- Bi-LSTM: one fused lane-dense (T, 8*Hp) input projection --------------
    proj = jnp.dot(xpad_scr[off:off + T, :], wih_ref[0],
                   preferred_element_type=jnp.float32) + b_ref[0]
    gates_f_scr[...] = proj[:, 0:4 * Hp]
    gates_b_scr[...] = proj[:, 4 * Hp:8 * Hp]

    # outputs past the true length stay zero (pad_packed_sequence behavior)
    outf_scr[...] = jnp.zeros_like(outf_scr)
    outb_scr[...] = jnp.zeros_like(outb_scr)

    def step(s, carry):
        # h_cat / c_cat are (1, 2*Hp) f32, columns = [forward | backward].
        # Padded lanes have zero weights/bias, so padded h/c lanes provably stay zero
        # (g gate at 0 pre-activation -> 2*sigmoid(0)-1 == 0).
        h_cat, c_cat = carry
        t_b = L - 1 - s
        # ONE bf16 recurrent matmul per step for both directions (block-diagonal whh),
        # f32 accumulation; carries stay f32 so error does not compound over L steps.
        rec = jnp.dot(h_cat.astype(jnp.bfloat16), whh_ref[0],
                      preferred_element_type=jnp.float32)          # (1, 8*Hp)
        gin = jnp.concatenate([gates_f_scr[pl.ds(s, 1), :],
                               gates_b_scr[pl.ds(t_b, 1), :]], axis=-1) + rec
        # one fused sigmoid over all 8 gate slabs; g-slabs were pre-scaled by 2 at pack
        # time, so tanh(g) == 2*sigmoid(2g) - 1.  PyTorch gate order i, f, g, o.
        sg = jax.nn.sigmoid(gin)
        i_cat = jnp.concatenate([sg[:, 0:Hp],              sg[:, 4 * Hp:5 * Hp]], axis=-1)
        f_cat = jnp.concatenate([sg[:, Hp:2 * Hp],         sg[:, 5 * Hp:6 * Hp]], axis=-1)
        g_cat = 2.0 * jnp.concatenate([sg[:, 2 * Hp:3 * Hp], sg[:, 6 * Hp:7 * Hp]],
                                      axis=-1) - 1.0
        o_cat = jnp.concatenate([sg[:, 3 * Hp:4 * Hp],     sg[:, 7 * Hp:8 * Hp]], axis=-1)
        c_cat = f_cat * c_cat + i_cat * g_cat
        h_cat = o_cat * jnp.tanh(c_cat)                    # one tanh for both directions
        outf_scr[pl.ds(s, 1), :] = h_cat[:, 0:Hp]
        outb_scr[pl.ds(t_b, 1), :] = h_cat[:, Hp:2 * Hp]
        return (h_cat, c_cat)

    z = jnp.zeros((1, 2 * Hp), jnp.float32)
    # loop only to the true length L (not T): no wasted recurrent steps, no per-step masking
    lax.fori_loop(0, L, step, (z, z))

    # ---------------- language-weighted accumulation into the shared (resident) output ------
    @pl.when(lang == 0)
    def _():
        out_ref[...] = jnp.zeros_like(out_ref)

    ex = jnp.concatenate([outf_scr[...], outb_scr[...]], axis=-1)   # (T, 2*Hp), 128-aligned
    out_ref[...] = out_ref[...] + wmix_ref[0] * ex


# ------------------------------------------------------------------------------------------
# Parameter init (natural shapes, deterministic) and packing into padded kernel layout.
# ------------------------------------------------------------------------------------------
def init_params(key, num_langs, input_dim, output_dim, num_blocks, kernel_size):
    H = output_dim // 2
    encoders = []
    for _ in range(num_langs):
        blocks = []
        cin = input_dim
        for _ in range(num_blocks):
            key, k1, k2 = jax.random.split(key, 3)
            w = jax.random.normal(k1, (kernel_size, cin, output_dim), jnp.float32)
            w = w * (1.0 / (cin * kernel_size) ** 0.5)
            bias = jax.random.normal(k2, (output_dim,), jnp.float32) * 0.1
            gamma = jnp.ones((output_dim,), jnp.float32)
            beta = jnp.zeros((output_dim,), jnp.float32)
            mean = jnp.zeros((output_dim,), jnp.float32)
            var = jnp.ones((output_dim,), jnp.float32)
            scale = gamma / jnp.sqrt(var + 1e-5)
            shift = (bias - mean) * scale + beta
            blocks.append({"w": w, "scale": scale, "shift": shift})
            cin = output_dim
        lstm = {}
        s = 1.0 / (H ** 0.5)
        for d in ("f", "b"):
            key, k1, k2, k3, k4 = jax.random.split(key, 5)
            lstm["wih_" + d] = jax.random.uniform(k1, (output_dim, 4 * H), jnp.float32, -s, s)
            lstm["whh_" + d] = jax.random.uniform(k2, (H, 4 * H), jnp.float32, -s, s)
            b_ih = jax.random.uniform(k3, (4 * H,), jnp.float32, -s, s)
            b_hh = jax.random.uniform(k4, (4 * H,), jnp.float32, -s, s)
            lstm["b_" + d] = b_ih + b_hh
        encoders.append({"blocks": blocks, "lstm": lstm})
    return encoders


def pack_params(encoders, input_dim, output_dim, kernel_size):
    """Stack per-language weights, pad channels / gate slabs to 128-lane alignment, pack the
    two directions' recurrent weights block-diagonally, and pre-scale the g (tanh) gate by 2
    so the kernel can use a single fused sigmoid (tanh(x) = 2*sigmoid(2x) - 1)."""
    num_langs = len(encoders)
    num_blocks = len(encoders[0]["blocks"])
    K = kernel_size
    H = output_dim // 2
    Hp = _round_up(H, 128)
    Cp = _round_up(max(input_dim, output_dim), 128)

    convw = np.zeros((num_langs, num_blocks, K * Cp, Cp), np.float32)
    scale = np.zeros((num_langs, num_blocks, 1, Cp), np.float32)
    shift = np.zeros((num_langs, num_blocks, 1, Cp), np.float32)
    wih = np.zeros((num_langs, Cp, 8 * Hp), np.float32)
    whh = np.zeros((num_langs, 2 * Hp, 8 * Hp), np.float32)     # block-diagonal fwd/bwd
    bias = np.zeros((num_langs, 1, 8 * Hp), np.float32)

    for l, enc in enumerate(encoders):
        for bidx, blk in enumerate(enc["blocks"]):
            w = np.asarray(blk["w"])                       # (K, Cin, Cout)
            cin, cout = w.shape[1], w.shape[2]
            for k in range(K):
                convw[l, bidx, k * Cp:k * Cp + cin, 0:cout] = w[k]
            scale[l, bidx, 0, 0:cout] = np.asarray(blk["scale"]).reshape(-1)
            shift[l, bidx, 0, 0:cout] = np.asarray(blk["shift"]).reshape(-1)
        lstm = enc["lstm"]
        for d, dn in enumerate(("f", "b")):
            wih_d = np.asarray(lstm["wih_" + dn])          # (output_dim, 4H)
            whh_d = np.asarray(lstm["whh_" + dn])          # (H, 4H)
            b_d = np.asarray(lstm["b_" + dn]).reshape(-1)  # (4H,)
            for g in range(4):
                sc = 2.0 if g == 2 else 1.0                # pre-scale tanh gate by 2
                c0 = d * 4 * Hp + g * Hp
                wih[l, 0:output_dim, c0:c0 + H] = sc * wih_d[:, g * H:(g + 1) * H]
                whh[l, d * Hp:d * Hp + H, c0:c0 + H] = sc * whh_d[:, g * H:(g + 1) * H]
                bias[l, 0, c0:c0 + H] = sc * b_d[g * H:(g + 1) * H]

    return {
        "convw": jnp.asarray(convw, jnp.bfloat16),   # bf16 MXU operands (f32 accumulation)
        "scale": jnp.asarray(scale),
        "shift": jnp.asarray(shift),
        "wih": jnp.asarray(wih, jnp.bfloat16),
        "whh": jnp.asarray(whh, jnp.bfloat16),       # bf16 recurrent weights, f32 accumulate
        "bias": jnp.asarray(bias),
    }


# ------------------------------------------------------------------------------------------
# Module forward.
# ------------------------------------------------------------------------------------------
def multi_encoder_forward(packed, x, x_lenghts, x_langs, *, output_dim):
    num_langs, num_blocks, KCp, Cp = packed["convw"].shape
    K = KCp // Cp
    Hp = packed["whh"].shape[1] // 2
    H = output_dim // 2
    B, T, Din = x.shape
    assert B == 1, "MultiEncoder's weight broadcasting requires batch size 1"

    # x_langs / x_langs.sum(2, keepdim=True)[0]  (faithful to the PyTorch quirk: every
    # sample is normalized by sample 0's per-timestep sums)
    normed = x_langs / x_langs.sum(axis=2, keepdims=True)[0]
    wmix = jnp.transpose(normed[0])[:, :, None]            # (num_langs, T, 1)
    length = x_lenghts.astype(jnp.int32).reshape(1)
    x_pad = jnp.pad(x[0].astype(jnp.float32), ((0, 0), (0, Cp - Din)))

    pad = (K - 1) // 2
    off = _round_up(pad, 8)
    kernel = functools.partial(_multi_encoder_kernel, num_blocks=num_blocks,
                               K=K, T=T, Cp=Cp, Hp=Hp)
    raw = pl.pallas_call(
        kernel,
        out_shape=jax.ShapeDtypeStruct((T, 2 * Hp), jnp.float32),
        grid_spec=pltpu.PrefetchScalarGridSpec(
            num_scalar_prefetch=1,
            grid=(num_langs,),
            in_specs=[
                pl.BlockSpec((T, Cp), lambda l, ln: (0, 0)),                          # x
                # TODO(synk): at real Tacotron2 sizes on v7x this all-blocks weight slab
                # should use pipeline_mode=pl.Buffered(1) or a manual per-block DMA.
                pl.BlockSpec((1, num_blocks, K * Cp, Cp), lambda l, ln: (l, 0, 0, 0)),# conv w
                pl.BlockSpec((1, num_blocks, 1, Cp), lambda l, ln: (l, 0, 0, 0)),     # scale
                pl.BlockSpec((1, num_blocks, 1, Cp), lambda l, ln: (l, 0, 0, 0)),     # shift
                pl.BlockSpec((1, Cp, 8 * Hp), lambda l, ln: (l, 0, 0)),               # wih
                pl.BlockSpec((1, 2 * Hp, 8 * Hp), lambda l, ln: (l, 0, 0)),           # whh
                pl.BlockSpec((1, 1, 8 * Hp), lambda l, ln: (l, 0, 0)),                # bias
                pl.BlockSpec((1, T, 1), lambda l, ln: (l, 0, 0)),                     # mix w
            ],
            out_specs=pl.BlockSpec((T, 2 * Hp), lambda l, ln: (0, 0)),                # accum
            scratch_shapes=[
                pltpu.VMEM((off + T + pad, Cp), jnp.bfloat16),  # padded bf16 activations
                pltpu.VMEM((T, K * Cp), jnp.bfloat16),          # im2col slab
                pltpu.VMEM((T, 4 * Hp), jnp.float32),           # fwd input-proj gates
                pltpu.VMEM((T, 4 * Hp), jnp.float32),           # bwd input-proj gates
                pltpu.VMEM((T, Hp), jnp.float32),               # fwd hidden states
                pltpu.VMEM((T, Hp), jnp.float32),               # bwd hidden states
            ],
        ),
        compiler_params=pltpu.CompilerParams(
            # language axis must be a reduction: the output block is a shared accumulator.
            # TODO(synk): on v7x a "parallel" language axis (2 TensorCores) would need
            # per-language output blocks + a tiny XLA reduce; kept as an accumulator here.
            dimension_semantics=("arbitrary",),
            vmem_limit_bytes=_vmem_limit_bytes(),
        ),
    )(length, x_pad, packed["convw"], packed["scale"], packed["shift"],
      packed["wih"], packed["whh"], packed["bias"], wmix)

    # un-pad the gate-aligned output: fwd hidden = lanes [0:H], bwd hidden = [Hp:Hp+H]
    out = jnp.concatenate([raw[:, 0:H], raw[:, Hp:Hp + H]], axis=-1)
    # TODO(synk): the PyTorch module returns None when *every* language weight is all-zero;
    # that host-dependent branch is not reproduced (zeros are returned instead).
    # TODO(synk): training-mode Dropout / batch-stat BatchNorm are not modeled (inference).
    return out[None]


if __name__ == "__main__":
    key = jax.random.PRNGKey(0)
    B, T = 1, 16
    input_dim, output_dim = 32, 32
    num_blocks, kernel_size, dropout = 3, 5, 0.5
    num_langs = 2

    k_x, k_lang, k_param = jax.random.split(key, 3)
    x = jax.random.normal(k_x, (B, T, input_dim), jnp.float32)
    x_lenghts = jnp.array([12], jnp.int32)
    x_langs = jax.random.uniform(k_lang, (B, T, num_langs), jnp.float32,
                                 minval=0.1, maxval=1.0)

    params = init_params(k_param, num_langs, input_dim, output_dim,
                         num_blocks, kernel_size)
    packed = pack_params(params, input_dim, output_dim, kernel_size)

    fwd = jax.jit(functools.partial(multi_encoder_forward, output_dim=output_dim))
    out = jax.block_until_ready(fwd(packed, x, x_lenghts, x_langs))

    assert out.shape == (B, T, output_dim), out.shape
    assert bool(jnp.all(jnp.isfinite(out)))
    # outputs past x_lenghts must be zero (pad_packed_sequence semantics)
    assert bool(jnp.all(out[:, int(x_lenghts[0]):, :] == 0.0))
    print("KERNEL_OK")
</pallas_src>

<mosaic_0001>
module attributes {stable_mosaic.version = 11 : i64} {
  func.func @_multi_encoder_kernel(%arg0: i32, %arg1: memref<1xi32, #tpu.memory_space<smem>>, %arg2: memref<16x128xf32, #tpu.memory_space<vmem>>, %arg3: memref<1x3x640x128xbf16, #tpu.memory_space<vmem>>, %arg4: memref<1x3x1x128xf32, #tpu.memory_space<vmem>>, %arg5: memref<1x3x1x128xf32, #tpu.memory_space<vmem>>, %arg6: memref<1x128x1024xbf16, #tpu.memory_space<vmem>>, %arg7: memref<1x256x1024xbf16, #tpu.memory_space<vmem>>, %arg8: memref<1x1x1024xf32, #tpu.memory_space<vmem>>, %arg9: memref<1x16x1xf32, #tpu.memory_space<vmem>>, %arg10: memref<16x256xf32, #tpu.memory_space<vmem>>, %arg11: memref<26x128xbf16, #tpu.memory_space<vmem>>, %arg12: memref<16x640xbf16, #tpu.memory_space<vmem>>, %arg13: memref<16x512xf32, #tpu.memory_space<vmem>>, %arg14: memref<16x512xf32, #tpu.memory_space<vmem>>, %arg15: memref<16x128xf32, #tpu.memory_space<vmem>>, %arg16: memref<16x128xf32, #tpu.memory_space<vmem>>) attributes {dimension_semantics = [#tpu.dimension_semantics<arbitrary>], iteration_bounds = array<i64: 2>, scalar_prefetch = 1 : i64, scratch_operands = 6 : i64, tpu.core_type = #tpu.core_type<tc>, window_params = [{pipeline_mode = #tpu.pipeline_mode<synchronous>, transform_indices = @transform_0, window_bounds = array<i64: 16, 128>}, {transform_indices = @transform_1, window_bounds = array<i64: 1, 3, 640, 128>}, {transform_indices = @transform_2, window_bounds = array<i64: 1, 3, 1, 128>}, {transform_indices = @transform_3, window_bounds = array<i64: 1, 3, 1, 128>}, {transform_indices = @transform_4, window_bounds = array<i64: 1, 128, 1024>}, {transform_indices = @transform_5, window_bounds = array<i64: 1, 256, 1024>}, {transform_indices = @transform_6, window_bounds = array<i64: 1, 1, 1024>}, {transform_indices = @transform_7, window_bounds = array<i64: 1, 16, 1>}, {pipeline_mode = #tpu.pipeline_mode<synchronous>, transform_indices = @transform_8, window_bounds = array<i64: 16, 256>}]} {
    %c0 = arith.constant 0 : index
    %0 = memref.load %arg1[%c0] : memref<1xi32, #tpu.memory_space<smem>>
    %c16_i32 = arith.constant 16 : i32
    %1 = arith.minsi %0, %c16_i32 : i32
    %cst = arith.constant 0.000000e+00 : bf16
    %2 = vector.broadcast %cst : bf16 to vector<2x128xbf16>
    %c6 = arith.constant 6 : index
    %c0_0 = arith.constant 0 : index
    %3 = vector.load %arg11[%c6, %c0_0] : memref<26x128xbf16, #tpu.memory_space<vmem>>, vector<2x128xbf16>
    tpu.vector_store %arg11[%c6, %c0_0], %2 {strides = array<i32>} : memref<26x128xbf16, #tpu.memory_space<vmem>>, vector<2x128xbf16>,
    %cst_1 = arith.constant 0.000000e+00 : bf16
    %4 = vector.broadcast %cst_1 : bf16 to vector<2x128xbf16>
    %c24 = arith.constant 24 : index
    %c0_2 = arith.constant 0 : index
    %5 = vector.load %arg11[%c24, %c0_2] : memref<26x128xbf16, #tpu.memory_space<vmem>>, vector<2x128xbf16>
    tpu.vector_store %arg11[%c24, %c0_2], %4 {strides = array<i32>} : memref<26x128xbf16, #tpu.memory_space<vmem>>, vector<2x128xbf16>,
    %c0_3 = arith.constant 0 : index
    %c0_4 = arith.constant 0 : index
    %6 = vector.load %arg2[%c0_3, %c0_4] : memref<16x128xf32, #tpu.memory_space<vmem>>, vector<16x128xf32>
    %7 = arith.truncf %6 : vector<16x128xf32> to vector<16x128xbf16>
    %c8 = arith.constant 8 : index
    %c0_5 = arith.constant 0 : index
    %8 = vector.load %arg11[%c8, %c0_5] : memref<26x128xbf16, #tpu.memory_space<vmem>>, vector<16x128xbf16>
    tpu.vector_store %arg11[%c8, %c0_5], %7 {strides = array<i32>} : memref<26x128xbf16, #tpu.memory_space<vmem>>, vector<16x128xbf16>,
    %c6_6 = arith.constant 6 : index
    %c0_7 = arith.constant 0 : index
    %9 = vector.load %arg11[%c6_6, %c0_7] : memref<26x128xbf16, #tpu.memory_space<vmem>>, vector<16x128xbf16>
    %c0_8 = arith.constant 0 : index
    %c0_9 = arith.constant 0 : index
    %10 = vector.load %arg12[%c0_8, %c0_9] : memref<16x640xbf16, #tpu.memory_space<vmem>>, vector<16x128xbf16>
    tpu.vector_store %arg12[%c0_8, %c0_9], %9 {strides = array<i32>} : memref<16x640xbf16, #tpu.memory_space<vmem>>, vector<16x128xbf16>,
    %c7 = arith.constant 7 : index
    %c0_10 = arith.constant 0 : index
    %11 = vector.load %arg11[%c7, %c0_10] : memref<26x128xbf16, #tpu.memory_space<vmem>>, vector<16x128xbf16>
    %c0_11 = arith.constant 0 : index
    %c128 = arith.constant 128 : index
    %12 = vector.load %arg12[%c0_11, %c128] : memref<16x640xbf16, #tpu.memory_space<vmem>>, vector<16x128xbf16>
    tpu.vector_store %arg12[%c0_11, %c128], %11 {strides = array<i32>} : memref<16x640xbf16, #tpu.memory_space<vmem>>, vector<16x128xbf16>,
    %c8_12 = arith.constant 8 : index
    %c0_13 = arith.constant 0 : index
    %13 = vector.load %arg11[%c8_12, %c0_13] : memref<26x128xbf16, #tpu.memory_space<vmem>>, vector<16x128xbf16>
    %c0_14 = arith.constant 0 : index
    %c256 = arith.constant 256 : index
    %14 = vector.load %arg12[%c0_14, %c256] : memref<16x640xbf16, #tpu.memory_space<vmem>>, vector<16x128xbf16>
    tpu.vector_store %arg12[%c0_14, %c256], %13 {strides = array<i32>} : memref<16x640xbf16, #tpu.memory_space<vmem>>, vector<16x128xbf16>,
    %c9 = arith.constant 9 : index
    %c0_15 = arith.constant 0 : index
    %15 = vector.load %arg11[%c9, %c0_15] : memref<26x128xbf16, #tpu.memory_space<vmem>>, vector<16x128xbf16>
    %c0_16 = arith.constant 0 : index
    %c384 = arith.constant 384 : index
    %16 = vector.load %arg12[%c0_16, %c384] : memref<16x640xbf16, #tpu.memory_space<vmem>>, vector<16x128xbf16>
    tpu.vector_store %arg12[%c0_16, %c384], %15 {strides = array<i32>} : memref<16x640xbf16, #tpu.memory_space<vmem>>, vector<16x128xbf16>,
    %c10 = arith.constant 10 : index
    %c0_17 = arith.constant 0 : index
    %17 = vector.load %arg11[%c10, %c0_17] : memref<26x128xbf16, #tpu.memory_space<vmem>>, vector<16x128xbf16>
    %c0_18 = arith.constant 0 : index
    %c512 = arith.constant 512 : index
    %18 = vector.load %arg12[%c0_18, %c512] : memref<16x640xbf16, #tpu.memory_space<vmem>>, vector<16x128xbf16>
    tpu.vector_store %arg12[%c0_18, %c512], %17 {strides = array<i32>} : memref<16x640xbf16, #tpu.memory_space<vmem>>, vector<16x128xbf16>,
    %c0_19 = arith.constant 0 : index
    %c0_20 = arith.constant 0 : index
    %19 = vector.load %arg12[%c0_19, %c0_20] : memref<16x640xbf16, #tpu.memory_space<vmem>>, vector<16x640xbf16>
    %c0_21 = arith.constant 0 : index
    %c0_22 = arith.constant 0 : index
    %c0_23 = arith.constant 0 : index
    %c0_24 = arith.constant 0 : index
    %20 = vector.load %arg3[%c0_21, %c0_22, %c0_23, %c0_24] : memref<1x3x640x128xbf16, #tpu.memory_space<vmem>>, vector<1x1x640x128xbf16>
    %21 = vector.shape_cast %20 : vector<1x1x640x128xbf16> to vector<640x128xbf16>
    %cst_25 = arith.constant dense<0.000000e+00> : vector<16x128xf32>
    %22 = tpu.matmul %19, %21, %cst_25 {dimension_numbers = #tpu.dot_dimension_numbers<[1], [0], [0], [1], [0, 0, 1, 1], [], []>} : vector<16x640xbf16>, vector<640x128xbf16>, vector<16x128xf32> -> vector<16x128xf32>
    %c0_26 = arith.constant 0 : index
    %c0_27 = arith.constant 0 : index
    %c0_28 = arith.constant 0 : index
    %c0_29 = arith.constant 0 : index
    %23 = vector.load %arg4[%c0_26, %c0_27, %c0_28, %c0_29] : memref<1x3x1x128xf32, #tpu.memory_space<vmem>>, vector<1x1x1x128xf32>
    %24 = vector.shape_cast %23 : vector<1x1x1x128xf32> to vector<1x128xf32>
    %25 = vector.broadcast %24 : vector<1x128xf32> to vector<16x128xf32>
    %26 = arith.mulf %22, %25 : vector<16x128xf32>
    %c0_30 = arith.constant 0 : index
    %c0_31 = arith.constant 0 : index
    %c0_32 = arith.constant 0 : index
    %c0_33 = arith.constant 0 : index
    %27 = vector.load %arg5[%c0_30, %c0_31, %c0_32, %c0_33] : memref<1x3x1x128xf32, #tpu.memory_space<vmem>>, vector<1x1x1x128xf32>
    %28 = vector.shape_cast %27 : vector<1x1x1x128xf32> to vector<1x128xf32>
    %29 = vector.broadcast %28 : vector<1x128xf32> to vector<16x128xf32>
    %30 = arith.addf %26, %29 : vector<16x128xf32>
    %cst_34 = arith.constant 0.000000e+00 : f32
    %31 = vector.broadcast %cst_34 : f32 to vector<16x128xf32>
    %32 = arith.maximumf %30, %31 : vector<16x128xf32>
    %33 = arith.truncf %32 : vector<16x128xf32> to vector<16x128xbf16>
    %c8_35 = arith.constant 8 : index
    %c0_36 = arith.constant 0 : index
    %34 = vector.load %arg11[%c8_35, %c0_36] : memref<26x128xbf16, #tpu.memory_space<vmem>>, vector<16x128xbf16>
    tpu.vector_store %arg11[%c8_35, %c0_36], %33 {strides = array<i32>} : memref<26x128xbf16, #tpu.memory_space<vmem>>, vector<16x128xbf16>,
    %c6_37 = arith.constant 6 : index
    %c0_38 = arith.constant 0 : index
    %35 = vector.load %arg11[%c6_37, %c0_38] : memref<26x128xbf16, #tpu.memory_space<vmem>>, vector<16x128xbf16>
    %c0_39 = arith.constant 0 : index
    %c0_40 = arith.constant 0 : index
    %36 = vector.load %arg12[%c0_39, %c0_40] : memref<16x640xbf16, #tpu.memory_space<vmem>>, vector<16x128xbf16>
    tpu.vector_store %arg12[%c0_39, %c0_40], %35 {strides = array<i32>} : memref<16x640xbf16, #tpu.memory_space<vmem>>, vector<16x128xbf16>,
    %c7_41 = arith.constant 7 : index
    %c0_42 = arith.constant 0 : index
    %37 = vector.load %arg11[%c7_41, %c0_42] : memref<26x128xbf16, #tpu.memory_space<vmem>>, vector<16x128xbf16>
    %c0_43 = arith.constant 0 : index
    %c128_44 = arith.constant 128 : index
    %38 = vector.load %arg12[%c0_43, %c128_44] : memref<16x640xbf16, #tpu.memory_space<vmem>>, vector<16x128xbf16>
    tpu.vector_store %arg12[%c0_43, %c128_44], %37 {strides = array<i32>} : memref<16x640xbf16, #tpu.memory_space<vmem>>, vector<16x128xbf16>,
    %c8_45 = arith.constant 8 : index
    %c0_46 = arith.constant 0 : index
    %39 = vector.load %arg11[%c8_45, %c0_46] : memref<26x128xbf16, #tpu.memory_space<vmem>>, vector<16x128xbf16>
    %c0_47 = arith.constant 0 : index
    %c256_48 = arith.constant 256 : index
    %40 = vector.load %arg12[%c0_47, %c256_48] : memref<16x640xbf16, #tpu.memory_space<vmem>>, vector<16x128xbf16>
    tpu.vector_store %arg12[%c0_47, %c256_48], %39 {strides = array<i32>} : memref<16x640xbf16, #tpu.memory_space<vmem>>, vector<16x128xbf16>,
    %c9_49 = arith.constant 9 : index
    %c0_50 = arith.constant 0 : index
    %41 = vector.load %arg11[%c9_49, %c0_50] : memref<26x128xbf16, #tpu.memory_space<vmem>>, vector<16x128xbf16>
    %c0_51 = arith.constant 0 : index
    %c384_52 = arith.constant 384 : index
    %42 = vector.load %arg12[%c0_51, %c384_52] : memref<16x640xbf16, #tpu.memory_space<vmem>>, vector<16x128xbf16>
    tpu.vector_store %arg12[%c0_51, %c384_52], %41 {strides = array<i32>} : memref<16x640xbf16, #tpu.memory_space<vmem>>, vector<16x128xbf16>,
    %c10_53 = arith.constant 10 : index
    %c0_54 = arith.constant 0 : index
    %43 = vector.load %arg11[%c10_53, %c0_54] : memref<26x128xbf16, #tpu.memory_space<vmem>>, vector<16x128xbf16>
    %c0_55 = arith.constant 0 : index
    %c512_56 = arith.constant 512 : index
    %44 = vector.load %arg12[%c0_55, %c512_56] : memref<16x640xbf16, #tpu.memory_space<vmem>>, vector<16x128xbf16>
    tpu.vector_store %arg12[%c0_55, %c512_56], %43 {strides = array<i32>} : memref<16x640xbf16, #tpu.memory_space<vmem>>, vector<16x128xbf16>,
    %c0_57 = arith.constant 0 : index
    %c0_58 = arith.constant 0 : index
    %45 = vector.load %arg12[%c0_57, %c0_58] : memref<16x640xbf16, #tpu.memory_space<vmem>>, vector<16x640xbf16>
    %c0_59 = arith.constant 0 : index
    %c1 = arith.constant 1 : index
    %c0_60 = arith.constant 0 : index
    %c0_61 = arith.constant 0 : index
    %46 = vector.load %arg3[%c0_59, %c1, %c0_60, %c0_61] : memref<1x3x640x128xbf16, #tpu.memory_space<vmem>>, vector<1x1x640x128xbf16>
    %47 = vector.shape_cast %46 : vector<1x1x640x128xbf16> to vector<640x128xbf16>
    %cst_62 = arith.constant dense<0.000000e+00> : vector<16x128xf32>
    %48 = tpu.matmul %45, %47, %cst_62 {dimension_numbers = #tpu.dot_dimension_numbers<[1], [0], [0], [1], [0, 0, 1, 1], [], []>} : vector<16x640xbf16>, vector<640x128xbf16>, vector<16x128xf32> -> vector<16x128xf32>
    %c0_63 = arith.constant 0 : index
    %c1_64 = arith.constant 1 : index
    %c0_65 = arith.constant 0 : index
    %c0_66 = arith.constant 0 : index
    %49 = vector.load %arg4[%c0_63, %c1_64, %c0_65, %c0_66] : memref<1x3x1x128xf32, #tpu.memory_space<vmem>>, vector<1x1x1x128xf32>
    %50 = vector.shape_cast %49 : vector<1x1x1x128xf32> to vector<1x128xf32>
    %51 = vector.broadcast %50 : vector<1x128xf32> to vector<16x128xf32>
    %52 = arith.mulf %48, %51 : vector<16x128xf32>
    %c0_67 = arith.constant 0 : index
    %c1_68 = arith.constant 1 : index
    %c0_69 = arith.constant 0 : index
    %c0_70 = arith.constant 0 : index
    %53 = vector.load %arg5[%c0_67, %c1_68, %c0_69, %c0_70] : memref<1x3x1x128xf32, #tpu.memory_space<vmem>>, vector<1x1x1x128xf32>
    %54 = vector.shape_cast %53 : vector<1x1x1x128xf32> to vector<1x128xf32>
    %55 = vector.broadcast %54 : vector<1x128xf32> to vector<16x128xf32>
    %56 = arith.addf %52, %55 : vector<16x128xf32>
    %cst_71 = arith.constant 0.000000e+00 : f32
    %57 = vector.broadcast %cst_71 : f32 to vector<16x128xf32>
    %58 = arith.maximumf %56, %57 : vector<16x128xf32>
    %59 = arith.truncf %58 : vector<16x128xf32> to vector<16x128xbf16>
    %c8_72 = arith.constant 8 : index
    %c0_73 = arith.constant 0 : index
    %60 = vector.load %arg11[%c8_72, %c0_73] : memref<26x128xbf16, #tpu.memory_space<vmem>>, vector<16x128xbf16>
    tpu.vector_store %arg11[%c8_72, %c0_73], %59 {strides = array<i32>} : memref<26x128xbf16, #tpu.memory_space<vmem>>, vector<16x128xbf16>,
    %c6_74 = arith.constant 6 : index
    %c0_75 = arith.constant 0 : index
    %61 = vector.load %arg11[%c6_74, %c0_75] : memref<26x128xbf16, #tpu.memory_space<vmem>>, vector<16x128xbf16>
    %c0_76 = arith.constant 0 : index
    %c0_77 = arith.constant 0 : index
    %62 = vector.load %arg12[%c0_76, %c0_77] : memref<16x640xbf16, #tpu.memory_space<vmem>>, vector<16x128xbf16>
    tpu.vector_store %arg12[%c0_76, %c0_77], %61 {strides = array<i32>} : memref<16x640xbf16, #tpu.memory_space<vmem>>, vector<16x128xbf16>,
    %c7_78 = arith.constant 7 : index
    %c0_79 = arith.constant 0 : index
    %63 = vector.load %arg11[%c7_78, %c0_79] : memref<26x128xbf16, #tpu.memory_space<vmem>>, vector<16x128xbf16>
    %c0_80 = arith.constant 0 : index
    %c128_81 = arith.constant 128 : index
    %64 = vector.load %arg12[%c0_80, %c128_81] : memref<16x640xbf16, #tpu.memory_space<vmem>>, vector<16x128xbf16>
    tpu.vector_store %arg12[%c0_80, %c128_81], %63 {strides = array<i32>} : memref<16x640xbf16, #tpu.memory_space<vmem>>, vector<16x128xbf16>,
    %c8_82 = arith.constant 8 : index
    %c0_83 = arith.constant 0 : index
    %65 = vector.load %arg11[%c8_82, %c0_83] : memref<26x128xbf16, #tpu.memory_space<vmem>>, vector<16x128xbf16>
    %c0_84 = arith.constant 0 : index
    %c256_85 = arith.constant 256 : index
    %66 = vector.load %arg12[%c0_84, %c256_85] : memref<16x640xbf16, #tpu.memory_space<vmem>>, vector<16x128xbf16>
    tpu.vector_store %arg12[%c0_84, %c256_85], %65 {strides = array<i32>} : memref<16x640xbf16, #tpu.memory_space<vmem>>, vector<16x128xbf16>,
    %c9_86 = arith.constant 9 : index
    %c0_87 = arith.constant 0 : index
    %67 = vector.load %arg11[%c9_86, %c0_87] : memref<26x128xbf16, #tpu.memory_space<vmem>>, vector<16x128xbf16>
    %c0_88 = arith.constant 0 : index
    %c384_89 = arith.constant 384 : index
    %68 = vector.load %arg12[%c0_88, %c384_89] : memref<16x640xbf16, #tpu.memory_space<vmem>>, vector<16x128xbf16>
    tpu.vector_store %arg12[%c0_88, %c384_89], %67 {strides = array<i32>} : memref<16x640xbf16, #tpu.memory_space<vmem>>, vector<16x128xbf16>,
    %c10_90 = arith.constant 10 : index
    %c0_91 = arith.constant 0 : index
    %69 = vector.load %arg11[%c10_90, %c0_91] : memref<26x128xbf16, #tpu.memory_space<vmem>>, vector<16x128xbf16>
    %c0_92 = arith.constant 0 : index
    %c512_93 = arith.constant 512 : index
    %70 = vector.load %arg12[%c0_92, %c512_93] : memref<16x640xbf16, #tpu.memory_space<vmem>>, vector<16x128xbf16>
    tpu.vector_store %arg12[%c0_92, %c512_93], %69 {strides = array<i32>} : memref<16x640xbf16, #tpu.memory_space<vmem>>, vector<16x128xbf16>,
    %c0_94 = arith.constant 0 : index
    %c0_95 = arith.constant 0 : index
    %71 = vector.load %arg12[%c0_94, %c0_95] : memref<16x640xbf16, #tpu.memory_space<vmem>>, vector<16x640xbf16>
    %c0_96 = arith.constant 0 : index
    %c2 = arith.constant 2 : index
    %c0_97 = arith.constant 0 : index
    %c0_98 = arith.constant 0 : index
    %72 = vector.load %arg3[%c0_96, %c2, %c0_97, %c0_98] : memref<1x3x640x128xbf16, #tpu.memory_space<vmem>>, vector<1x1x640x128xbf16>
    %73 = vector.shape_cast %72 : vector<1x1x640x128xbf16> to vector<640x128xbf16>
    %cst_99 = arith.constant dense<0.000000e+00> : vector<16x128xf32>
    %74 = tpu.matmul %71, %73, %cst_99 {dimension_numbers = #tpu.dot_dimension_numbers<[1], [0], [0], [1], [0, 0, 1, 1], [], []>} : vector<16x640xbf16>, vector<640x128xbf16>, vector<16x128xf32> -> vector<16x128xf32>
    %c0_100 = arith.constant 0 : index
    %c2_101 = arith.constant 2 : index
    %c0_102 = arith.constant 0 : index
    %c0_103 = arith.constant 0 : index
    %75 = vector.load %arg4[%c0_100, %c2_101, %c0_102, %c0_103] : memref<1x3x1x128xf32, #tpu.memory_space<vmem>>, vector<1x1x1x128xf32>
    %76 = vector.shape_cast %75 : vector<1x1x1x128xf32> to vector<1x128xf32>
    %77 = vector.broadcast %76 : vector<1x128xf32> to vector<16x128xf32>
    %78 = arith.mulf %74, %77 : vector<16x128xf32>
    %c0_104 = arith.constant 0 : index
    %c2_105 = arith.constant 2 : index
    %c0_106 = arith.constant 0 : index
    %c0_107 = arith.constant 0 : index
    %79 = vector.load %arg5[%c0_104, %c2_105, %c0_106, %c0_107] : memref<1x3x1x128xf32, #tpu.memory_space<vmem>>, vector<1x1x1x128xf32>
    %80 = vector.shape_cast %79 : vector<1x1x1x128xf32> to vector<1x128xf32>
    %81 = vector.broadcast %80 : vector<1x128xf32> to vector<16x128xf32>
    %82 = arith.addf %78, %81 : vector<16x128xf32>
    %cst_108 = arith.constant 0.000000e+00 : f32
    %83 = vector.broadcast %cst_108 : f32 to vector<16x128xf32>
    %84 = arith.maximumf %82, %83 : vector<16x128xf32>
    %85 = arith.truncf %84 : vector<16x128xf32> to vector<16x128xbf16>
    %c8_109 = arith.constant 8 : index
    %c0_110 = arith.constant 0 : index
    %86 = vector.load %arg11[%c8_109, %c0_110] : memref<26x128xbf16, #tpu.memory_space<vmem>>, vector<16x128xbf16>
    tpu.vector_store %arg11[%c8_109, %c0_110], %85 {strides = array<i32>} : memref<26x128xbf16, #tpu.memory_space<vmem>>, vector<16x128xbf16>,
    %c8_111 = arith.constant 8 : index
    %c0_112 = arith.constant 0 : index
    %87 = vector.load %arg11[%c8_111, %c0_112] : memref<26x128xbf16, #tpu.memory_space<vmem>>, vector<16x128xbf16>
    %c0_113 = arith.constant 0 : index
    %c0_114 = arith.constant 0 : index
    %c0_115 = arith.constant 0 : index
    %88 = vector.load %arg6[%c0_113, %c0_114, %c0_115] : memref<1x128x1024xbf16, #tpu.memory_space<vmem>>, vector<1x128x1024xbf16>
    %89 = vector.shape_cast %88 : vector<1x128x1024xbf16> to vector<128x1024xbf16>
    %cst_116 = arith.constant dense<0.000000e+00> : vector<16x1024xf32>
    %90 = tpu.matmul %87, %89, %cst_116 {dimension_numbers = #tpu.dot_dimension_numbers<[1], [0], [0], [1], [0, 0, 1, 1], [], []>} : vector<16x128xbf16>, vector<128x1024xbf16>, vector<16x1024xf32> -> vector<16x1024xf32>
    %c0_117 = arith.constant 0 : index
    %c0_118 = arith.constant 0 : index
    %c0_119 = arith.constant 0 : index
    %91 = vector.load %arg8[%c0_117, %c0_118, %c0_119] : memref<1x1x1024xf32, #tpu.memory_space<vmem>>, vector<1x1x1024xf32>
    %92 = vector.shape_cast %91 : vector<1x1x1024xf32> to vector<1x1024xf32>
    %93 = vector.broadcast %92 : vector<1x1024xf32> to vector<16x1024xf32>
    %94 = arith.addf %90, %93 : vector<16x1024xf32>
    %95 = vector.extract_strided_slice %94 {offsets = [0, 0], sizes = [16, 512], strides = [1, 1]} : vector<16x1024xf32> to vector<16x512xf32>
    %c0_120 = arith.constant 0 : index
    %c0_121 = arith.constant 0 : index
    %96 = vector.load %arg13[%c0_120, %c0_121] : memref<16x512xf32, #tpu.memory_space<vmem>>, vector<16x512xf32>
    tpu.vector_store %arg13[%c0_120, %c0_121], %95 {strides = array<i32>} : memref<16x512xf32, #tpu.memory_space<vmem>>, vector<16x512xf32>,
    %97 = vector.extract_strided_slice %94 {offsets = [0, 512], sizes = [16, 512], strides = [1, 1]} : vector<16x1024xf32> to vector<16x512xf32>
    %c0_122 = arith.constant 0 : index
    %c0_123 = arith.constant 0 : index
    %98 = vector.load %arg14[%c0_122, %c0_123] : memref<16x512xf32, #tpu.memory_space<vmem>>, vector<16x512xf32>
    tpu.vector_store %arg14[%c0_122, %c0_123], %97 {strides = array<i32>} : memref<16x512xf32, #tpu.memory_space<vmem>>, vector<16x512xf32>,
    %cst_124 = arith.constant 0.000000e+00 : f32
    %99 = vector.broadcast %cst_124 : f32 to vector<16x128xf32>
    %c0_125 = arith.constant 0 : index
    %c0_126 = arith.constant 0 : index
    %100 = vector.load %arg15[%c0_125, %c0_126] : memref<16x128xf32, #tpu.memory_space<vmem>>, vector<16x128xf32>
    tpu.vector_store %arg15[%c0_125, %c0_126], %99 {strides = array<i32>} : memref<16x128xf32, #tpu.memory_space<vmem>>, vector<16x128xf32>,
    %cst_127 = arith.constant 0.000000e+00 : f32
    %101 = vector.broadcast %cst_127 : f32 to vector<16x128xf32>
    %c0_128 = arith.constant 0 : index
    %c0_129 = arith.constant 0 : index
    %102 = vector.load %arg16[%c0_128, %c0_129] : memref<16x128xf32, #tpu.memory_space<vmem>>, vector<16x128xf32>
    tpu.vector_store %arg16[%c0_128, %c0_129], %101 {strides = array<i32>} : memref<16x128xf32, #tpu.memory_space<vmem>>, vector<16x128xf32>,
    %cst_130 = arith.constant 0.000000e+00 : f32
    %103 = vector.broadcast %cst_130 : f32 to vector<1x256xf32>
    %c0_i32 = arith.constant 0 : i32
    %104 = arith.subi %1, %c0_i32 : i32
    %105 = arith.addi %c0_i32, %104 : i32
    %c1_i32 = arith.constant 1 : i32
    %106:2 = scf.for %arg17 = %c0_i32 to %105 step %c1_i32 iter_args(%arg18 = %103, %arg19 = %103) -> (vector<1x256xf32>, vector<1x256xf32>)  : i32 {
      %c1_i32_144 = arith.constant 1 : i32
      %120 = arith.subi %1, %c1_i32_144 : i32
      %121 = arith.subi %120, %arg17 : i32
      %122 = arith.truncf %arg18 : vector<1x256xf32> to vector<1x256xbf16>
      %c0_145 = arith.constant 0 : index
      %c0_146 = arith.constant 0 : index
      %c0_147 = arith.constant 0 : index
      %123 = vector.load %arg7[%c0_145, %c0_146, %c0_147] : memref<1x256x1024xbf16, #tpu.memory_space<vmem>>, vector<1x256x1024xbf16>
      %124 = vector.shape_cast %123 : vector<1x256x1024xbf16> to vector<256x1024xbf16>
      %cst_148 = arith.constant dense<0.000000e+00> : vector<1x1024xf32>
      %125 = tpu.matmul %122, %124, %cst_148 {dimension_numbers = #tpu.dot_dimension_numbers<[1], [0], [0], [1], [0, 0, 1, 1], [], []>} : vector<1x256xbf16>, vector<256x1024xbf16>, vector<1x1024xf32> -> vector<1x1024xf32>
      %126 = arith.index_cast %arg17 : i32 to index
      %c0_149 = arith.constant 0 : index
      %127 = vector.load %arg13[%126, %c0_149] : memref<16x512xf32, #tpu.memory_space<vmem>>, vector<1x512xf32>
      %128 = arith.index_cast %121 : i32 to index
      %c0_150 = arith.constant 0 : index
      %129 = vector.load %arg14[%128, %c0_150] : memref<16x512xf32, #tpu.memory_space<vmem>>, vector<1x512xf32>
      %130 = tpu.concatenate %127, %129 in 1 : vector<1x512xf32>, vector<1x512xf32> -> vector<1x1024xf32>
      %131 = arith.addf %130, %125 : vector<1x1024xf32>
      %132 = arith.negf %131 : vector<1x1024xf32>
      %133 = math.exp %132 : vector<1x1024xf32>
      %cst_151 = arith.constant 1.000000e+00 : f32
      %134 = vector.broadcast %cst_151 : f32 to vector<1x1024xf32>
      %135 = arith.addf %134, %133 : vector<1x1024xf32>
      %136 = arith.divf %134, %135 : vector<1x1024xf32>
      %137 = vector.extract_strided_slice %136 {offsets = [0, 0], sizes = [1, 128], strides = [1, 1]} : vector<1x1024xf32> to vector<1x128xf32>
      %138 = vector.extract_strided_slice %136 {offsets = [0, 512], sizes = [1, 128], strides = [1, 1]} : vector<1x1024xf32> to vector<1x128xf32>
      %139 = tpu.concatenate %137, %138 in 1 : vector<1x128xf32>, vector<1x128xf32> -> vector<1x256xf32>
      %140 = vector.extract_strided_slice %136 {offsets = [0, 128], sizes = [1, 128], strides = [1, 1]} : vector<1x1024xf32> to vector<1x128xf32>
      %141 = vector.extract_strided_slice %136 {offsets = [0, 640], sizes = [1, 128], strides = [1, 1]} : vector<1x1024xf32> to vector<1x128xf32>
      %142 = tpu.concatenate %140, %141 in 1 : vector<1x128xf32>, vector<1x128xf32> -> vector<1x256xf32>
      %143 = vector.extract_strided_slice %136 {offsets = [0, 256], sizes = [1, 128], strides = [1, 1]} : vector<1x1024xf32> to vector<1x128xf32>
      %144 = vector.extract_strided_slice %136 {offsets = [0, 768], sizes = [1, 128], strides = [1, 1]} : vector<1x1024xf32> to vector<1x128xf32>
      %145 = tpu.concatenate %143, %144 in 1 : vector<1x128xf32>, vector<1x128xf32> -> vector<1x256xf32>
      %cst_152 = arith.constant 2.000000e+00 : f32
      %146 = vector.broadcast %cst_152 : f32 to vector<1x256xf32>
      %147 = arith.mulf %146, %145 : vector<1x256xf32>
      %cst_153 = arith.constant 1.000000e+00 : f32
      %148 = vector.broadcast %cst_153 : f32 to vector<1x256xf32>
      %149 = arith.subf %147, %148 : vector<1x256xf32>
      %150 = vector.extract_strided_slice %136 {offsets = [0, 384], sizes = [1, 128], strides = [1, 1]} : vector<1x1024xf32> to vector<1x128xf32>
      %151 = vector.extract_strided_slice %136 {offsets = [0, 896], sizes = [1, 128], strides = [1, 1]} : vector<1x1024xf32> to vector<1x128xf32>
      %152 = tpu.concatenate %150, %151 in 1 : vector<1x128xf32>, vector<1x128xf32> -> vector<1x256xf32>
      %153 = arith.mulf %142, %arg19 : vector<1x256xf32>
      %154 = arith.mulf %139, %149 : vector<1x256xf32>
      %155 = arith.addf %153, %154 : vector<1x256xf32>
      %156 = math.tanh %155 : vector<1x256xf32>
      %157 = arith.mulf %152, %156 : vector<1x256xf32>
      %158 = vector.extract_strided_slice %157 {offsets = [0, 0], sizes = [1, 128], strides = [1, 1]} : vector<1x256xf32> to vector<1x128xf32>
      %159 = arith.index_cast %arg17 : i32 to index
      %c0_154 = arith.constant 0 : index
      %160 = vector.load %arg15[%159, %c0_154] : memref<16x128xf32, #tpu.memory_space<vmem>>, vector<1x128xf32>
      tpu.vector_store %arg15[%159, %c0_154], %158 {strides = array<i32>} : memref<16x128xf32, #tpu.memory_space<vmem>>, vector<1x128xf32>,
      %161 = vector.extract_strided_slice %157 {offsets = [0, 128], sizes = [1, 128], strides = [1, 1]} : vector<1x256xf32> to vector<1x128xf32>
      %162 = arith.index_cast %121 : i32 to index
      %c0_155 = arith.constant 0 : index
      %163 = vector.load %arg16[%162, %c0_155] : memref<16x128xf32, #tpu.memory_space<vmem>>, vector<1x128xf32>
      tpu.vector_store %arg16[%162, %c0_155], %161 {strides = array<i32>} : memref<16x128xf32, #tpu.memory_space<vmem>>, vector<1x128xf32>,
      scf.yield %157, %155 : vector<1x256xf32>, vector<1x256xf32>
    }
    %c0_i32_131 = arith.constant 0 : i32
    %107 = arith.cmpi eq, %arg0, %c0_i32_131 : i32
    %108 = arith.extui %107 : i1 to i32
    %c0_i32_132 = arith.constant 0 : i32
    %109 = arith.cmpi ne, %108, %c0_i32_132 : i32
    scf.if %109 {
      %cst_144 = arith.constant 0.000000e+00 : f32
      %120 = vector.broadcast %cst_144 : f32 to vector<16x256xf32>
      %c0_145 = arith.constant 0 : index
      %c0_146 = arith.constant 0 : index
      %121 = vector.load %arg10[%c0_145, %c0_146] : memref<16x256xf32, #tpu.memory_space<vmem>>, vector<16x256xf32>
      tpu.vector_store %arg10[%c0_145, %c0_146], %120 {strides = array<i32>} : memref<16x256xf32, #tpu.memory_space<vmem>>, vector<16x256xf32>,
    } else {
    }
    %c0_133 = arith.constant 0 : index
    %c0_134 = arith.constant 0 : index
    %110 = vector.load %arg15[%c0_133, %c0_134] : memref<16x128xf32, #tpu.memory_space<vmem>>, vector<16x128xf32>
    %c0_135 = arith.constant 0 : index
    %c0_136 = arith.constant 0 : index
    %111 = vector.load %arg16[%c0_135, %c0_136] : memref<16x128xf32, #tpu.memory_space<vmem>>, vector<16x128xf32>
    %112 = tpu.concatenate %110, %111 in 1 : vector<16x128xf32>, vector<16x128xf32> -> vector<16x256xf32>
    %c0_137 = arith.constant 0 : index
    %c0_138 = arith.constant 0 : index
    %113 = vector.load %arg10[%c0_137, %c0_138] : memref<16x256xf32, #tpu.memory_space<vmem>>, vector<16x256xf32>
    %c0_139 = arith.constant 0 : index
    %c0_140 = arith.constant 0 : index
    %c0_141 = arith.constant 0 : index
    %114 = vector.load %arg9[%c0_139, %c0_140, %c0_141] : memref<1x16x1xf32, #tpu.memory_space<vmem>>, vector<1x16x1xf32>
    %115 = vector.shape_cast %114 : vector<1x16x1xf32> to vector<16x1xf32>
    %116 = vector.broadcast %115 : vector<16x1xf32> to vector<16x256xf32>
    %117 = arith.mulf %116, %112 : vector<16x256xf32>
    %118 = arith.addf %113, %117 : vector<16x256xf32>
    %c0_142 = arith.constant 0 : index
    %c0_143 = arith.constant 0 : index
    %119 = vector.load %arg10[%c0_142, %c0_143] : memref<16x256xf32, #tpu.memory_space<vmem>>, vector<16x256xf32>
    tpu.vector_store %arg10[%c0_142, %c0_143], %118 {strides = array<i32>} : memref<16x256xf32, #tpu.memory_space<vmem>>, vector<16x256xf32>,
    return
  }
  func.func @transform_0(%arg0: i32, %arg1: memref<1xi32, #tpu.memory_space<smem>>) -> (i32, i32) {
    %c0_i32 = arith.constant 0 : i32
    %c0_i32_0 = arith.constant 0 : i32
    %c0_i32_1 = arith.constant 0 : i32
    return %c0_i32, %c0_i32_0 : i32, i32
  }
  func.func @transform_1(%arg0: i32, %arg1: memref<1xi32, #tpu.memory_space<smem>>) -> (i32, i32, i32, i32) {
    %c0_i32 = arith.constant 0 : i32
    %c0_i32_0 = arith.constant 0 : i32
    %c0_i32_1 = arith.constant 0 : i32
    %c0_i32_2 = arith.constant 0 : i32
    return %arg0, %c0_i32, %c0_i32_0, %c0_i32_1 : i32, i32, i32, i32
  }
  func.func @transform_2(%arg0: i32, %arg1: memref<1xi32, #tpu.memory_space<smem>>) -> (i32, i32, i32, i32) {
    %c0_i32 = arith.constant 0 : i32
    %c0_i32_0 = arith.constant 0 : i32
    %c0_i32_1 = arith.constant 0 : i32
    %c0_i32_2 = arith.constant 0 : i32
    return %arg0, %c0_i32, %c0_i32_0, %c0_i32_1 : i32, i32, i32, i32
  }
  func.func @transform_3(%arg0: i32, %arg1: memref<1xi32, #tpu.memory_space<smem>>) -> (i32, i32, i32, i32) {
    %c0_i32 = arith.constant 0 : i32
    %c0_i32_0 = arith.constant 0 : i32
    %c0_i32_1 = arith.constant 0 : i32
    %c0_i32_2 = arith.constant 0 : i32
    return %arg0, %c0_i32, %c0_i32_0, %c0_i32_1 : i32, i32, i32, i32
  }
  func.func @transform_4(%arg0: i32, %arg1: memref<1xi32, #tpu.memory_space<smem>>) -> (i32, i32, i32) {
    %c0_i32 = arith.constant 0 : i32
    %c0_i32_0 = arith.constant 0 : i32
    %c0_i32_1 = arith.constant 0 : i32
    return %arg0, %c0_i32, %c0_i32_0 : i32, i32, i32
  }
  func.func @transform_5(%arg0: i32, %arg1: memref<1xi32, #tpu.memory_space<smem>>) -> (i32, i32, i32) {
    %c0_i32 = arith.constant 0 : i32
    %c0_i32_0 = arith.constant 0 : i32
    %c0_i32_1 = arith.constant 0 : i32
    return %arg0, %c0_i32, %c0_i32_0 : i32, i32, i32
  }
  func.func @transform_6(%arg0: i32, %arg1: memref<1xi32, #tpu.memory_space<smem>>) -> (i32, i32, i32) {
    %c0_i32 = arith.constant 0 : i32
    %c0_i32_0 = arith.constant 0 : i32
    %c0_i32_1 = arith.constant 0 : i32
    return %arg0, %c0_i32, %c0_i32_0 : i32, i32, i32
  }
  func.func @transform_7(%arg0: i32, %arg1: memref<1xi32, #tpu.memory_space<smem>>) -> (i32, i32, i32) {
    %c0_i32 = arith.constant 0 : i32
    %c0_i32_0 = arith.constant 0 : i32
    %c0_i32_1 = arith.constant 0 : i32
    return %arg0, %c0_i32, %c0_i32_0 : i32, i32, i32
  }
  func.func @transform_8(%arg0: i32, %arg1: memref<1xi32, #tpu.memory_space<smem>>) -> (i32, i32) {
    %c0_i32 = arith.constant 0 : i32
    %c0_i32_0 = arith.constant 0 : i32
    %c0_i32_1 = arith.constant 0 : i32
    return %c0_i32, %c0_i32_0 : i32, i32
  }
}

</mosaic_0001>

<llo_original>
// kernel: multi_encoder_forward.1
$region0: #{multi_encoder_forward.1}
  #allocation0 [shape = 'u32[]', space=smem, size = 0x4, offset = 0x4, fixed_abs, tag = 'smem constant byte address 0x4 - core index']
  #allocation1 [shape = 'u32[144,128]{1,0:T(1,128)}', space=vmem, size = 0x12000, scoped, tag = 'internal scratch']
  #allocation2 [shape = 'bf16[26,128]{1,0:T(8,128)(2,1)}', space=vmem, size = 0x2000, scoped, tag = 'scratch operand']
  #allocation3 [shape = 'bf16[16,640]{1,0:T(16,128)(2,1)}', space=vmem, size = 0x5000, scoped, tag = 'scratch operand']
  #allocation4 [shape = 'f32[16,512]{1,0:T(8,128)}', space=vmem, size = 0x8000, scoped, tag = 'scratch operand']
  #allocation5 [shape = 'f32[16,512]{1,0:T(8,128)}', space=vmem, size = 0x8000, scoped, tag = 'scratch operand']
  #allocation6 [shape = 'f32[16,128]{1,0:T(8,128)}', space=vmem, size = 0x2000, scoped, tag = 'scratch operand']
  #allocation7 [shape = 'f32[16,128]{1,0:T(8,128)}', space=vmem, size = 0x2000, scoped, tag = 'scratch operand']
  #allocation8 [shape = 's32[1]{0}', space=sflag, size = 0x4, scoped, tag = 'scoped memory for multi_encoder_forward.1']
  #allocation9 [shape = 's32[1]{0:T(128)S(6)}', space=smem, size = 0x200, scoped, tag = 'prefetched SMEM operand 0']
  %s0 = inlined_call_operand.<no memory space> [shape: s32[1], index: 0, kind: input, shape index: {}]
  %s1 = inlined_call_operand.hbm [shape: f32[16,128], index: 1, kind: input, shape index: {}]
  %s2 = inlined_call_operand.hbm [shape: bf16[2,3,640,128], index: 2, kind: input, shape index: {}]
  %s3 = inlined_call_operand.hbm [shape: f32[2,3,1,128], index: 3, kind: input, shape index: {}]
  %s4 = inlined_call_operand.hbm [shape: f32[2,3,1,128], index: 4, kind: input, shape index: {}]
  %s5 = inlined_call_operand.hbm [shape: bf16[2,128,1024], index: 5, kind: input, shape index: {}]
  %s6 = inlined_call_operand.hbm [shape: bf16[2,256,1024], index: 6, kind: input, shape index: {}]
  %s7 = inlined_call_operand.hbm [shape: f32[2,1,1024], index: 7, kind: input, shape index: {}]
  %s8 = inlined_call_operand.hbm [shape: f32[2,16,1], index: 8, kind: input, shape index: {}]
  %s9 = inlined_call_operand.hbm [shape: f32[16,256], index: 9, kind: output, shape index: {}]
  %s10 = sld [smem:[#allocation0]]
  $region108: #{multi_encoder_forward.1} parent=0
    _
  %s12 = ssub.s32 1, %s10
  %s13 = scalar_select 0, %s12, %s10
  %14 = sst [smem:[#allocation9]] %s0
  $region1: #{multi_encoder_forward.1} parent=0
    #allocation10 [shape = 'u8[8192]{0}', space=vmem, size = 0x2000, scoped, tag = 'input window, operand 1, single buffered']
    #allocation11 [shape = 's32[2]{0}', space=sflag, size = 0x8, scoped, tag = 'scoped memory for multi_encoder_forward.1']
    #allocation12 [shape = 's32[2]{0}', space=sflag, size = 0x8, scoped, tag = 'scoped memory for multi_encoder_forward.1']
    #allocation13 [shape = 'u8[983040]{0}', space=vmem, size = 0xf0000, scoped, tag = 'input window, operand 2']
    #allocation14 [shape = 's32[2]{0}', space=sflag, size = 0x8, scoped, tag = 'scoped memory for multi_encoder_forward.1']
    #allocation15 [shape = 'u8[3072]{0}', space=vmem, size = 0xc00, scoped, tag = 'input window, operand 3']
    #allocation16 [shape = 'u8[3072]{0}', space=vmem, size = 0xc00, scoped, tag = 'input window, operand 4']
    #allocation17 [shape = 's32[2]{0}', space=sflag, size = 0x8, scoped, tag = 'scoped memory for multi_encoder_forward.1']
    #allocation18 [shape = 'u8[524288]{0}', space=vmem, size = 0x80000, scoped, tag = 'input window, operand 5']
    #allocation19 [shape = 'u8[1048576]{0}', space=vmem, size = 0x100000, scoped, tag = 'input window, operand 6']
    #allocation20 [shape = 's32[2]{0}', space=sflag, size = 0x8, scoped, tag = 'scoped memory for multi_encoder_forward.1']
    #allocation21 [shape = 'u8[8192]{0}', space=vmem, size = 0x2000, scoped, tag = 'input window, operand 7']
    #allocation22 [shape = 'u8[16384]{0}', space=vmem, size = 0x4000, scoped, tag = 'input window, operand 8']
    #allocation23 [shape = 's32[2]{0}', space=sflag, size = 0x8, scoped, tag = 'scoped memory for multi_encoder_forward.1']
    #allocation24 [shape = 'u8[16384]{0}', space=vmem, size = 0x4000, scoped, tag = 'output window, operand 0, single buffered']
    %15 = vsyncpa [#allocation11], 0
    %16 = vsyncpa [#allocation14], 0
    %s17 = scalar_lea.sflag [#allocation14], 1
    %18 = vsyncpa %s17, 0
    %19 = vsyncpa [#allocation17], 0
    %s20 = scalar_lea.sflag [#allocation17], 1
    %21 = vsyncpa %s20, 0
    %22 = vsyncpa [#allocation20], 0
    %s23 = scalar_lea.sflag [#allocation20], 1
    %24 = vsyncpa %s23, 0
    %25 = vsyncpa [#allocation23], 0
    %s26 = scalar_lea.sflag [#allocation23], 1
    %27 = vsyncpa %s26, 0
    %28 = vsyncpa [#allocation12], 0
    loop: start=0, step=1, limit=4
    $region2: #{multi_encoder_forward.1} parent=1 // loop_pre_header
      _
    $region3: #{multi_encoder_forward.1} parent=1 // loop_header
      %s30 = sphi 0, %s34
      %p31 = scmp.ge.s32.totalorder %s30, 4
      %s38 = sphi 0, %s38
      %s40 = sphi 0, %s38
      %s41 = sphi 0, %s40
      %s55 = sphi 0, %s41
      %s61 = sphi 0, %s63
      %s64 = sphi 0, %s61
      %s65 = sphi 0, %s64
      %s81 = sphi 0, %s65
      %s87 = sphi 0, %s89
      %s90 = sphi 0, %s87
      %s91 = sphi 0, %s90
      %s107 = sphi 0, %s91
      %s113 = sphi 0, %s115
      %s116 = sphi 0, %s113
      %s117 = sphi 0, %s116
      %s133 = sphi 0, %s117
      %s139 = sphi 0, %s141
      %s142 = sphi 0, %s139
      %s143 = sphi 0, %s142
      %s159 = sphi 0, %s143
      %s165 = sphi 0, %s167
      %s168 = sphi 0, %s165
      %s169 = sphi 0, %s168
      %s185 = sphi 0, %s169
      %s191 = sphi 0, %s193
      %s194 = sphi 0, %s191
      %s195 = sphi 0, %s194
      %s211 = sphi 0, %s195
      %s217 = sphi 0, %s219
      %s220 = sphi 0, %s217
      %s221 = sphi 0, %s220
      %s237 = sphi 0, %s221
      %s241 = sphi 0, %s241
      %s243 = sphi 0, %s241
      %s244 = sphi 0, %s243
      %s258 = sphi 0, %s244
    $region4: #{multi_encoder_forward.1} parent=1 // loop_header_branch
      %33 = sbr.rel (%p31) target = $region8
    $region5: #{multi_encoder_forward.1} parent=1 // loop_body
      %s35 = ssub.s32 %s30, 1
      %s36 = ssub.s32 %s30, 2
      %s37 = sadd.s32 %s30, 1
      %s39 = sadd.s32 %s38, 1
      %p42 = scmp.eq.s32.totalorder %s30, 1
      %p43 = scmp.ne.s32.totalorder %s38, %s40
      %p44 = scmp.eq.s32.totalorder %s30, 0
      %p45 = por %p43, %p44
      %p46 = scmp.ne.s32.totalorder %s38, %s40
      %p47 = scmp.eq.s32.totalorder %s35, 1
      %p48 = por %p46, %p47
      %p49 = scmp.ne.s32.totalorder %s40, %s41
      %p50 = scmp.eq.s32.totalorder %s35, 0
      %p51 = por %p49, %p50
      %p52 = scmp.ne.s32.totalorder %s40, %s41
      %p53 = scmp.eq.s32.totalorder %s36, 1
      %p54 = por %p52, %p53
      %p56 = scmp.ne.s32.totalorder %s41, %s55
      %p57 = scmp.eq.s32.totalorder %s36, 0
      %p58 = por %p56, %p57
      %s59 = ssub.s32 %s30, %s37
      %p60 = scmp.eq.s32.totalorder %s59, 0
      %s62 = sadd.s32 %s61, 1
      %s63 = scalar_select %p60, %s61, %s62
      %p66 = pneg %p60
      %p67 = scmp.eq.s32.totalorder %s30, 1
      %p68 = por %p66, %p67
      %p69 = scmp.ne.s32.totalorder %s61, %s64
      %p70 = scmp.eq.s32.totalorder %s30, 0
      %p71 = por %p69, %p70
      %p72 = scmp.ne.s32.totalorder %s61, %s64
      %p73 = scmp.eq.s32.totalorder %s35, 1
      %p74 = por %p72, %p73
      %p75 = scmp.ne.s32.totalorder %s64, %s65
      %p76 = scmp.eq.s32.totalorder %s35, 0
      %p77 = por %p75, %p76
      %p78 = scmp.ne.s32.totalorder %s64, %s65
      %p79 = scmp.eq.s32.totalorder %s36, 1
      %p80 = por %p78, %p79
      %p82 = scmp.ne.s32.totalorder %s65, %s81
      %p83 = scmp.eq.s32.totalorder %s36, 0
      %p84 = por %p82, %p83
      %s85 = ssub.s32 %s30, %s37
      %p86 = scmp.eq.s32.totalorder %s85, 0
      %s88 = sadd.s32 %s87, 1
      %s89 = scalar_select %p86, %s87, %s88
      %p92 = pneg %p86
      %p93 = scmp.eq.s32.totalorder %s30, 1
      %p94 = por %p92, %p93
      %p95 = scmp.ne.s32.totalorder %s87, %s90
      %p96 = scmp.eq.s32.totalorder %s30, 0
      %p97 = por %p95, %p96
      %p98 = scmp.ne.s32.totalorder %s87, %s90
      %p99 = scmp.eq.s32.totalorder %s35, 1
      %p100 = por %p98, %p99
      %p101 = scmp.ne.s32.totalorder %s90, %s91
      %p102 = scmp.eq.s32.totalorder %s35, 0
      %p103 = por %p101, %p102
      %p104 = scmp.ne.s32.totalorder %s90, %s91
      %p105 = scmp.eq.s32.totalorder %s36, 1
      %p106 = por %p104, %p105
      %p108 = scmp.ne.s32.totalorder %s91, %s107
      %p109 = scmp.eq.s32.totalorder %s36, 0
      %p110 = por %p108, %p109
      %s111 = ssub.s32 %s30, %s37
      %p112 = scmp.eq.s32.totalorder %s111, 0
      %s114 = sadd.s32 %s113, 1
      %s115 = scalar_select %p112, %s113, %s114
      %p118 = pneg %p112
      %p119 = scmp.eq.s32.totalorder %s30, 1
      %p120 = por %p118, %p119
      %p121 = scmp.ne.s32.totalorder %s113, %s116
      %p122 = scmp.eq.s32.totalorder %s30, 0
      %p123 = por %p121, %p122
      %p124 = scmp.ne.s32.totalorder %s113, %s116
      %p125 = scmp.eq.s32.totalorder %s35, 1
      %p126 = por %p124, %p125
      %p127 = scmp.ne.s32.totalorder %s116, %s117
      %p128 = scmp.eq.s32.totalorder %s35, 0
      %p129 = por %p127, %p128
      %p130 = scmp.ne.s32.totalorder %s116, %s117
      %p131 = scmp.eq.s32.totalorder %s36, 1
      %p132 = por %p130, %p131
      %p134 = scmp.ne.s32.totalorder %s117, %s133
      %p135 = scmp.eq.s32.totalorder %s36, 0
      %p136 = por %p134, %p135
      %s137 = ssub.s32 %s30, %s37
      %p138 = scmp.eq.s32.totalorder %s137, 0
      %s140 = sadd.s32 %s139, 1
      %s141 = scalar_select %p138, %s139, %s140
      %p144 = pneg %p138
      %p145 = scmp.eq.s32.totalorder %s30, 1
      %p146 = por %p144, %p145
      %p147 = scmp.ne.s32.totalorder %s139, %s142
      %p148 = scmp.eq.s32.totalorder %s30, 0
      %p149 = por %p147, %p148
      %p150 = scmp.ne.s32.totalorder %s139, %s142
      %p151 = scmp.eq.s32.totalorder %s35, 1
      %p152 = por %p150, %p151
      %p153 = scmp.ne.s32.totalorder %s142, %s143
      %p154 = scmp.eq.s32.totalorder %s35, 0
      %p155 = por %p153, %p154
      %p156 = scmp.ne.s32.totalorder %s142, %s143
      %p157 = scmp.eq.s32.totalorder %s36, 1
      %p158 = por %p156, %p157
      %p160 = scmp.ne.s32.totalorder %s143, %s159
      %p161 = scmp.eq.s32.totalorder %s36, 0
      %p162 = por %p160, %p161
      %s163 = ssub.s32 %s30, %s37
      %p164 = scmp.eq.s32.totalorder %s163, 0
      %s166 = sadd.s32 %s165, 1
      %s167 = scalar_select %p164, %s165, %s166
      %p170 = pneg %p164
      %p171 = scmp.eq.s32.totalorder %s30, 1
      %p172 = por %p170, %p171
      %p173 = scmp.ne.s32.totalorder %s165, %s168
      %p174 = scmp.eq.s32.totalorder %s30, 0
      %p175 = por %p173, %p174
      %p176 = scmp.ne.s32.totalorder %s165, %s168
      %p177 = scmp.eq.s32.totalorder %s35, 1
      %p178 = por %p176, %p177
      %p179 = scmp.ne.s32.totalorder %s168, %s169
      %p180 = scmp.eq.s32.totalorder %s35, 0
      %p181 = por %p179, %p180
      %p182 = scmp.ne.s32.totalorder %s168, %s169
      %p183 = scmp.eq.s32.totalorder %s36, 1
      %p184 = por %p182, %p183
      %p186 = scmp.ne.s32.totalorder %s169, %s185
      %p187 = scmp.eq.s32.totalorder %s36, 0
      %p188 = por %p186, %p187
      %s189 = ssub.s32 %s30, %s37
      %p190 = scmp.eq.s32.totalorder %s189, 0
      %s192 = sadd.s32 %s191, 1
      %s193 = scalar_select %p190, %s191, %s192
      %p196 = pneg %p190
      %p197 = scmp.eq.s32.totalorder %s30, 1
      %p198 = por %p196, %p197
      %p199 = scmp.ne.s32.totalorder %s191, %s194
      %p200 = scmp.eq.s32.totalorder %s30, 0
      %p201 = por %p199, %p200
      %p202 = scmp.ne.s32.totalorder %s191, %s194
      %p203 = scmp.eq.s32.totalorder %s35, 1
      %p204 = por %p202, %p203
      %p205 = scmp.ne.s32.totalorder %s194, %s195
      %p206 = scmp.eq.s32.totalorder %s35, 0
      %p207 = por %p205, %p206
      %p208 = scmp.ne.s32.totalorder %s194, %s195
      %p209 = scmp.eq.s32.totalorder %s36, 1
      %p210 = por %p208, %p209
      %p212 = scmp.ne.s32.totalorder %s195, %s211
      %p213 = scmp.eq.s32.totalorder %s36, 0
      %p214 = por %p212, %p213
      %s215 = ssub.s32 %s30, %s37
      %p216 = scmp.eq.s32.totalorder %s215, 0
      %s218 = sadd.s32 %s217, 1
      %s219 = scalar_select %p216, %s217, %s218
      %p222 = pneg %p216
      %p223 = scmp.eq.s32.totalorder %s30, 1
      %p224 = por %p222, %p223
      %p225 = scmp.ne.s32.totalorder %s217, %s220
      %p226 = scmp.eq.s32.totalorder %s30, 0
      %p227 = por %p225, %p226
      %p228 = scmp.ne.s32.totalorder %s217, %s220
      %p229 = scmp.eq.s32.totalorder %s35, 1
      %p230 = por %p228, %p229
      %p231 = scmp.ne.s32.totalorder %s220, %s221
      %p232 = scmp.eq.s32.totalorder %s35, 0
      %p233 = por %p231, %p232
      %p234 = scmp.ne.s32.totalorder %s220, %s221
      %p235 = scmp.eq.s32.totalorder %s36, 1
      %p236 = por %p234, %p235
      %p238 = scmp.ne.s32.totalorder %s221, %s237
      %p239 = scmp.eq.s32.totalorder %s36, 0
      %p240 = por %p238, %p239
      %s242 = sadd.s32 %s241, 1
      %p245 = scmp.eq.s32.totalorder %s30, 1
      %p246 = scmp.ne.s32.totalorder %s241, %s243
      %p247 = scmp.eq.s32.totalorder %s30, 0
      %p248 = por %p246, %p247
      %p249 = scmp.ne.s32.totalorder %s241, %s243
      %p250 = scmp.eq.s32.totalorder %s35, 1
      %p251 = por %p249, %p250
      %p252 = scmp.ne.s32.totalorder %s243, %s244
      %p253 = scmp.eq.s32.totalorder %s35, 0
      %p254 = por %p252, %p253
      %p255 = scmp.ne.s32.totalorder %s243, %s244
      %p256 = scmp.eq.s32.totalorder %s36, 1
      %p257 = por %p255, %p256
      %p259 = scmp.ne.s32.totalorder %s244, %s258
      %p260 = scmp.eq.s32.totalorder %s36, 0
      %p261 = por %p259, %p260
      %p262 = scmp.le.s32.totalorder 1, %s30
      %p263 = scmp.lt.s32.totalorder %s30, 3
      %p264 = pnand %p262, %p263
      %p265 = pneg %p264
      // Predicated region
      $region9: #{multi_encoder_forward.1} parent=5 // pred_check
        _
      $region10: #{multi_encoder_forward.1} parent=5 // pred_check_branch
        %267 = sbr.rel (%p264) target = $region12
      $region11: #{multi_encoder_forward.1} parent=5 // pred_region
        %s268 = ssub.s32 %s30, 1
        // Predicated region
        $region13: #{multi_encoder_forward.1} parent=11 // pred_check
          %p269 = pneg %p51
        $region14: #{multi_encoder_forward.1} parent=11 // pred_check_branch
          %271 = sbr.rel (%p269) target = $region16
        $region15: #{multi_encoder_forward.1} parent=11 // pred_region
          %s273 = ssub.s32 256, 256
          %274 = vsyncadd [#allocation11], %s273
          %s275 = sshll.u32 [#allocation10], 4
          %s276 = int_to_ptr.vmem [resolvable:$true] %s275
          %281 = dma.hbm_to_vmem [thread:$0]  %s1, 256, %s276, [#allocation11], 128, 128, 8
        $region16: #{multi_encoder_forward.1} parent=11 // pred_fallthru
          _
      $region12: #{multi_encoder_forward.1} parent=5 // pred_fallthru
        _
      %p282 = scmp.lt.s32.totalorder %s30, 2
      // Predicated region
      $region17: #{multi_encoder_forward.1} parent=5 // pred_check
        %p283 = pneg %p282
      $region18: #{multi_encoder_forward.1} parent=5 // pred_check_branch
        %285 = sbr.rel (%p283) target = $region20
      $region19: #{multi_encoder_forward.1} parent=5 // pred_region
        // Predicated region
        $region21: #{multi_encoder_forward.1} parent=19 // pred_check
          %p286 = pneg %p71
        $region22: #{multi_encoder_forward.1} parent=19 // pred_check_branch
          %288 = sbr.rel (%p286) target = $region24
        $region23: #{multi_encoder_forward.1} parent=19 // pred_region
          %s289 = sand.u32 %s30, 1
          %s290 = scalar_lea.sflag [#allocation14], %s289
          %s291 = sand.u32 %s61, 1
          %s292 = smul.addr %s291, 960
          %s293 = scalar_lea.vmem [#allocation13], %s292
          %s295 = ssub.s32 15360, 15360
          %296 = vsyncadd %s290, %s295
          %s297 = smul.addr %s30, 240
          %s298 = smul.addr %s297, 64
          %s299 = scalar_lea.hbm %s2, %s298
          %s300 = sshll.u32 %s293, 4
          %s301 = int_to_ptr.vmem [resolvable:$true] %s300
          %306 = dma.hbm_to_vmem [thread:$0]  %s299, 15360, %s301, %s290, 64, 64, 4
        $region24: #{multi_encoder_forward.1} parent=19 // pred_fallthru
          _
        // Predicated region
        $region25: #{multi_encoder_forward.1} parent=19 // pred_check
          %p307 = pneg %p97
        $region26: #{multi_encoder_forward.1} parent=19 // pred_check_branch
          %309 = sbr.rel (%p307) target = $region28
        $region27: #{multi_encoder_forward.1} parent=19 // pred_region
          %s310 = sand.u32 %s30, 1
          %s311 = scalar_lea.sflag [#allocation14], %s310
          %s312 = sand.u32 %s87, 1
          %s313 = smul.addr %s312, 3
          %s314 = scalar_lea.vmem [#allocation15], %s313
          %s316 = ssub.s32 48, 48
          %317 = vsyncadd %s311, %s316
          %s318 = smul.addr %s30, 3
          %s319 = smul.addr %s318, 16
          %s320 = scalar_lea.hbm %s3, %s319
          %s321 = sshll.u32 %s314, 4
          %s322 = int_to_ptr.vmem [resolvable:$true] %s321
          %327 = dma.hbm_to_vmem [thread:$0]  %s320, 48, %s322, %s311, 16, 16, 1
        $region28: #{multi_encoder_forward.1} parent=19 // pred_fallthru
          _
        // Predicated region
        $region29: #{multi_encoder_forward.1} parent=19 // pred_check
          %p328 = pneg %p123
        $region30: #{multi_encoder_forward.1} parent=19 // pred_check_branch
          %330 = sbr.rel (%p328) target = $region32
        $region31: #{multi_encoder_forward.1} parent=19 // pred_region
          %s331 = sand.u32 %s30, 1
          %s332 = scalar_lea.sflag [#allocation17], %s331
          %s333 = sand.u32 %s113, 1
          %s334 = smul.addr %s333, 3
          %s335 = scalar_lea.vmem [#allocation16], %s334
          %s337 = ssub.s32 48, 48
          %338 = vsyncadd %s332, %s337
          %s339 = smul.addr %s30, 3
          %s340 = smul.addr %s339, 16
          %s341 = scalar_lea.hbm %s4, %s340
          %s342 = sshll.u32 %s335, 4
          %s343 = int_to_ptr.vmem [resolvable:$true] %s342
          %348 = dma.hbm_to_vmem [thread:$0]  %s341, 48, %s343, %s332, 16, 16, 1
        $region32: #{multi_encoder_forward.1} parent=19 // pred_fallthru
          _
        // Predicated region
        $region33: #{multi_encoder_forward.1} parent=19 // pred_check
          %p349 = pneg %p149
        $region34: #{multi_encoder_forward.1} parent=19 // pred_check_branch
          %351 = sbr.rel (%p349) target = $region36
        $region35: #{multi_encoder_forward.1} parent=19 // pred_region
          %s352 = sand.u32 %s30, 1
          %s353 = scalar_lea.sflag [#allocation17], %s352
          %s354 = sand.u32 %s139, 1
          %s355 = smul.addr %s354, 512
          %s356 = scalar_lea.vmem [#allocation18], %s355
          %s358 = ssub.s32 8192, 8192
          %359 = vsyncadd %s353, %s358
          %s360 = smul.addr %s30, 128
          %s361 = smul.addr %s360, 64
          %s362 = scalar_lea.hbm %s5, %s361
          %s363 = sshll.u32 %s356, 4
          %s364 = int_to_ptr.vmem [resolvable:$true] %s363
          %369 = dma.hbm_to_vmem [thread:$0]  %s362, 8192, %s364, %s353, 512, 512, 32
        $region36: #{multi_encoder_forward.1} parent=19 // pred_fallthru
          _
        // Predicated region
        $region37: #{multi_encoder_forward.1} parent=19 // pred_check
          %p370 = pneg %p175
        $region38: #{multi_encoder_forward.1} parent=19 // pred_check_branch
          %372 = sbr.rel (%p370) target = $region40
        $region39: #{multi_encoder_forward.1} parent=19 // pred_region
          %s373 = sand.u32 %s30, 1
          %s374 = scalar_lea.sflag [#allocation20], %s373
          %s375 = sand.u32 %s165, 1
          %s376 = smul.addr %s375, 1024
          %s377 = scalar_lea.vmem [#allocation19], %s376
          %s379 = ssub.s32 16384, 16384
          %380 = vsyncadd %s374, %s379
          %s381 = smul.addr %s30, 256
          %s382 = smul.addr %s381, 64
          %s383 = scalar_lea.hbm %s6, %s382
          %s384 = sshll.u32 %s377, 4
          %s385 = int_to_ptr.vmem [resolvable:$true] %s384
          %390 = dma.hbm_to_vmem [thread:$0]  %s383, 16384, %s385, %s374, 512, 512, 32
        $region40: #{multi_encoder_forward.1} parent=19 // pred_fallthru
          _
        // Predicated region
        $region41: #{multi_encoder_forward.1} parent=19 // pred_check
          %p391 = pneg %p201
        $region42: #{multi_encoder_forward.1} parent=19 // pred_check_branch
          %393 = sbr.rel (%p391) target = $region44
        $region43: #{multi_encoder_forward.1} parent=19 // pred_region
          %s394 = sand.u32 %s30, 1
          %s395 = scalar_lea.sflag [#allocation20], %s394
          %s396 = sand.u32 %s191, 1
          %s397 = smul.addr %s396, 8
          %s398 = scalar_lea.vmem [#allocation21], %s397
          %s400 = ssub.s32 128, 128
          %401 = vsyncadd %s395, %s400
          %s402 = smul.addr %s30, 8
          %s403 = smul.addr %s402, 16
          %s404 = scalar_lea.hbm %s7, %s403
          %s406 = sshll.u32 %s398, 4
          %s407 = int_to_ptr.vmem [resolvable:$true] %s406
          %409 = dma.hbm_to_vmem [thread:$0]  %s404, 128, %s407, %s395
        $region44: #{multi_encoder_forward.1} parent=19 // pred_fallthru
          _
        // Predicated region
        $region45: #{multi_encoder_forward.1} parent=19 // pred_check
          %p410 = pneg %p227
        $region46: #{multi_encoder_forward.1} parent=19 // pred_check_branch
          %412 = sbr.rel (%p410) target = $region48
        $region47: #{multi_encoder_forward.1} parent=19 // pred_region
          %s413 = sand.u32 %s217, 1
          %s414 = scalar_lea.sflag [#allocation23], %s413
          %s415 = sand.u32 %s217, 1
          %s416 = smul.addr %s415, 16
          %s417 = scalar_lea.vmem [#allocation22], %s416
          %s419 = ssub.s32 256, 256
          %420 = vsyncadd %s414, %s419
          %s421 = smul.addr %s30, 2
          %s422 = smul.addr %s421, 128
          %s423 = scalar_lea.hbm %s8, %s422
          %s424 = sshll.u32 %s417, 4
          %s425 = int_to_ptr.vmem [resolvable:$true] %s424
          %430 = dma.hbm_to_vmem [thread:$0]  %s423, 256, %s425, %s414, 128, 128, 8
        $region48: #{multi_encoder_forward.1} parent=19 // pred_fallthru
          _
      $region20: #{multi_encoder_forward.1} parent=5 // pred_fallthru
        _
      %p431 = scmp.le.s32.totalorder 1, %s30
      %p432 = scmp.lt.s32.totalorder %s30, 3
      %p433 = pnand %p431, %p432
      %p434 = pneg %p433
      // Predicated region
      $region49: #{multi_encoder_forward.1} parent=5 // pred_check
        _
      $region50: #{multi_encoder_forward.1} parent=5 // pred_check_branch
        %436 = sbr.rel (%p433) target = $region52
      $region51: #{multi_encoder_forward.1} parent=5 // pred_region
        %s437 = ssub.s32 %s30, 1
        // Predicated region
        $region53: #{multi_encoder_forward.1} parent=51 // pred_check
          %p438 = pneg %p51
        $region54: #{multi_encoder_forward.1} parent=51 // pred_check_branch
          %440 = sbr.rel (%p438) target = $region56
        $region55: #{multi_encoder_forward.1} parent=51 // pred_region
          %441 = dma.done [#allocation11], 256
        $region56: #{multi_encoder_forward.1} parent=51 // pred_fallthru
          _
        %s442 = sand.u32 %s35, 1
        %s443 = scalar_lea.sflag [#allocation14], %s442
        %s444 = sand.u32 %s64, 1
        %s445 = smul.addr %s444, 960
        %s446 = scalar_lea.vmem [#allocation13], %s445
        // Predicated region
        $region57: #{multi_encoder_forward.1} parent=51 // pred_check
          %p447 = pneg %p77
        $region58: #{multi_encoder_forward.1} parent=51 // pred_check_branch
          %449 = sbr.rel (%p447) target = $region60
        $region59: #{multi_encoder_forward.1} parent=51 // pred_region
          %450 = dma.done %s443, 15360
        $region60: #{multi_encoder_forward.1} parent=51 // pred_fallthru
          _
        %s451 = sand.u32 %s35, 1
        %s452 = scalar_lea.sflag [#allocation14], %s451
        %s453 = sand.u32 %s90, 1
        %s454 = smul.addr %s453, 3
        %s455 = scalar_lea.vmem [#allocation15], %s454
        // Predicated region
        $region61: #{multi_encoder_forward.1} parent=51 // pred_check
          %p456 = pneg %p103
        $region62: #{multi_encoder_forward.1} parent=51 // pred_check_branch
          %458 = sbr.rel (%p456) target = $region64
        $region63: #{multi_encoder_forward.1} parent=51 // pred_region
          %459 = dma.done %s452, 48
        $region64: #{multi_encoder_forward.1} parent=51 // pred_fallthru
          _
        %s460 = sand.u32 %s35, 1
        %s461 = scalar_lea.sflag [#allocation17], %s460
        %s462 = sand.u32 %s116, 1
        %s463 = smul.addr %s462, 3
        %s464 = scalar_lea.vmem [#allocation16], %s463
        // Predicated region
        $region65: #{multi_encoder_forward.1} parent=51 // pred_check
          %p465 = pneg %p129
        $region66: #{multi_encoder_forward.1} parent=51 // pred_check_branch
          %467 = sbr.rel (%p465) target = $region68
        $region67: #{multi_encoder_forward.1} parent=51 // pred_region
          %468 = dma.done %s461, 48
        $region68: #{multi_encoder_forward.1} parent=51 // pred_fallthru
          _
        %s469 = sand.u32 %s35, 1
        %s470 = scalar_lea.sflag [#allocation17], %s469
        %s471 = sand.u32 %s142, 1
        %s472 = smul.addr %s471, 512
        %s473 = scalar_lea.vmem [#allocation18], %s472
        // Predicated region
        $region69: #{multi_encoder_forward.1} parent=51 // pred_check
          %p474 = pneg %p155
        $region70: #{multi_encoder_forward.1} parent=51 // pred_check_branch
          %476 = sbr.rel (%p474) target = $region72
        $region71: #{multi_encoder_forward.1} parent=51 // pred_region
          %477 = dma.done %s470, 8192
        $region72: #{multi_encoder_forward.1} parent=51 // pred_fallthru
          _
        %s478 = sand.u32 %s35, 1
        %s479 = scalar_lea.sflag [#allocation20], %s478
        %s480 = sand.u32 %s168, 1
        %s481 = smul.addr %s480, 1024
        %s482 = scalar_lea.vmem [#allocation19], %s481
        // Predicated region
        $region73: #{multi_encoder_forward.1} parent=51 // pred_check
          %p483 = pneg %p181
        $region74: #{multi_encoder_forward.1} parent=51 // pred_check_branch
          %485 = sbr.rel (%p483) target = $region76
        $region75: #{multi_encoder_forward.1} parent=51 // pred_region
          %486 = dma.done %s479, 16384
        $region76: #{multi_encoder_forward.1} parent=51 // pred_fallthru
          _
        %s487 = sand.u32 %s35, 1
        %s488 = scalar_lea.sflag [#allocation20], %s487
        %s489 = sand.u32 %s194, 1
        %s490 = smul.addr %s489, 8
        %s491 = scalar_lea.vmem [#allocation21], %s490
        // Predicated region
        $region77: #{multi_encoder_forward.1} parent=51 // pred_check
          %p492 = pneg %p207
        $region78: #{multi_encoder_forward.1} parent=51 // pred_check_branch
          %494 = sbr.rel (%p492) target = $region80
        $region79: #{multi_encoder_forward.1} parent=51 // pred_region
          %495 = dma.done %s488, 128
        $region80: #{multi_encoder_forward.1} parent=51 // pred_fallthru
          _
        %s496 = sand.u32 %s220, 1
        %s497 = scalar_lea.sflag [#allocation23], %s496
        %s498 = sand.u32 %s220, 1
        %s499 = smul.addr %s498, 16
        %s500 = scalar_lea.vmem [#allocation22], %s499
        // Predicated region
        $region81: #{multi_encoder_forward.1} parent=51 // pred_check
          %p501 = pneg %p233
        $region82: #{multi_encoder_forward.1} parent=51 // pred_check_branch
          %503 = sbr.rel (%p501) target = $region84
        $region83: #{multi_encoder_forward.1} parent=51 // pred_region
          %504 = dma.done %s497, 256
        $region84: #{multi_encoder_forward.1} parent=51 // pred_fallthru
          _
        %p505 = pneg %p51
        %p506 = pneg %p48
        %s507 = sand.u32 %s35, 1
        %s508 = scalar_lea.sflag [#allocation14], %s507
        %s509 = sand.u32 %s64, 1
        %s510 = smul.addr %s509, 960
        %s511 = scalar_lea.vmem [#allocation13], %s510
        %p512 = pneg %p77
        %p513 = pneg %p74
        %s514 = sand.u32 %s35, 1
        %s515 = scalar_lea.sflag [#allocation14], %s514
        %s516 = sand.u32 %s90, 1
        %s517 = smul.addr %s516, 3
        %s518 = scalar_lea.vmem [#allocation15], %s517
        %p519 = pneg %p103
        %p520 = pneg %p100
        %s521 = sand.u32 %s35, 1
        %s522 = scalar_lea.sflag [#allocation17], %s521
        %s523 = sand.u32 %s116, 1
        %s524 = smul.addr %s523, 3
        %s525 = scalar_lea.vmem [#allocation16], %s524
        %p526 = pneg %p129
        %p527 = pneg %p126
        %s528 = sand.u32 %s35, 1
        %s529 = scalar_lea.sflag [#allocation17], %s528
        %s530 = sand.u32 %s142, 1
        %s531 = smul.addr %s530, 512
        %s532 = scalar_lea.vmem [#allocation18], %s531
        %p533 = pneg %p155
        %p534 = pneg %p152
        %s535 = sand.u32 %s35, 1
        %s536 = scalar_lea.sflag [#allocation20], %s535
        %s537 = sand.u32 %s168, 1
        %s538 = smul.addr %s537, 1024
        %s539 = scalar_lea.vmem [#allocation19], %s538
        %p540 = pneg %p181
        %p541 = pneg %p178
        %s542 = sand.u32 %s35, 1
        %s543 = scalar_lea.sflag [#allocation20], %s542
        %s544 = sand.u32 %s194, 1
        %s545 = smul.addr %s544, 8
        %s546 = scalar_lea.vmem [#allocation21], %s545
        %p547 = pneg %p207
        %p548 = pneg %p204
        %s549 = sand.u32 %s220, 1
        %s550 = scalar_lea.sflag [#allocation23], %s549
        %s551 = sand.u32 %s220, 1
        %s552 = smul.addr %s551, 16
        %s553 = scalar_lea.vmem [#allocation22], %s552
        %p554 = pneg %p233
        %p555 = pneg %p230
        %p556 = pneg %p254
        %p557 = pneg %p251
        %s559 = sld [smem:[#allocation9]]
        %p560 = scmp.lt.s32.totalorder %s559, 16
        %s561 = scalar_select %p560, %s559, 16
        %562 = vst [vmem:[#allocation2] sm:$0x8] 0
        %563 = vst [vmem:[#allocation2 + $0xc] sm:$0x1] 0
        %v564 = vld [vmem:[#allocation10] sm:$0xff]
        %v565 = vld [vmem:[#allocation10 + $0x8] sm:$0xff]
        %v566 = vpack.c.bf16 %v565, %v564
        %v568 = vunpack.c.l.b16 %v566
        %v569 = vunpack.c.h.b16 %v566
        %v570 = vpack.c.b16 %v568, %v568
        %v571 = vpack.c.b16 %v569, %v569
        %574 = vst [vmem:[#allocation2 + $0x4] sm:$0xf] %v570
        %575 = vst [vmem:[#allocation2 + $0x8] sm:$0xf] %v571
        %v576 = vld [vmem:[#allocation2] sm:$0x8]
        %v577 = vld [vmem:[#allocation2 + $0x4] sm:$0xf]
        %v578 = vld [vmem:[#allocation2 + $0x8] sm:$0x7]
        %v582 = vunpack.c.l.b16 %v576
        %v583 = vunpack.c.l.b16 %v577
        %v584 = vunpack.c.l.b16 %v578
        %v585 = vpack.c.b16 %v583, %v582
        %v586 = vpack.c.b16 %v584, %v584
        %vm587 = vcmask 1044480
        %v588 = vrot.slane %v585, 3
        %v589 = vrot.slane %v586, 3
        %v590 = vsel %vm587, %v588, %v589
        %592 = vst [vmem:[#allocation3] sm:$0xff] %v590
        %v593 = vld [vmem:[#allocation2] sm:$0x8]
        %v594 = vld [vmem:[#allocation2 + $0x4] sm:$0xf]
        %v595 = vld [vmem:[#allocation2 + $0x8] sm:$0xf]
        %v599 = vunpack.c.l.b16 %v593
        %v600 = vunpack.c.l.b16 %v594
        %v601 = vunpack.c.l.b16 %v595
        %v602 = vpack.c.b16 %v600, %v599
        %v603 = vpack.c.b16 %v601, %v601
        %vm604 = vsmask.f32 4352
        %v606 = vshrl.u32 %v602, 16
        %v608 = vrot.slane %v606, 3
        %v609 = vshll.u32 %v602, 16
        %v611 = vrot.slane %v609, 4
        %v612 = vor.u32 %v608, %v611
        %v614 = vshrl.u32 %v603, 16
        %v616 = vrot.slane %v614, 3
        %v617 = vshll.u32 %v603, 16
        %v619 = vrot.slane %v617, 4
        %v620 = vor.u32 %v616, %v619
        %v621 = vsel %vm604, %v612, %v620
        %623 = vst [vmem:[#allocation3 + $0x8] sm:$0xff] %v621
        %v624 = vld [vmem:[#allocation2 + $0x4] sm:$0xf]
        %v625 = vld [vmem:[#allocation2 + $0x8] sm:$0xf]
        %v628 = vunpack.c.l.b16 %v624
        %v629 = vunpack.c.l.b16 %v625
        %v630 = vpack.c.b16 %v629, %v628
        %632 = vst [vmem:[#allocation3 + $0x10] sm:$0xff] %v630
        %v633 = vld [vmem:[#allocation2 + $0x4] sm:$0xf]
        %v634 = vld [vmem:[#allocation2 + $0x8] sm:$0xf]
        %v635 = vld [vmem:[#allocation2 + $0xc] sm:$0x1]
        %v639 = vunpack.c.l.b16 %v633
        %v640 = vunpack.c.l.b16 %v634
        %v641 = vunpack.c.l.b16 %v635
        %v642 = vpack.c.b16 %v640, %v639
        %v643 = vpack.c.b16 %v641, %v641
        %vm644 = vsmask.f32 7424
        %v646 = vshrl.u32 %v642, 16
        %v648 = vshll.u32 %v642, 16
        %v650 = vrot.slane %v648, 1
        %v651 = vor.u32 %v646, %v650
        %v653 = vshll.u32 %v643, 16
        %v655 = vrot.slane %v653, 1
        %v656 = vsel %vm644, %v651, %v655
        %658 = vst [vmem:[#allocation3 + $0x18] sm:$0xff] %v656
        %v659 = vld [vmem:[#allocation2 + $0x4] sm:$0xe]
        %v660 = vld [vmem:[#allocation2 + $0x8] sm:$0xf]
        %v661 = vld [vmem:[#allocation2 + $0xc] sm:$0x1]
        %v665 = vunpack.c.l.b16 %v659
        %v666 = vunpack.c.l.b16 %v660
        %v667 = vunpack.c.l.b16 %v661
        %v668 = vpack.c.b16 %v666, %v665
        %v669 = vpack.c.b16 %v667, %v667
        %vm670 = vcmask 1046528
        %v671 = vrot.slane %v668, 1
        %v672 = vrot.slane %v669, 1
        %v673 = vsel %vm670, %v671, %v672
        %675 = vst [vmem:[#allocation3 + $0x20] sm:$0xff] %v673
        %v676 = vld [vmem:[#allocation3] sm:$0xff]
        %v677 = vld [vmem:[#allocation3 + $0x8] sm:$0xff]
        %v678 = vld [vmem:[#allocation3 + $0x10] sm:$0xff]
        %v679 = vld [vmem:[#allocation3 + $0x18] sm:$0xff]
        %v680 = vld [vmem:[#allocation3 + $0x20] sm:$0xff]
        %v681 = vld [vmem:[%s446] sm:$0xf]
        %v682 = vld [vmem:[%s446 + $0x4] sm:$0xf]
        %v683 = vld [vmem:[%s446 + $0x8] sm:$0xf]
        %v684 = vld [vmem:[%s446 + $0xc] sm:$0xf]
        %v685 = vld [vmem:[%s446 + $0x10] sm:$0xf]
        %v686 = vld [vmem:[%s446 + $0x14] sm:$0xf]
        %v687 = vld [vmem:[%s446 + $0x18] sm:$0xf]
        %v688 = vld [vmem:[%s446 + $0x1c] sm:$0xf]
        %v689 = vld [vmem:[%s446 + $0x20] sm:$0xf]
        %v690 = vld [vmem:[%s446 + $0x24] sm:$0xf]
        %v691 = vld [vmem:[%s446 + $0x28] sm:$0xf]
        %v692 = vld [vmem:[%s446 + $0x2c] sm:$0xf]
        %v693 = vld [vmem:[%s446 + $0x30] sm:$0xf]
        %v694 = vld [vmem:[%s446 + $0x34] sm:$0xf]
        %v695 = vld [vmem:[%s446 + $0x38] sm:$0xf]
        %v696 = vld [vmem:[%s446 + $0x3c] sm:$0xf]
        %v697 = vld [vmem:[%s446 + $0x40] sm:$0xf]
        %v698 = vld [vmem:[%s446 + $0x44] sm:$0xf]
        %v699 = vld [vmem:[%s446 + $0x48] sm:$0xf]
        %v700 = vld [vmem:[%s446 + $0x4c] sm:$0xf]
        %v701 = vld [vmem:[%s446 + $0x50] sm:$0xf]
        %v702 = vld [vmem:[%s446 + $0x54] sm:$0xf]
        %v703 = vld [vmem:[%s446 + $0x58] sm:$0xf]
        %v704 = vld [vmem:[%s446 + $0x5c] sm:$0xf]
        %v705 = vld [vmem:[%s446 + $0x60] sm:$0xf]
        %v706 = vld [vmem:[%s446 + $0x64] sm:$0xf]
        %v707 = vld [vmem:[%s446 + $0x68] sm:$0xf]
        %v708 = vld [vmem:[%s446 + $0x6c] sm:$0xf]
        %v709 = vld [vmem:[%s446 + $0x70] sm:$0xf]
        %v710 = vld [vmem:[%s446 + $0x74] sm:$0xf]
        %v711 = vld [vmem:[%s446 + $0x78] sm:$0xf]
        %v712 = vld [vmem:[%s446 + $0x7c] sm:$0xf]
        %v713 = vld [vmem:[%s446 + $0x80] sm:$0xf]
        %v714 = vld [vmem:[%s446 + $0x84] sm:$0xf]
        %v715 = vld [vmem:[%s446 + $0x88] sm:$0xf]
        %v716 = vld [vmem:[%s446 + $0x8c] sm:$0xf]
        %v717 = vld [vmem:[%s446 + $0x90] sm:$0xf]
        %v718 = vld [vmem:[%s446 + $0x94] sm:$0xf]
        %v719 = vld [vmem:[%s446 + $0x98] sm:$0xf]
        %v720 = vld [vmem:[%s446 + $0x9c] sm:$0xf]
        %v721 = vld [vmem:[%s446 + $0xa0] sm:$0xf]
        %v722 = vld [vmem:[%s446 + $0xa4] sm:$0xf]
        %v723 = vld [vmem:[%s446 + $0xa8] sm:$0xf]
        %v724 = vld [vmem:[%s446 + $0xac] sm:$0xf]
        %v725 = vld [vmem:[%s446 + $0xb0] sm:$0xf]
        %v726 = vld [vmem:[%s446 + $0xb4] sm:$0xf]
        %v727 = vld [vmem:[%s446 + $0xb8] sm:$0xf]
        %v728 = vld [vmem:[%s446 + $0xbc] sm:$0xf]
        %v729 = vld [vmem:[%s446 + $0xc0] sm:$0xf]
        %v730 = vld [vmem:[%s446 + $0xc4] sm:$0xf]
        %v731 = vld [vmem:[%s446 + $0xc8] sm:$0xf]
        %v732 = vld [vmem:[%s446 + $0xcc] sm:$0xf]
        %v733 = vld [vmem:[%s446 + $0xd0] sm:$0xf]
        %v734 = vld [vmem:[%s446 + $0xd4] sm:$0xf]
        %v735 = vld [vmem:[%s446 + $0xd8] sm:$0xf]
        %v736 = vld [vmem:[%s446 + $0xdc] sm:$0xf]
        %v737 = vld [vmem:[%s446 + $0xe0] sm:$0xf]
        %v738 = vld [vmem:[%s446 + $0xe4] sm:$0xf]
        %v739 = vld [vmem:[%s446 + $0xe8] sm:$0xf]
        %v740 = vld [vmem:[%s446 + $0xec] sm:$0xf]
        %v741 = vld [vmem:[%s446 + $0xf0] sm:$0xf]
        %v742 = vld [vmem:[%s446 + $0xf4] sm:$0xf]
        %v743 = vld [vmem:[%s446 + $0xf8] sm:$0xf]
        %v744 = vld [vmem:[%s446 + $0xfc] sm:$0xf]
        %v745 = vld [vmem:[%s446 + $0x100] sm:$0xf]
        %v746 = vld [vmem:[%s446 + $0x104] sm:$0xf]
        %v747 = vld [vmem:[%s446 + $0x108] sm:$0xf]
        %v748 = vld [vmem:[%s446 + $0x10c] sm:$0xf]
        %v749 = vld [vmem:[%s446 + $0x110] sm:$0xf]
        %v750 = vld [vmem:[%s446 + $0x114] sm:$0xf]
        %v751 = vld [vmem:[%s446 + $0x118] sm:$0xf]
        %v752 = vld [vmem:[%s446 + $0x11c] sm:$0xf]
        %v753 = vld [vmem:[%s446 + $0x120] sm:$0xf]
        %v754 = vld [vmem:[%s446 + $0x124] sm:$0xf]
        %v755 = vld [vmem:[%s446 + $0x128] sm:$0xf]
        %v756 = vld [vmem:[%s446 + $0x12c] sm:$0xf]
        %v757 = vld [vmem:[%s446 + $0x130] sm:$0xf]
        %v758 = vld [vmem:[%s446 + $0x134] sm:$0xf]
        %v759 = vld [vmem:[%s446 + $0x138] sm:$0xf]
        %v760 = vld [vmem:[%s446 + $0x13c] sm:$0xf]
        %v841 = vunpack.c.l.b16 %v681
        %v842 = vunpack.c.l.b16 %v682
        %v843 = vunpack.c.l.b16 %v683
        %v844 = vunpack.c.l.b16 %v684
        %v845 = vunpack.c.l.b16 %v685
        %v846 = vunpack.c.l.b16 %v686
        %v847 = vunpack.c.l.b16 %v687
        %v848 = vunpack.c.l.b16 %v688
        %v849 = vunpack.c.l.b16 %v689
        %v850 = vunpack.c.l.b16 %v690
        %v851 = vunpack.c.l.b16 %v691
        %v852 = vunpack.c.l.b16 %v692
        %v853 = vunpack.c.l.b16 %v693
        %v854 = vunpack.c.l.b16 %v694
        %v855 = vunpack.c.l.b16 %v695
        %v856 = vunpack.c.l.b16 %v696
        %v857 = vunpack.c.l.b16 %v697
        %v858 = vunpack.c.l.b16 %v698
        %v859 = vunpack.c.l.b16 %v699
        %v860 = vunpack.c.l.b16 %v700
        %v861 = vunpack.c.l.b16 %v701
        %v862 = vunpack.c.l.b16 %v702
        %v863 = vunpack.c.l.b16 %v703
        %v864 = vunpack.c.l.b16 %v704
        %v865 = vunpack.c.l.b16 %v705
        %v866 = vunpack.c.l.b16 %v706
        %v867 = vunpack.c.l.b16 %v707
        %v868 = vunpack.c.l.b16 %v708
        %v869 = vunpack.c.l.b16 %v709
        %v870 = vunpack.c.l.b16 %v710
        %v871 = vunpack.c.l.b16 %v711
        %v872 = vunpack.c.l.b16 %v712
        %v873 = vunpack.c.l.b16 %v713
        %v874 = vunpack.c.l.b16 %v714
        %v875 = vunpack.c.l.b16 %v715
        %v876 = vunpack.c.l.b16 %v716
        %v877 = vunpack.c.l.b16 %v717
        %v878 = vunpack.c.l.b16 %v718
        %v879 = vunpack.c.l.b16 %v719
        %v880 = vunpack.c.l.b16 %v720
        %v881 = vunpack.c.l.b16 %v721
        %v882 = vunpack.c.l.b16 %v722
        %v883 = vunpack.c.l.b16 %v723
        %v884 = vunpack.c.l.b16 %v724
        %v885 = vunpack.c.l.b16 %v725
        %v886 = vunpack.c.l.b16 %v726
        %v887 = vunpack.c.l.b16 %v727
        %v888 = vunpack.c.l.b16 %v728
        %v889 = vunpack.c.l.b16 %v729
        %v890 = vunpack.c.l.b16 %v730
        %v891 = vunpack.c.l.b16 %v731
        %v892 = vunpack.c.l.b16 %v732
        %v893 = vunpack.c.l.b16 %v733
        %v894 = vunpack.c.l.b16 %v734
        %v895 = vunpack.c.l.b16 %v735
        %v896 = vunpack.c.l.b16 %v736
        %v897 = vunpack.c.l.b16 %v737
        %v898 = vunpack.c.l.b16 %v738
        %v899 = vunpack.c.l.b16 %v739
        %v900 = vunpack.c.l.b16 %v740
        %v901 = vunpack.c.l.b16 %v741
        %v902 = vunpack.c.l.b16 %v742
        %v903 = vunpack.c.l.b16 %v743
        %v904 = vunpack.c.l.b16 %v744
        %v905 = vunpack.c.l.b16 %v745
        %v906 = vunpack.c.l.b16 %v746
        %v907 = vunpack.c.l.b16 %v747
        %v908 = vunpack.c.l.b16 %v748
        %v909 = vunpack.c.l.b16 %v749
        %v910 = vunpack.c.l.b16 %v750
        %v911 = vunpack.c.l.b16 %v751
        %v912 = vunpack.c.l.b16 %v752
        %v913 = vunpack.c.l.b16 %v753
        %v914 = vunpack.c.l.b16 %v754
        %v915 = vunpack.c.l.b16 %v755
        %v916 = vunpack.c.l.b16 %v756
        %v917 = vunpack.c.l.b16 %v757
        %v918 = vunpack.c.l.b16 %v758
        %v919 = vunpack.c.l.b16 %v759
        %v920 = vunpack.c.l.b16 %v760
        %v921 = vpack.c.b16 %v842, %v841
        %v922 = vpack.c.b16 %v844, %v843
        %v923 = vpack.c.b16 %v846, %v845
        %v924 = vpack.c.b16 %v848, %v847
        %v925 = vpack.c.b16 %v850, %v849
        %v926 = vpack.c.b16 %v852, %v851
        %v927 = vpack.c.b16 %v854, %v853
        %v928 = vpack.c.b16 %v856, %v855
        %v929 = vpack.c.b16 %v858, %v857
        %v930 = vpack.c.b16 %v860, %v859
        %v931 = vpack.c.b16 %v862, %v861
        %v932 = vpack.c.b16 %v864, %v863
        %v933 = vpack.c.b16 %v866, %v865
        %v934 = vpack.c.b16 %v868, %v867
        %v935 = vpack.c.b16 %v870, %v869
        %v936 = vpack.c.b16 %v872, %v871
        %v937 = vpack.c.b16 %v874, %v873
        %v938 = vpack.c.b16 %v876, %v875
        %v939 = vpack.c.b16 %v878, %v877
        %v940 = vpack.c.b16 %v880, %v879
        %v941 = vpack.c.b16 %v882, %v881
        %v942 = vpack.c.b16 %v884, %v883
        %v943 = vpack.c.b16 %v886, %v885
        %v944 = vpack.c.b16 %v888, %v887
        %v945 = vpack.c.b16 %v890, %v889
        %v946 = vpack.c.b16 %v892, %v891
        %v947 = vpack.c.b16 %v894, %v893
        %v948 = vpack.c.b16 %v896, %v895
        %v949 = vpack.c.b16 %v898, %v897
        %v950 = vpack.c.b16 %v900, %v899
        %v951 = vpack.c.b16 %v902, %v901
        %v952 = vpack.c.b16 %v904, %v903
        %v953 = vpack.c.b16 %v906, %v905
        %v954 = vpack.c.b16 %v908, %v907
        %v955 = vpack.c.b16 %v910, %v909
        %v956 = vpack.c.b16 %v912, %v911
        %v957 = vpack.c.b16 %v914, %v913
        %v958 = vpack.c.b16 %v916, %v915
        %v959 = vpack.c.b16 %v918, %v917
        %v960 = vpack.c.b16 %v920, %v919
        %1001 = vmatprep.subr.bf16.mxu0 0
        %1002 = vmatpush1.bf16.msra.mxu0 %v921
        %1003 = vmatprep.subr.bf16.mxu0 0
        %1004 = vmatpush1.bf16.msra.mxu0 %v922
        %1005 = vmatprep.subr.bf16.mxu0 0
        %1006 = vmatpush1.bf16.msra.mxu0 %v923
        %1007 = vmatprep.subr.bf16.mxu0 0
        %1008 = vmatpush1.bf16.msra.mxu0 %v924
        %1009 = vmatprep.subr.bf16.mxu0 0
        %1010 = vmatpush1.bf16.msra.mxu0 %v925
        %1011 = vmatprep.subr.bf16.mxu0 0
        %1012 = vmatpush1.bf16.msra.mxu0 %v926
        %1013 = vmatprep.subr.bf16.mxu0 0
        %1014 = vmatpush1.bf16.msra.mxu0 %v927
        %1015 = vmatprep.subr.bf16.mxu0 0
        %1016 = vmatpush1.bf16.msra.mxu0 %v928
        %1017 = vmatprep.subr.bf16.mxu0 0
        %1018 = vmatpush1.bf16.msra.mxu0 %v929
        %1019 = vmatprep.subr.bf16.mxu0 0
        %1020 = vmatpush1.bf16.msra.mxu0 %v930
        %1021 = vmatprep.subr.bf16.mxu0 0
        %1022 = vmatpush1.bf16.msra.mxu0 %v931
        %1023 = vmatprep.subr.bf16.mxu0 0
        %1024 = vmatpush1.bf16.msra.mxu0 %v932
        %1025 = vmatprep.subr.bf16.mxu0 0
        %1026 = vmatpush1.bf16.msra.mxu0 %v933
        %1027 = vmatprep.subr.bf16.mxu0 0
        %1028 = vmatpush1.bf16.msra.mxu0 %v934
        %1029 = vmatprep.subr.bf16.mxu0 0
        %1030 = vmatpush1.bf16.msra.mxu0 %v935
        %1031 = vmatprep.subr.bf16.mxu0 0
        %1032 = vmatpush1.bf16.msra.mxu0 %v936
        %1033 = vmatprep.mubr.bf16.mxu0 %v677
        %1034 = vmatmul.mubr.bf16.gmra.mrb[0].mxu0 %v676
        %v1035 = vpop.f32.mrb[0].mxu0
        %v1036 = vadd.f32 0.0, %v1035
        %v1037 = vpop.f32.mrb[0].mxu0
        %v1038 = vpop.f32.mrb[0].mxu0
        %v1039 = vadd.f32 0.0, %v1038
        %v1040 = vpop.f32.mrb[0].mxu0
        %1041 = vdwg.mxu0
        %1042 = vmatprep.subr.bf16.mxu0 0
        %1043 = vmatpush1.bf16.msra.mxu0 %v937
        %1044 = vmatprep.subr.bf16.mxu0 0
        %1045 = vmatpush1.bf16.msra.mxu0 %v938
        %1046 = vmatprep.subr.bf16.mxu0 0
        %1047 = vmatpush1.bf16.msra.mxu0 %v939
        %1048 = vmatprep.subr.bf16.mxu0 0
        %1049 = vmatpush1.bf16.msra.mxu0 %v940
        %1050 = vmatprep.subr.bf16.mxu0 0
        %1051 = vmatpush1.bf16.msra.mxu0 %v941
        %1052 = vmatprep.subr.bf16.mxu0 0
        %1053 = vmatpush1.bf16.msra.mxu0 %v942
        %1054 = vmatprep.subr.bf16.mxu0 0
        %1055 = vmatpush1.bf16.msra.mxu0 %v943
        %1056 = vmatprep.subr.bf16.mxu0 0
        %1057 = vmatpush1.bf16.msra.mxu0 %v944
        %1058 = vmatprep.subr.bf16.mxu0 0
        %1059 = vmatpush1.bf16.msra.mxu0 %v945
        %1060 = vmatprep.subr.bf16.mxu0 0
        %1061 = vmatpush1.bf16.msra.mxu0 %v946
        %1062 = vmatprep.subr.bf16.mxu0 0
        %1063 = vmatpush1.bf16.msra.mxu0 %v947
        %1064 = vmatprep.subr.bf16.mxu0 0
        %1065 = vmatpush1.bf16.msra.mxu0 %v948
        %1066 = vmatprep.subr.bf16.mxu0 0
        %1067 = vmatpush1.bf16.msra.mxu0 %v949
        %1068 = vmatprep.subr.bf16.mxu0 0
        %1069 = vmatpush1.bf16.msra.mxu0 %v950
        %1070 = vmatprep.subr.bf16.mxu0 0
        %1071 = vmatpush1.bf16.msra.mxu0 %v951
        %1072 = vmatprep.subr.bf16.mxu0 0
        %1073 = vmatpush1.bf16.msra.mxu0 %v952
        %1074 = vmatprep.mubr.bf16.mxu0 %v679
        %1075 = vmatmul.mubr.bf16.gmra.mrb[0].mxu0 %v678
        %v1076 = vpop.f32.mrb[0].mxu0
        %v1077 = vadd.f32 %v1036, %v1076
        %v1078 = vpop.f32.mrb[0].mxu0
        %v1079 = vpop.f32.mrb[0].mxu0
        %v1080 = vadd.f32 %v1039, %v1079
        %v1081 = vpop.f32.mrb[0].mxu0
        %1082 = vdwg.mxu0
        %1083 = vmatprep.subr.bf16.mxu0 0
        %1084 = vmatpush1.bf16.msra.mxu0 %v953
        %1085 = vmatprep.subr.bf16.mxu0 0
        %1086 = vmatpush1.bf16.msra.mxu0 %v954
        %1087 = vmatprep.subr.bf16.mxu0 0
        %1088 = vmatpush1.bf16.msra.mxu0 %v955
        %1089 = vmatprep.subr.bf16.mxu0 0
        %1090 = vmatpush1.bf16.msra.mxu0 %v956
        %1091 = vmatprep.subr.bf16.mxu0 0
        %1092 = vmatpush1.bf16.msra.mxu0 %v957
        %1093 = vmatprep.subr.bf16.mxu0 0
        %1094 = vmatpush1.bf16.msra.mxu0 %v958
        %1095 = vmatprep.subr.bf16.mxu0 0
        %1096 = vmatpush1.bf16.msra.mxu0 %v959
        %1097 = vmatprep.subr.bf16.mxu0 0
        %1098 = vmatpush1.bf16.msra.mxu0 %v960
        %1099 = vmatprep.subr.bf16.mxu0 0
        %1100 = vmatpush1.bf16.msra.mxu0 0
        %1101 = vmatprep.subr.bf16.mxu0 0
        %1102 = vmatpush1.bf16.msra.mxu0 0
        %1103 = vmatprep.subr.bf16.mxu0 0
        %1104 = vmatpush1.bf16.msra.mxu0 0
        %1105 = vmatprep.subr.bf16.mxu0 0
        %1106 = vmatpush1.bf16.msra.mxu0 0
        %1107 = vmatprep.subr.bf16.mxu0 0
        %1108 = vmatpush1.bf16.msra.mxu0 0
        %1109 = vmatprep.subr.bf16.mxu0 0
        %1110 = vmatpush1.bf16.msra.mxu0 0
        %1111 = vmatprep.subr.bf16.mxu0 0
        %1112 = vmatpush1.bf16.msra.mxu0 0
        %1113 = vmatprep.subr.bf16.mxu0 0
        %1114 = vmatpush1.bf16.msra.mxu0 0
        %1115 = vmatprep.mubr.bf16.mxu0 0
        %1116 = vmatmul.mubr.bf16.gmra.mrb[0].mxu0 %v680
        %v1117 = vpop.f32.mrb[0].mxu0
        %v1118 = vadd.f32 %v1077, %v1117
        %v1119 = vpop.f32.mrb[0].mxu0
        %v1120 = vpop.f32.mrb[0].mxu0
        %v1121 = vadd.f32 %v1080, %v1120
        %v1122 = vpop.f32.mrb[0].mxu0
        %1123 = vdwg.mxu0
        %v1124 = vld [vmem:[%s455] sm:$0x1]
        %v1126 = vlaneseq
        %v1127 = vshrl.u32 %v1126, 7
        %v1128 = vsub.s32 0, %v1127
        %v1129 = vrot.slane %v1124, %v1128
        %v1131 = vmul.f32 %v1118, %v1129
        %v1132 = vmul.f32 %v1121, %v1129
        %v1133 = vld [vmem:[%s464] sm:$0x1]
        %v1135 = vlaneseq
        %v1136 = vshrl.u32 %v1135, 7
        %v1137 = vsub.s32 0, %v1136
        %v1138 = vrot.slane %v1133, %v1137
        %v1140 = vadd.f32 %v1131, %v1138
        %v1141 = vadd.f32 %v1132, %v1138
        %v1142 = vmax.f32 %v1140, 0.0
        %v1143 = vmax.f32 %v1141, 0.0
        %v1144 = vpack.c.bf16 %v1143, %v1142
        %v1146 = vunpack.c.l.b16 %v1144
        %v1147 = vunpack.c.h.b16 %v1144
        %v1148 = vpack.c.b16 %v1146, %v1146
        %v1149 = vpack.c.b16 %v1147, %v1147
        %1152 = vst [vmem:[#allocation2 + $0x4] sm:$0xf] %v1148
        %1153 = vst [vmem:[#allocation2 + $0x8] sm:$0xf] %v1149
        %v1154 = vld [vmem:[#allocation2] sm:$0x8]
        %v1155 = vld [vmem:[#allocation2 + $0x4] sm:$0xf]
        %v1156 = vld [vmem:[#allocation2 + $0x8] sm:$0x7]
        %v1160 = vunpack.c.l.b16 %v1154
        %v1161 = vunpack.c.l.b16 %v1155
        %v1162 = vunpack.c.l.b16 %v1156
        %v1163 = vpack.c.b16 %v1161, %v1160
        %v1164 = vpack.c.b16 %v1162, %v1162
        %v1165 = vrot.slane %v1163, 3
        %v1166 = vrot.slane %v1164, 3
        %v1167 = vsel %vm587, %v1165, %v1166
        %1169 = vst [vmem:[#allocation3] sm:$0xff] %v1167
        %v1170 = vld [vmem:[#allocation2] sm:$0x8]
        %v1171 = vld [vmem:[#allocation2 + $0x4] sm:$0xf]
        %v1172 = vld [vmem:[#allocation2 + $0x8] sm:$0xf]
        %v1176 = vunpack.c.l.b16 %v1170
        %v1177 = vunpack.c.l.b16 %v1171
        %v1178 = vunpack.c.l.b16 %v1172
        %v1179 = vpack.c.b16 %v1177, %v1176
        %v1180 = vpack.c.b16 %v1178, %v1178
        %v1182 = vshrl.u32 %v1179, 16
        %v1184 = vrot.slane %v1182, 3
        %v1185 = vshll.u32 %v1179, 16
        %v1187 = vrot.slane %v1185, 4
        %v1188 = vor.u32 %v1184, %v1187
        %v1190 = vshrl.u32 %v1180, 16
        %v1192 = vrot.slane %v1190, 3
        %v1193 = vshll.u32 %v1180, 16
        %v1195 = vrot.slane %v1193, 4
        %v1196 = vor.u32 %v1192, %v1195
        %v1197 = vsel %vm604, %v1188, %v1196
        %1199 = vst [vmem:[#allocation3 + $0x8] sm:$0xff] %v1197
        %v1200 = vld [vmem:[#allocation2 + $0x4] sm:$0xf]
        %v1201 = vld [vmem:[#allocation2 + $0x8] sm:$0xf]
        %v1204 = vunpack.c.l.b16 %v1200
        %v1205 = vunpack.c.l.b16 %v1201
        %v1206 = vpack.c.b16 %v1205, %v1204
        %1208 = vst [vmem:[#allocation3 + $0x10] sm:$0xff] %v1206
        %v1209 = vld [vmem:[#allocation2 + $0x4] sm:$0xf]
        %v1210 = vld [vmem:[#allocation2 + $0x8] sm:$0xf]
        %v1211 = vld [vmem:[#allocation2 + $0xc] sm:$0x1]
        %v1215 = vunpack.c.l.b16 %v1209
        %v1216 = vunpack.c.l.b16 %v1210
        %v1217 = vunpack.c.l.b16 %v1211
        %v1218 = vpack.c.b16 %v1216, %v1215
        %v1219 = vpack.c.b16 %v1217, %v1217
        %v1221 = vshrl.u32 %v1218, 16
        %v1223 = vshll.u32 %v1218, 16
        %v1225 = vrot.slane %v1223, 1
        %v1226 = vor.u32 %v1221, %v1225
        %v1228 = vshll.u32 %v1219, 16
        %v1230 = vrot.slane %v1228, 1
        %v1231 = vsel %vm644, %v1226, %v1230
        %1233 = vst [vmem:[#allocation3 + $0x18] sm:$0xff] %v1231
        %v1234 = vld [vmem:[#allocation2 + $0x4] sm:$0xe]
        %v1235 = vld [vmem:[#allocation2 + $0x8] sm:$0xf]
        %v1236 = vld [vmem:[#allocation2 + $0xc] sm:$0x1]
        %v1240 = vunpack.c.l.b16 %v1234
        %v1241 = vunpack.c.l.b16 %v1235
        %v1242 = vunpack.c.l.b16 %v1236
        %v1243 = vpack.c.b16 %v1241, %v1240
        %v1244 = vpack.c.b16 %v1242, %v1242
        %v1245 = vrot.slane %v1243, 1
        %v1246 = vrot.slane %v1244, 1
        %v1247 = vsel %vm670, %v1245, %v1246
        %1249 = vst [vmem:[#allocation3 + $0x20] sm:$0xff] %v1247
        %v1250 = vld [vmem:[#allocation3] sm:$0xff]
        %v1251 = vld [vmem:[#allocation3 + $0x8] sm:$0xff]
        %v1252 = vld [vmem:[#allocation3 + $0x10] sm:$0xff]
        %v1253 = vld [vmem:[#allocation3 + $0x18] sm:$0xff]
        %v1254 = vld [vmem:[#allocation3 + $0x20] sm:$0xff]
        %s1255 = scalar_lea.vmem %s446, 320 [#allocation13]
        %v1256 = vld [vmem:[%s1255] sm:$0xf]
        %v1257 = vld [vmem:[%s1255 + $0x4] sm:$0xf]
        %v1258 = vld [vmem:[%s1255 + $0x8] sm:$0xf]
        %v1259 = vld [vmem:[%s1255 + $0xc] sm:$0xf]
        %v1260 = vld [vmem:[%s1255 + $0x10] sm:$0xf]
        %v1261 = vld [vmem:[%s1255 + $0x14] sm:$0xf]
        %v1262 = vld [vmem:[%s1255 + $0x18] sm:$0xf]
        %v1263 = vld [vmem:[%s1255 + $0x1c] sm:$0xf]
        %v1264 = vld [vmem:[%s1255 + $0x20] sm:$0xf]
        %v1265 = vld [vmem:[%s1255 + $0x24] sm:$0xf]
        %v1266 = vld [vmem:[%s1255 + $0x28] sm:$0xf]
        %v1267 = vld [vmem:[%s1255 + $0x2c] sm:$0xf]
        %v1268 = vld [vmem:[%s1255 + $0x30] sm:$0xf]
        %v1269 = vld [vmem:[%s1255 + $0x34] sm:$0xf]
        %v1270 = vld [vmem:[%s1255 + $0x38] sm:$0xf]
        %v1271 = vld [vmem:[%s1255 + $0x3c] sm:$0xf]
        %v1272 = vld [vmem:[%s1255 + $0x40] sm:$0xf]
        %v1273 = vld [vmem:[%s1255 + $0x44] sm:$0xf]
        %v1274 = vld [vmem:[%s1255 + $0x48] sm:$0xf]
        %v1275 = vld [vmem:[%s1255 + $0x4c] sm:$0xf]
        %v1276 = vld [vmem:[%s1255 + $0x50] sm:$0xf]
        %v1277 = vld [vmem:[%s1255 + $0x54] sm:$0xf]
        %v1278 = vld [vmem:[%s1255 + $0x58] sm:$0xf]
        %v1279 = vld [vmem:[%s1255 + $0x5c] sm:$0xf]
        %v1280 = vld [vmem:[%s1255 + $0x60] sm:$0xf]
        %v1281 = vld [vmem:[%s1255 + $0x64] sm:$0xf]
        %v1282 = vld [vmem:[%s1255 + $0x68] sm:$0xf]
        %v1283 = vld [vmem:[%s1255 + $0x6c] sm:$0xf]
        %v1284 = vld [vmem:[%s1255 + $0x70] sm:$0xf]
        %v1285 = vld [vmem:[%s1255 + $0x74] sm:$0xf]
        %v1286 = vld [vmem:[%s1255 + $0x78] sm:$0xf]
        %v1287 = vld [vmem:[%s1255 + $0x7c] sm:$0xf]
        %v1288 = vld [vmem:[%s1255 + $0x80] sm:$0xf]
        %v1289 = vld [vmem:[%s1255 + $0x84] sm:$0xf]
        %v1290 = vld [vmem:[%s1255 + $0x88] sm:$0xf]
        %v1291 = vld [vmem:[%s1255 + $0x8c] sm:$0xf]
        %v1292 = vld [vmem:[%s1255 + $0x90] sm:$0xf]
        %v1293 = vld [vmem:[%s1255 + $0x94] sm:$0xf]
        %v1294 = vld [vmem:[%s1255 + $0x98] sm:$0xf]
        %v1295 = vld [vmem:[%s1255 + $0x9c] sm:$0xf]
        %v1296 = vld [vmem:[%s1255 + $0xa0] sm:$0xf]
        %v1297 = vld [vmem:[%s1255 + $0xa4] sm:$0xf]
        %v1298 = vld [vmem:[%s1255 + $0xa8] sm:$0xf]
        %v1299 = vld [vmem:[%s1255 + $0xac] sm:$0xf]
        %v1300 = vld [vmem:[%s1255 + $0xb0] sm:$0xf]
        %v1301 = vld [vmem:[%s1255 + $0xb4] sm:$0xf]
        %v1302 = vld [vmem:[%s1255 + $0xb8] sm:$0xf]
        %v1303 = vld [vmem:[%s1255 + $0xbc] sm:$0xf]
        %v1304 = vld [vmem:[%s1255 + $0xc0] sm:$0xf]
        %v1305 = vld [vmem:[%s1255 + $0xc4] sm:$0xf]
        %v1306 = vld [vmem:[%s1255 + $0xc8] sm:$0xf]
        %v1307 = vld [vmem:[%s1255 + $0xcc] sm:$0xf]
        %v1308 = vld [vmem:[%s1255 + $0xd0] sm:$0xf]
        %v1309 = vld [vmem:[%s1255 + $0xd4] sm:$0xf]
        %v1310 = vld [vmem:[%s1255 + $0xd8] sm:$0xf]
        %v1311 = vld [vmem:[%s1255 + $0xdc] sm:$0xf]
        %v1312 = vld [vmem:[%s1255 + $0xe0] sm:$0xf]
        %v1313 = vld [vmem:[%s1255 + $0xe4] sm:$0xf]
        %v1314 = vld [vmem:[%s1255 + $0xe8] sm:$0xf]
        %v1315 = vld [vmem:[%s1255 + $0xec] sm:$0xf]
        %v1316 = vld [vmem:[%s1255 + $0xf0] sm:$0xf]
        %v1317 = vld [vmem:[%s1255 + $0xf4] sm:$0xf]
        %v1318 = vld [vmem:[%s1255 + $0xf8] sm:$0xf]
        %v1319 = vld [vmem:[%s1255 + $0xfc] sm:$0xf]
        %v1320 = vld [vmem:[%s1255 + $0x100] sm:$0xf]
        %v1321 = vld [vmem:[%s1255 + $0x104] sm:$0xf]
        %v1322 = vld [vmem:[%s1255 + $0x108] sm:$0xf]
        %v1323 = vld [vmem:[%s1255 + $0x10c] sm:$0xf]
        %v1324 = vld [vmem:[%s1255 + $0x110] sm:$0xf]
        %v1325 = vld [vmem:[%s1255 + $0x114] sm:$0xf]
        %v1326 = vld [vmem:[%s1255 + $0x118] sm:$0xf]
        %v1327 = vld [vmem:[%s1255 + $0x11c] sm:$0xf]
        %v1328 = vld [vmem:[%s1255 + $0x120] sm:$0xf]
        %v1329 = vld [vmem:[%s1255 + $0x124] sm:$0xf]
        %v1330 = vld [vmem:[%s1255 + $0x128] sm:$0xf]
        %v1331 = vld [vmem:[%s1255 + $0x12c] sm:$0xf]
        %v1332 = vld [vmem:[%s1255 + $0x130] sm:$0xf]
        %v1333 = vld [vmem:[%s1255 + $0x134] sm:$0xf]
        %v1334 = vld [vmem:[%s1255 + $0x138] sm:$0xf]
        %v1335 = vld [vmem:[%s1255 + $0x13c] sm:$0xf]
        %v1416 = vunpack.c.l.b16 %v1256
        %v1417 = vunpack.c.l.b16 %v1257
        %v1418 = vunpack.c.l.b16 %v1258
        %v1419 = vunpack.c.l.b16 %v1259
        %v1420 = vunpack.c.l.b16 %v1260
        %v1421 = vunpack.c.l.b16 %v1261
        %v1422 = vunpack.c.l.b16 %v1262
        %v1423 = vunpack.c.l.b16 %v1263
        %v1424 = vunpack.c.l.b16 %v1264
        %v1425 = vunpack.c.l.b16 %v1265
        %v1426 = vunpack.c.l.b16 %v1266
        %v1427 = vunpack.c.l.b16 %v1267
        %v1428 = vunpack.c.l.b16 %v1268
        %v1429 = vunpack.c.l.b16 %v1269
        %v1430 = vunpack.c.l.b16 %v1270
        %v1431 = vunpack.c.l.b16 %v1271
        %v1432 = vunpack.c.l.b16 %v1272
        %v1433 = vunpack.c.l.b16 %v1273
        %v1434 = vunpack.c.l.b16 %v1274
        %v1435 = vunpack.c.l.b16 %v1275
        %v1436 = vunpack.c.l.b16 %v1276
        %v1437 = vunpack.c.l.b16 %v1277
        %v1438 = vunpack.c.l.b16 %v1278
        %v1439 = vunpack.c.l.b16 %v1279
        %v1440 = vunpack.c.l.b16 %v1280
        %v1441 = vunpack.c.l.b16 %v1281
        %v1442 = vunpack.c.l.b16 %v1282
        %v1443 = vunpack.c.l.b16 %v1283
        %v1444 = vunpack.c.l.b16 %v1284
        %v1445 = vunpack.c.l.b16 %v1285
        %v1446 = vunpack.c.l.b16 %v1286
        %v1447 = vunpack.c.l.b16 %v1287
        %v1448 = vunpack.c.l.b16 %v1288
        %v1449 = vunpack.c.l.b16 %v1289
        %v1450 = vunpack.c.l.b16 %v1290
        %v1451 = vunpack.c.l.b16 %v1291
        %v1452 = vunpack.c.l.b16 %v1292
        %v1453 = vunpack.c.l.b16 %v1293
        %v1454 = vunpack.c.l.b16 %v1294
        %v1455 = vunpack.c.l.b16 %v1295
        %v1456 = vunpack.c.l.b16 %v1296
        %v1457 = vunpack.c.l.b16 %v1297
        %v1458 = vunpack.c.l.b16 %v1298
        %v1459 = vunpack.c.l.b16 %v1299
        %v1460 = vunpack.c.l.b16 %v1300
        %v1461 = vunpack.c.l.b16 %v1301
        %v1462 = vunpack.c.l.b16 %v1302
        %v1463 = vunpack.c.l.b16 %v1303
        %v1464 = vunpack.c.l.b16 %v1304
        %v1465 = vunpack.c.l.b16 %v1305
        %v1466 = vunpack.c.l.b16 %v1306
        %v1467 = vunpack.c.l.b16 %v1307
        %v1468 = vunpack.c.l.b16 %v1308
        %v1469 = vunpack.c.l.b16 %v1309
        %v1470 = vunpack.c.l.b16 %v1310
        %v1471 = vunpack.c.l.b16 %v1311
        %v1472 = vunpack.c.l.b16 %v1312
        %v1473 = vunpack.c.l.b16 %v1313
        %v1474 = vunpack.c.l.b16 %v1314
        %v1475 = vunpack.c.l.b16 %v1315
        %v1476 = vunpack.c.l.b16 %v1316
        %v1477 = vunpack.c.l.b16 %v1317
        %v1478 = vunpack.c.l.b16 %v1318
        %v1479 = vunpack.c.l.b16 %v1319
        %v1480 = vunpack.c.l.b16 %v1320
        %v1481 = vunpack.c.l.b16 %v1321
        %v1482 = vunpack.c.l.b16 %v1322
        %v1483 = vunpack.c.l.b16 %v1323
        %v1484 = vunpack.c.l.b16 %v1324
        %v1485 = vunpack.c.l.b16 %v1325
        %v1486 = vunpack.c.l.b16 %v1326
        %v1487 = vunpack.c.l.b16 %v1327
        %v1488 = vunpack.c.l.b16 %v1328
        %v1489 = vunpack.c.l.b16 %v1329
        %v1490 = vunpack.c.l.b16 %v1330
        %v1491 = vunpack.c.l.b16 %v1331
        %v1492 = vunpack.c.l.b16 %v1332
        %v1493 = vunpack.c.l.b16 %v1333
        %v1494 = vunpack.c.l.b16 %v1334
        %v1495 = vunpack.c.l.b16 %v1335
        %v1496 = vpack.c.b16 %v1417, %v1416
        %v1497 = vpack.c.b16 %v1419, %v1418
        %v1498 = vpack.c.b16 %v1421, %v1420
        %v1499 = vpack.c.b16 %v1423, %v1422
        %v1500 = vpack.c.b16 %v1425, %v1424
        %v1501 = vpack.c.b16 %v1427, %v1426
        %v1502 = vpack.c.b16 %v1429, %v1428
        %v1503 = vpack.c.b16 %v1431, %v1430
        %v1504 = vpack.c.b16 %v1433, %v1432
        %v1505 = vpack.c.b16 %v1435, %v1434
        %v1506 = vpack.c.b16 %v1437, %v1436
        %v1507 = vpack.c.b16 %v1439, %v1438
        %v1508 = vpack.c.b16 %v1441, %v1440
        %v1509 = vpack.c.b16 %v1443, %v1442
        %v1510 = vpack.c.b16 %v1445, %v1444
        %v1511 = vpack.c.b16 %v1447, %v1446
        %v1512 = vpack.c.b16 %v1449, %v1448
        %v1513 = vpack.c.b16 %v1451, %v1450
        %v1514 = vpack.c.b16 %v1453, %v1452
        %v1515 = vpack.c.b16 %v1455, %v1454
        %v1516 = vpack.c.b16 %v1457, %v1456
        %v1517 = vpack.c.b16 %v1459, %v1458
        %v1518 = vpack.c.b16 %v1461, %v1460
        %v1519 = vpack.c.b16 %v1463, %v1462
        %v1520 = vpack.c.b16 %v1465, %v1464
        %v1521 = vpack.c.b16 %v1467, %v1466
        %v1522 = vpack.c.b16 %v1469, %v1468
        %v1523 = vpack.c.b16 %v1471, %v1470
        %v1524 = vpack.c.b16 %v1473, %v1472
        %v1525 = vpack.c.b16 %v1475, %v1474
        %v1526 = vpack.c.b16 %v1477, %v1476
        %v1527 = vpack.c.b16 %v1479, %v1478
        %v1528 = vpack.c.b16 %v1481, %v1480
        %v1529 = vpack.c.b16 %v1483, %v1482
        %v1530 = vpack.c.b16 %v1485, %v1484
        %v1531 = vpack.c.b16 %v1487, %v1486
        %v1532 = vpack.c.b16 %v1489, %v1488
        %v1533 = vpack.c.b16 %v1491, %v1490
        %v1534 = vpack.c.b16 %v1493, %v1492
        %v1535 = vpack.c.b16 %v1495, %v1494
        %1576 = vmatprep.subr.bf16.mxu0 0
        %1577 = vmatpush1.bf16.msra.mxu0 %v1496
        %1578 = vmatprep.subr.bf16.mxu0 0
        %1579 = vmatpush1.bf16.msra.mxu0 %v1497
        %1580 = vmatprep.subr.bf16.mxu0 0
        %1581 = vmatpush1.bf16.msra.mxu0 %v1498
        %1582 = vmatprep.subr.bf16.mxu0 0
        %1583 = vmatpush1.bf16.msra.mxu0 %v1499
        %1584 = vmatprep.subr.bf16.mxu0 0
        %1585 = vmatpush1.bf16.msra.mxu0 %v1500
        %1586 = vmatprep.subr.bf16.mxu0 0
        %1587 = vmatpush1.bf16.msra.mxu0 %v1501
        %1588 = vmatprep.subr.bf16.mxu0 0
        %1589 = vmatpush1.bf16.msra.mxu0 %v1502
        %1590 = vmatprep.subr.bf16.mxu0 0
        %1591 = vmatpush1.bf16.msra.mxu0 %v1503
        %1592 = vmatprep.subr.bf16.mxu0 0
        %1593 = vmatpush1.bf16.msra.mxu0 %v1504
        %1594 = vmatprep.subr.bf16.mxu0 0
        %1595 = vmatpush1.bf16.msra.mxu0 %v1505
        %1596 = vmatprep.subr.bf16.mxu0 0
        %1597 = vmatpush1.bf16.msra.mxu0 %v1506
        %1598 = vmatprep.subr.bf16.mxu0 0
        %1599 = vmatpush1.bf16.msra.mxu0 %v1507
        %1600 = vmatprep.subr.bf16.mxu0 0
        %1601 = vmatpush1.bf16.msra.mxu0 %v1508
        %1602 = vmatprep.subr.bf16.mxu0 0
        %1603 = vmatpush1.bf16.msra.mxu0 %v1509
        %1604 = vmatprep.subr.bf16.mxu0 0
        %1605 = vmatpush1.bf16.msra.mxu0 %v1510
        %1606 = vmatprep.subr.bf16.mxu0 0
        %1607 = vmatpush1.bf16.msra.mxu0 %v1511
        %1608 = vmatprep.mubr.bf16.mxu0 %v1251
        %1609 = vmatmul.mubr.bf16.gmra.mrb[0].mxu0 %v1250
        %v1610 = vpop.f32.mrb[0].mxu0
        %v1611 = vadd.f32 0.0, %v1610
        %v1612 = vpop.f32.mrb[0].mxu0
        %v1613 = vpop.f32.mrb[0].mxu0
        %v1614 = vadd.f32 0.0, %v1613
        %v1615 = vpop.f32.mrb[0].mxu0
        %1616 = vdwg.mxu0
        %1617 = vmatprep.subr.bf16.mxu0 0
        %1618 = vmatpush1.bf16.msra.mxu0 %v1512
        %1619 = vmatprep.subr.bf16.mxu0 0
        %1620 = vmatpush1.bf16.msra.mxu0 %v1513
        %1621 = vmatprep.subr.bf16.mxu0 0
        %1622 = vmatpush1.bf16.msra.mxu0 %v1514
        %1623 = vmatprep.subr.bf16.mxu0 0
        %1624 = vmatpush1.bf16.msra.mxu0 %v1515
        %1625 = vmatprep.subr.bf16.mxu0 0
        %1626 = vmatpush1.bf16.msra.mxu0 %v1516
        %1627 = vmatprep.subr.bf16.mxu0 0
        %1628 = vmatpush1.bf16.msra.mxu0 %v1517
        %1629 = vmatprep.subr.bf16.mxu0 0
        %1630 = vmatpush1.bf16.msra.mxu0 %v1518
        %1631 = vmatprep.subr.bf16.mxu0 0
        %1632 = vmatpush1.bf16.msra.mxu0 %v1519
        %1633 = vmatprep.subr.bf16.mxu0 0
        %1634 = vmatpush1.bf16.msra.mxu0 %v1520
        %1635 = vmatprep.subr.bf16.mxu0 0
        %1636 = vmatpush1.bf16.msra.mxu0 %v1521
        %1637 = vmatprep.subr.bf16.mxu0 0
        %1638 = vmatpush1.bf16.msra.mxu0 %v1522
        %1639 = vmatprep.subr.bf16.mxu0 0
        %1640 = vmatpush1.bf16.msra.mxu0 %v1523
        %1641 = vmatprep.subr.bf16.mxu0 0
        %1642 = vmatpush1.bf16.msra.mxu0 %v1524
        %1643 = vmatprep.subr.bf16.mxu0 0
        %1644 = vmatpush1.bf16.msra.mxu0 %v1525
        %1645 = vmatprep.subr.bf16.mxu0 0
        %1646 = vmatpush1.bf16.msra.mxu0 %v1526
        %1647 = vmatprep.subr.bf16.mxu0 0
        %1648 = vmatpush1.bf16.msra.mxu0 %v1527
        %1649 = vmatprep.mubr.bf16.mxu0 %v1253
        %1650 = vmatmul.mubr.bf16.gmra.mrb[0].mxu0 %v1252
        %v1651 = vpop.f32.mrb[0].mxu0
        %v1652 = vadd.f32 %v1611, %v1651
        %v1653 = vpop.f32.mrb[0].mxu0
        %v1654 = vpop.f32.mrb[0].mxu0
        %v1655 = vadd.f32 %v1614, %v1654
        %v1656 = vpop.f32.mrb[0].mxu0
        %1657 = vdwg.mxu0
        %1658 = vmatprep.subr.bf16.mxu0 0
        %1659 = vmatpush1.bf16.msra.mxu0 %v1528
        %1660 = vmatprep.subr.bf16.mxu0 0
        %1661 = vmatpush1.bf16.msra.mxu0 %v1529
        %1662 = vmatprep.subr.bf16.mxu0 0
        %1663 = vmatpush1.bf16.msra.mxu0 %v1530
        %1664 = vmatprep.subr.bf16.mxu0 0
        %1665 = vmatpush1.bf16.msra.mxu0 %v1531
        %1666 = vmatprep.subr.bf16.mxu0 0
        %1667 = vmatpush1.bf16.msra.mxu0 %v1532
        %1668 = vmatprep.subr.bf16.mxu0 0
        %1669 = vmatpush1.bf16.msra.mxu0 %v1533
        %1670 = vmatprep.subr.bf16.mxu0 0
        %1671 = vmatpush1.bf16.msra.mxu0 %v1534
        %1672 = vmatprep.subr.bf16.mxu0 0
        %1673 = vmatpush1.bf16.msra.mxu0 %v1535
        %1674 = vmatprep.subr.bf16.mxu0 0
        %1675 = vmatpush1.bf16.msra.mxu0 0
        %1676 = vmatprep.subr.bf16.mxu0 0
        %1677 = vmatpush1.bf16.msra.mxu0 0
        %1678 = vmatprep.subr.bf16.mxu0 0
        %1679 = vmatpush1.bf16.msra.mxu0 0
        %1680 = vmatprep.subr.bf16.mxu0 0
        %1681 = vmatpush1.bf16.msra.mxu0 0
        %1682 = vmatprep.subr.bf16.mxu0 0
        %1683 = vmatpush1.bf16.msra.mxu0 0
        %1684 = vmatprep.subr.bf16.mxu0 0
        %1685 = vmatpush1.bf16.msra.mxu0 0
        %1686 = vmatprep.subr.bf16.mxu0 0
        %1687 = vmatpush1.bf16.msra.mxu0 0
        %1688 = vmatprep.subr.bf16.mxu0 0
        %1689 = vmatpush1.bf16.msra.mxu0 0
        %1690 = vmatprep.mubr.bf16.mxu0 0
        %1691 = vmatmul.mubr.bf16.gmra.mrb[0].mxu0 %v1254
        %v1692 = vpop.f32.mrb[0].mxu0
        %v1693 = vadd.f32 %v1652, %v1692
        %v1694 = vpop.f32.mrb[0].mxu0
        %v1695 = vpop.f32.mrb[0].mxu0
        %v1696 = vadd.f32 %v1655, %v1695
        %v1697 = vpop.f32.mrb[0].mxu0
        %1698 = vdwg.mxu0
        %s1699 = scalar_lea.vmem %s455, 1 [#allocation15]
        %v1700 = vld [vmem:[%s1699] sm:$0x1]
        %v1702 = vlaneseq
        %v1703 = vshrl.u32 %v1702, 7
        %v1704 = vsub.s32 0, %v1703
        %v1705 = vrot.slane %v1700, %v1704
        %v1707 = vmul.f32 %v1693, %v1705
        %v1708 = vmul.f32 %v1696, %v1705
        %s1709 = scalar_lea.vmem %s464, 1 [#allocation16]
        %v1710 = vld [vmem:[%s1709] sm:$0x1]
        %v1712 = vlaneseq
        %v1713 = vshrl.u32 %v1712, 7
        %v1714 = vsub.s32 0, %v1713
        %v1715 = vrot.slane %v1710, %v1714
        %v1717 = vadd.f32 %v1707, %v1715
        %v1718 = vadd.f32 %v1708, %v1715
        %v1719 = vmax.f32 %v1717, 0.0
        %v1720 = vmax.f32 %v1718, 0.0
        %v1721 = vpack.c.bf16 %v1720, %v1719
        %v1723 = vunpack.c.l.b16 %v1721
        %v1724 = vunpack.c.h.b16 %v1721
        %v1725 = vpack.c.b16 %v1723, %v1723
        %v1726 = vpack.c.b16 %v1724, %v1724
        %1729 = vst [vmem:[#allocation2 + $0x4] sm:$0xf] %v1725
        %1730 = vst [vmem:[#allocation2 + $0x8] sm:$0xf] %v1726
        %v1731 = vld [vmem:[#allocation2] sm:$0x8]
        %v1732 = vld [vmem:[#allocation2 + $0x4] sm:$0xf]
        %v1733 = vld [vmem:[#allocation2 + $0x8] sm:$0x7]
        %v1737 = vunpack.c.l.b16 %v1731
        %v1738 = vunpack.c.l.b16 %v1732
        %v1739 = vunpack.c.l.b16 %v1733
        %v1740 = vpack.c.b16 %v1738, %v1737
        %v1741 = vpack.c.b16 %v1739, %v1739
        %v1742 = vrot.slane %v1740, 3
        %v1743 = vrot.slane %v1741, 3
        %v1744 = vsel %vm587, %v1742, %v1743
        %1746 = vst [vmem:[#allocation3] sm:$0xff] %v1744
        %v1747 = vld [vmem:[#allocation2] sm:$0x8]
        %v1748 = vld [vmem:[#allocation2 + $0x4] sm:$0xf]
        %v1749 = vld [vmem:[#allocation2 + $0x8] sm:$0xf]
        %v1753 = vunpack.c.l.b16 %v1747
        %v1754 = vunpack.c.l.b16 %v1748
        %v1755 = vunpack.c.l.b16 %v1749
        %v1756 = vpack.c.b16 %v1754, %v1753
        %v1757 = vpack.c.b16 %v1755, %v1755
        %v1759 = vshrl.u32 %v1756, 16
        %v1761 = vrot.slane %v1759, 3
        %v1762 = vshll.u32 %v1756, 16
        %v1764 = vrot.slane %v1762, 4
        %v1765 = vor.u32 %v1761, %v1764
        %v1767 = vshrl.u32 %v1757, 16
        %v1769 = vrot.slane %v1767, 3
        %v1770 = vshll.u32 %v1757, 16
        %v1772 = vrot.slane %v1770, 4
        %v1773 = vor.u32 %v1769, %v1772
        %v1774 = vsel %vm604, %v1765, %v1773
        %1776 = vst [vmem:[#allocation3 + $0x8] sm:$0xff] %v1774
        %v1777 = vld [vmem:[#allocation2 + $0x4] sm:$0xf]
        %v1778 = vld [vmem:[#allocation2 + $0x8] sm:$0xf]
        %v1781 = vunpack.c.l.b16 %v1777
        %v1782 = vunpack.c.l.b16 %v1778
        %v1783 = vpack.c.b16 %v1782, %v1781
        %1785 = vst [vmem:[#allocation3 + $0x10] sm:$0xff] %v1783
        %v1786 = vld [vmem:[#allocation2 + $0x4] sm:$0xf]
        %v1787 = vld [vmem:[#allocation2 + $0x8] sm:$0xf]
        %v1788 = vld [vmem:[#allocation2 + $0xc] sm:$0x1]
        %v1792 = vunpack.c.l.b16 %v1786
        %v1793 = vunpack.c.l.b16 %v1787
        %v1794 = vunpack.c.l.b16 %v1788
        %v1795 = vpack.c.b16 %v1793, %v1792
        %v1796 = vpack.c.b16 %v1794, %v1794
        %v1798 = vshrl.u32 %v1795, 16
        %v1800 = vshll.u32 %v1795, 16
        %v1802 = vrot.slane %v1800, 1
        %v1803 = vor.u32 %v1798, %v1802
        %v1805 = vshll.u32 %v1796, 16
        %v1807 = vrot.slane %v1805, 1
        %v1808 = vsel %vm644, %v1803, %v1807
        %1810 = vst [vmem:[#allocation3 + $0x18] sm:$0xff] %v1808
        %v1811 = vld [vmem:[#allocation2 + $0x4] sm:$0xe]
        %v1812 = vld [vmem:[#allocation2 + $0x8] sm:$0xf]
        %v1813 = vld [vmem:[#allocation2 + $0xc] sm:$0x1]
        %v1817 = vunpack.c.l.b16 %v1811
        %v1818 = vunpack.c.l.b16 %v1812
        %v1819 = vunpack.c.l.b16 %v1813
        %v1820 = vpack.c.b16 %v1818, %v1817
        %v1821 = vpack.c.b16 %v1819, %v1819
        %v1822 = vrot.slane %v1820, 1
        %v1823 = vrot.slane %v1821, 1
        %v1824 = vsel %vm670, %v1822, %v1823
        %1826 = vst [vmem:[#allocation3 + $0x20] sm:$0xff] %v1824
        %v1827 = vld [vmem:[#allocation3] sm:$0xff]
        %v1828 = vld [vmem:[#allocation3 + $0x8] sm:$0xff]
        %v1829 = vld [vmem:[#allocation3 + $0x10] sm:$0xff]
        %v1830 = vld [vmem:[#allocation3 + $0x18] sm:$0xff]
        %v1831 = vld [vmem:[#allocation3 + $0x20] sm:$0xff]
        %s1832 = scalar_lea.vmem %s446, 640 [#allocation13]
        %v1833 = vld [vmem:[%s1832] sm:$0xf]
        %v1834 = vld [vmem:[%s1832 + $0x4] sm:$0xf]
        %v1835 = vld [vmem:[%s1832 + $0x8] sm:$0xf]
        %v1836 = vld [vmem:[%s1832 + $0xc] sm:$0xf]
        %v1837 = vld [vmem:[%s1832 + $0x10] sm:$0xf]
        %v1838 = vld [vmem:[%s1832 + $0x14] sm:$0xf]
        %v1839 = vld [vmem:[%s1832 + $0x18] sm:$0xf]
        %v1840 = vld [vmem:[%s1832 + $0x1c] sm:$0xf]
        %v1841 = vld [vmem:[%s1832 + $0x20] sm:$0xf]
        %v1842 = vld [vmem:[%s1832 + $0x24] sm:$0xf]
        %v1843 = vld [vmem:[%s1832 + $0x28] sm:$0xf]
        %v1844 = vld [vmem:[%s1832 + $0x2c] sm:$0xf]
        %v1845 = vld [vmem:[%s1832 + $0x30] sm:$0xf]
        %v1846 = vld [vmem:[%s1832 + $0x34] sm:$0xf]
        %v1847 = vld [vmem:[%s1832 + $0x38] sm:$0xf]
        %v1848 = vld [vmem:[%s1832 + $0x3c] sm:$0xf]
        %v1849 = vld [vmem:[%s1832 + $0x40] sm:$0xf]
        %v1850 = vld [vmem:[%s1832 + $0x44] sm:$0xf]
        %v1851 = vld [vmem:[%s1832 + $0x48] sm:$0xf]
        %v1852 = vld [vmem:[%s1832 + $0x4c] sm:$0xf]
        %v1853 = vld [vmem:[%s1832 + $0x50] sm:$0xf]
        %v1854 = vld [vmem:[%s1832 + $0x54] sm:$0xf]
        %v1855 = vld [vmem:[%s1832 + $0x58] sm:$0xf]
        %v1856 = vld [vmem:[%s1832 + $0x5c] sm:$0xf]
        %v1857 = vld [vmem:[%s1832 + $0x60] sm:$0xf]
        %v1858 = vld [vmem:[%s1832 + $0x64] sm:$0xf]
        %v1859 = vld [vmem:[%s1832 + $0x68] sm:$0xf]
        %v1860 = vld [vmem:[%s1832 + $0x6c] sm:$0xf]
        %v1861 = vld [vmem:[%s1832 + $0x70] sm:$0xf]
        %v1862 = vld [vmem:[%s1832 + $0x74] sm:$0xf]
        %v1863 = vld [vmem:[%s1832 + $0x78] sm:$0xf]
        %v1864 = vld [vmem:[%s1832 + $0x7c] sm:$0xf]
        %v1865 = vld [vmem:[%s1832 + $0x80] sm:$0xf]
        %v1866 = vld [vmem:[%s1832 + $0x84] sm:$0xf]
        %v1867 = vld [vmem:[%s1832 + $0x88] sm:$0xf]
        %v1868 = vld [vmem:[%s1832 + $0x8c] sm:$0xf]
        %v1869 = vld [vmem:[%s1832 + $0x90] sm:$0xf]
        %v1870 = vld [vmem:[%s1832 + $0x94] sm:$0xf]
        %v1871 = vld [vmem:[%s1832 + $0x98] sm:$0xf]
        %v1872 = vld [vmem:[%s1832 + $0x9c] sm:$0xf]
        %v1873 = vld [vmem:[%s1832 + $0xa0] sm:$0xf]
        %v1874 = vld [vmem:[%s1832 + $0xa4] sm:$0xf]
        %v1875 = vld [vmem:[%s1832 + $0xa8] sm:$0xf]
        %v1876 = vld [vmem:[%s1832 + $0xac] sm:$0xf]
        %v1877 = vld [vmem:[%s1832 + $0xb0] sm:$0xf]
        %v1878 = vld [vmem:[%s1832 + $0xb4] sm:$0xf]
        %v1879 = vld [vmem:[%s1832 + $0xb8] sm:$0xf]
        %v1880 = vld [vmem:[%s1832 + $0xbc] sm:$0xf]
        %v1881 = vld [vmem:[%s1832 + $0xc0] sm:$0xf]
        %v1882 = vld [vmem:[%s1832 + $0xc4] sm:$0xf]
        %v1883 = vld [vmem:[%s1832 + $0xc8] sm:$0xf]
        %v1884 = vld [vmem:[%s1832 + $0xcc] sm:$0xf]
        %v1885 = vld [vmem:[%s1832 + $0xd0] sm:$0xf]
        %v1886 = vld [vmem:[%s1832 + $0xd4] sm:$0xf]
        %v1887 = vld [vmem:[%s1832 + $0xd8] sm:$0xf]
        %v1888 = vld [vmem:[%s1832 + $0xdc] sm:$0xf]
        %v1889 = vld [vmem:[%s1832 + $0xe0] sm:$0xf]
        %v1890 = vld [vmem:[%s1832 + $0xe4] sm:$0xf]
        %v1891 = vld [vmem:[%s1832 + $0xe8] sm:$0xf]
        %v1892 = vld [vmem:[%s1832 + $0xec] sm:$0xf]
        %v1893 = vld [vmem:[%s1832 + $0xf0] sm:$0xf]
        %v1894 = vld [vmem:[%s1832 + $0xf4] sm:$0xf]
        %v1895 = vld [vmem:[%s1832 + $0xf8] sm:$0xf]
        %v1896 = vld [vmem:[%s1832 + $0xfc] sm:$0xf]
        %v1897 = vld [vmem:[%s1832 + $0x100] sm:$0xf]
        %v1898 = vld [vmem:[%s1832 + $0x104] sm:$0xf]
        %v1899 = vld [vmem:[%s1832 + $0x108] sm:$0xf]
        %v1900 = vld [vmem:[%s1832 + $0x10c] sm:$0xf]
        %v1901 = vld [vmem:[%s1832 + $0x110] sm:$0xf]
        %v1902 = vld [vmem:[%s1832 + $0x114] sm:$0xf]
        %v1903 = vld [vmem:[%s1832 + $0x118] sm:$0xf]
        %v1904 = vld [vmem:[%s1832 + $0x11c] sm:$0xf]
        %v1905 = vld [vmem:[%s1832 + $0x120] sm:$0xf]
        %v1906 = vld [vmem:[%s1832 + $0x124] sm:$0xf]
        %v1907 = vld [vmem:[%s1832 + $0x128] sm:$0xf]
        %v1908 = vld [vmem:[%s1832 + $0x12c] sm:$0xf]
        %v1909 = vld [vmem:[%s1832 + $0x130] sm:$0xf]
        %v1910 = vld [vmem:[%s1832 + $0x134] sm:$0xf]
        %v1911 = vld [vmem:[%s1832 + $0x138] sm:$0xf]
        %v1912 = vld [vmem:[%s1832 + $0x13c] sm:$0xf]
        %v1993 = vunpack.c.l.b16 %v1833
        %v1994 = vunpack.c.l.b16 %v1834
        %v1995 = vunpack.c.l.b16 %v1835
        %v1996 = vunpack.c.l.b16 %v1836
        %v1997 = vunpack.c.l.b16 %v1837
        %v1998 = vunpack.c.l.b16 %v1838
        %v1999 = vunpack.c.l.b16 %v1839
        %v2000 = vunpack.c.l.b16 %v1840
        %v2001 = vunpack.c.l.b16 %v1841
        %v2002 = vunpack.c.l.b16 %v1842
        %v2003 = vunpack.c.l.b16 %v1843
        %v2004 = vunpack.c.l.b16 %v1844
        %v2005 = vunpack.c.l.b16 %v1845
        %v2006 = vunpack.c.l.b16 %v1846
        %v2007 = vunpack.c.l.b16 %v1847
        %v2008 = vunpack.c.l.b16 %v1848
        %v2009 = vunpack.c.l.b16 %v1849
        %v2010 = vunpack.c.l.b16 %v1850
        %v2011 = vunpack.c.l.b16 %v1851
        %v2012 = vunpack.c.l.b16 %v1852
        %v2013 = vunpack.c.l.b16 %v1853
        %v2014 = vunpack.c.l.b16 %v1854
        %v2015 = vunpack.c.l.b16 %v1855
        %v2016 = vunpack.c.l.b16 %v1856
        %v2017 = vunpack.c.l.b16 %v1857
        %v2018 = vunpack.c.l.b16 %v1858
        %v2019 = vunpack.c.l.b16 %v1859
        %v2020 = vunpack.c.l.b16 %v1860
        %v2021 = vunpack.c.l.b16 %v1861
        %v2022 = vunpack.c.l.b16 %v1862
        %v2023 = vunpack.c.l.b16 %v1863
        %v2024 = vunpack.c.l.b16 %v1864
        %v2025 = vunpack.c.l.b16 %v1865
        %v2026 = vunpack.c.l.b16 %v1866
        %v2027 = vunpack.c.l.b16 %v1867
        %v2028 = vunpack.c.l.b16 %v1868
        %v2029 = vunpack.c.l.b16 %v1869
        %v2030 = vunpack.c.l.b16 %v1870
        %v2031 = vunpack.c.l.b16 %v1871
        %v2032 = vunpack.c.l.b16 %v1872
        %v2033 = vunpack.c.l.b16 %v1873
        %v2034 = vunpack.c.l.b16 %v1874
        %v2035 = vunpack.c.l.b16 %v1875
        %v2036 = vunpack.c.l.b16 %v1876
        %v2037 = vunpack.c.l.b16 %v1877
        %v2038 = vunpack.c.l.b16 %v1878
        %v2039 = vunpack.c.l.b16 %v1879
        %v2040 = vunpack.c.l.b16 %v1880
        %v2041 = vunpack.c.l.b16 %v1881
        %v2042 = vunpack.c.l.b16 %v1882
        %v2043 = vunpack.c.l.b16 %v1883
        %v2044 = vunpack.c.l.b16 %v1884
        %v2045 = vunpack.c.l.b16 %v1885
        %v2046 = vunpack.c.l.b16 %v1886
        %v2047 = vunpack.c.l.b16 %v1887
        %v2048 = vunpack.c.l.b16 %v1888
        %v2049 = vunpack.c.l.b16 %v1889
        %v2050 = vunpack.c.l.b16 %v1890
        %v2051 = vunpack.c.l.b16 %v1891
        %v2052 = vunpack.c.l.b16 %v1892
        %v2053 = vunpack.c.l.b16 %v1893
        %v2054 = vunpack.c.l.b16 %v1894
        %v2055 = vunpack.c.l.b16 %v1895
        %v2056 = vunpack.c.l.b16 %v1896
        %v2057 = vunpack.c.l.b16 %v1897
        %v2058 = vunpack.c.l.b16 %v1898
        %v2059 = vunpack.c.l.b16 %v1899
        %v2060 = vunpack.c.l.b16 %v1900
        %v2061 = vunpack.c.l.b16 %v1901
        %v2062 = vunpack.c.l.b16 %v1902
        %v2063 = vunpack.c.l.b16 %v1903
        %v2064 = vunpack.c.l.b16 %v1904
        %v2065 = vunpack.c.l.b16 %v1905
        %v2066 = vunpack.c.l.b16 %v1906
        %v2067 = vunpack.c.l.b16 %v1907
        %v2068 = vunpack.c.l.b16 %v1908
        %v2069 = vunpack.c.l.b16 %v1909
        %v2070 = vunpack.c.l.b16 %v1910
        %v2071 = vunpack.c.l.b16 %v1911
        %v2072 = vunpack.c.l.b16 %v1912
        %v2073 = vpack.c.b16 %v1994, %v1993
        %v2074 = vpack.c.b16 %v1996, %v1995
        %v2075 = vpack.c.b16 %v1998, %v1997
        %v2076 = vpack.c.b16 %v2000, %v1999
        %v2077 = vpack.c.b16 %v2002, %v2001
        %v2078 = vpack.c.b16 %v2004, %v2003
        %v2079 = vpack.c.b16 %v2006, %v2005
        %v2080 = vpack.c.b16 %v2008, %v2007
        %v2081 = vpack.c.b16 %v2010, %v2009
        %v2082 = vpack.c.b16 %v2012, %v2011
        %v2083 = vpack.c.b16 %v2014, %v2013
        %v2084 = vpack.c.b16 %v2016, %v2015
        %v2085 = vpack.c.b16 %v2018, %v2017
        %v2086 = vpack.c.b16 %v2020, %v2019
        %v2087 = vpack.c.b16 %v2022, %v2021
        %v2088 = vpack.c.b16 %v2024, %v2023
        %v2089 = vpack.c.b16 %v2026, %v2025
        %v2090 = vpack.c.b16 %v2028, %v2027
        %v2091 = vpack.c.b16 %v2030, %v2029
        %v2092 = vpack.c.b16 %v2032, %v2031
        %v2093 = vpack.c.b16 %v2034, %v2033
        %v2094 = vpack.c.b16 %v2036, %v2035
        %v2095 = vpack.c.b16 %v2038, %v2037
        %v2096 = vpack.c.b16 %v2040, %v2039
        %v2097 = vpack.c.b16 %v2042, %v2041
        %v2098 = vpack.c.b16 %v2044, %v2043
        %v2099 = vpack.c.b16 %v2046, %v2045
        %v2100 = vpack.c.b16 %v2048, %v2047
        %v2101 = vpack.c.b16 %v2050, %v2049
        %v2102 = vpack.c.b16 %v2052, %v2051
        %v2103 = vpack.c.b16 %v2054, %v2053
        %v2104 = vpack.c.b16 %v2056, %v2055
        %v2105 = vpack.c.b16 %v2058, %v2057
        %v2106 = vpack.c.b16 %v2060, %v2059
        %v2107 = vpack.c.b16 %v2062, %v2061
        %v2108 = vpack.c.b16 %v2064, %v2063
        %v2109 = vpack.c.b16 %v2066, %v2065
        %v2110 = vpack.c.b16 %v2068, %v2067
        %v2111 = vpack.c.b16 %v2070, %v2069
        %v2112 = vpack.c.b16 %v2072, %v2071
        %2153 = vmatprep.subr.bf16.mxu0 0
        %2154 = vmatpush1.bf16.msra.mxu0 %v2073
        %2155 = vmatprep.subr.bf16.mxu0 0
        %2156 = vmatpush1.bf16.msra.mxu0 %v2074
        %2157 = vmatprep.subr.bf16.mxu0 0
        %2158 = vmatpush1.bf16.msra.mxu0 %v2075
        %2159 = vmatprep.subr.bf16.mxu0 0
        %2160 = vmatpush1.bf16.msra.mxu0 %v2076
        %2161 = vmatprep.subr.bf16.mxu0 0
        %2162 = vmatpush1.bf16.msra.mxu0 %v2077
        %2163 = vmatprep.subr.bf16.mxu0 0
        %2164 = vmatpush1.bf16.msra.mxu0 %v2078
        %2165 = vmatprep.subr.bf16.mxu0 0
        %2166 = vmatpush1.bf16.msra.mxu0 %v2079
        %2167 = vmatprep.subr.bf16.mxu0 0
        %2168 = vmatpush1.bf16.msra.mxu0 %v2080
        %2169 = vmatprep.subr.bf16.mxu0 0
        %2170 = vmatpush1.bf16.msra.mxu0 %v2081
        %2171 = vmatprep.subr.bf16.mxu0 0
        %2172 = vmatpush1.bf16.msra.mxu0 %v2082
        %2173 = vmatprep.subr.bf16.mxu0 0
        %2174 = vmatpush1.bf16.msra.mxu0 %v2083
        %2175 = vmatprep.subr.bf16.mxu0 0
        %2176 = vmatpush1.bf16.msra.mxu0 %v2084
        %2177 = vmatprep.subr.bf16.mxu0 0
        %2178 = vmatpush1.bf16.msra.mxu0 %v2085
        %2179 = vmatprep.subr.bf16.mxu0 0
        %2180 = vmatpush1.bf16.msra.mxu0 %v2086
        %2181 = vmatprep.subr.bf16.mxu0 0
        %2182 = vmatpush1.bf16.msra.mxu0 %v2087
        %2183 = vmatprep.subr.bf16.mxu0 0
        %2184 = vmatpush1.bf16.msra.mxu0 %v2088
        %2185 = vmatprep.mubr.bf16.mxu0 %v1828
        %2186 = vmatmul.mubr.bf16.gmra.mrb[0].mxu0 %v1827
        %v2187 = vpop.f32.mrb[0].mxu0
        %v2188 = vadd.f32 0.0, %v2187
        %v2189 = vpop.f32.mrb[0].mxu0
        %v2190 = vpop.f32.mrb[0].mxu0
        %v2191 = vadd.f32 0.0, %v2190
        %v2192 = vpop.f32.mrb[0].mxu0
        %2193 = vdwg.mxu0
        %2194 = vmatprep.subr.bf16.mxu0 0
        %2195 = vmatpush1.bf16.msra.mxu0 %v2089
        %2196 = vmatprep.subr.bf16.mxu0 0
        %2197 = vmatpush1.bf16.msra.mxu0 %v2090
        %2198 = vmatprep.subr.bf16.mxu0 0
        %2199 = vmatpush1.bf16.msra.mxu0 %v2091
        %2200 = vmatprep.subr.bf16.mxu0 0
        %2201 = vmatpush1.bf16.msra.mxu0 %v2092
        %2202 = vmatprep.subr.bf16.mxu0 0
        %2203 = vmatpush1.bf16.msra.mxu0 %v2093
        %2204 = vmatprep.subr.bf16.mxu0 0
        %2205 = vmatpush1.bf16.msra.mxu0 %v2094
        %2206 = vmatprep.subr.bf16.mxu0 0
        %2207 = vmatpush1.bf16.msra.mxu0 %v2095
        %2208 = vmatprep.subr.bf16.mxu0 0
        %2209 = vmatpush1.bf16.msra.mxu0 %v2096
        %2210 = vmatprep.subr.bf16.mxu0 0
        %2211 = vmatpush1.bf16.msra.mxu0 %v2097
        %2212 = vmatprep.subr.bf16.mxu0 0
        %2213 = vmatpush1.bf16.msra.mxu0 %v2098
        %2214 = vmatprep.subr.bf16.mxu0 0
        %2215 = vmatpush1.bf16.msra.mxu0 %v2099
        %2216 = vmatprep.subr.bf16.mxu0 0
        %2217 = vmatpush1.bf16.msra.mxu0 %v2100
        %2218 = vmatprep.subr.bf16.mxu0 0
        %2219 = vmatpush1.bf16.msra.mxu0 %v2101
        %2220 = vmatprep.subr.bf16.mxu0 0
        %2221 = vmatpush1.bf16.msra.mxu0 %v2102
        %2222 = vmatprep.subr.bf16.mxu0 0
        %2223 = vmatpush1.bf16.msra.mxu0 %v2103
        %2224 = vmatprep.subr.bf16.mxu0 0
        %2225 = vmatpush1.bf16.msra.mxu0 %v2104
        %2226 = vmatprep.mubr.bf16.mxu0 %v1830
        %2227 = vmatmul.mubr.bf16.gmra.mrb[0].mxu0 %v1829
        %v2228 = vpop.f32.mrb[0].mxu0
        %v2229 = vadd.f32 %v2188, %v2228
        %v2230 = vpop.f32.mrb[0].mxu0
        %v2231 = vpop.f32.mrb[0].mxu0
        %v2232 = vadd.f32 %v2191, %v2231
        %v2233 = vpop.f32.mrb[0].mxu0
        %2234 = vdwg.mxu0
        %2235 = vmatprep.subr.bf16.mxu0 0
        %2236 = vmatpush1.bf16.msra.mxu0 %v2105
        %2237 = vmatprep.subr.bf16.mxu0 0
        %2238 = vmatpush1.bf16.msra.mxu0 %v2106
        %2239 = vmatprep.subr.bf16.mxu0 0
        %2240 = vmatpush1.bf16.msra.mxu0 %v2107
        %2241 = vmatprep.subr.bf16.mxu0 0
        %2242 = vmatpush1.bf16.msra.mxu0 %v2108
        %2243 = vmatprep.subr.bf16.mxu0 0
        %2244 = vmatpush1.bf16.msra.mxu0 %v2109
        %2245 = vmatprep.subr.bf16.mxu0 0
        %2246 = vmatpush1.bf16.msra.mxu0 %v2110
        %2247 = vmatprep.subr.bf16.mxu0 0
        %2248 = vmatpush1.bf16.msra.mxu0 %v2111
        %2249 = vmatprep.subr.bf16.mxu0 0
        %2250 = vmatpush1.bf16.msra.mxu0 %v2112
        %2251 = vmatprep.subr.bf16.mxu0 0
        %2252 = vmatpush1.bf16.msra.mxu0 0
        %2253 = vmatprep.subr.bf16.mxu0 0
        %2254 = vmatpush1.bf16.msra.mxu0 0
        %2255 = vmatprep.subr.bf16.mxu0 0
        %2256 = vmatpush1.bf16.msra.mxu0 0
        %2257 = vmatprep.subr.bf16.mxu0 0
        %2258 = vmatpush1.bf16.msra.mxu0 0
        %2259 = vmatprep.subr.bf16.mxu0 0
        %2260 = vmatpush1.bf16.msra.mxu0 0
        %2261 = vmatprep.subr.bf16.mxu0 0
        %2262 = vmatpush1.bf16.msra.mxu0 0
        %2263 = vmatprep.subr.bf16.mxu0 0
        %2264 = vmatpush1.bf16.msra.mxu0 0
        %2265 = vmatprep.subr.bf16.mxu0 0
        %2266 = vmatpush1.bf16.msra.mxu0 0
        %2267 = vmatprep.mubr.bf16.mxu0 0
        %2268 = vmatmul.mubr.bf16.gmra.mrb[0].mxu0 %v1831
        %v2269 = vpop.f32.mrb[0].mxu0
        %v2270 = vadd.f32 %v2229, %v2269
        %v2271 = vpop.f32.mrb[0].mxu0
        %v2272 = vpop.f32.mrb[0].mxu0
        %v2273 = vadd.f32 %v2232, %v2272
        %v2274 = vpop.f32.mrb[0].mxu0
        %2275 = vdwg.mxu0
        %s2276 = scalar_lea.vmem %s455, 2 [#allocation15]
        %v2277 = vld [vmem:[%s2276] sm:$0x1]
        %v2279 = vlaneseq
        %v2280 = vshrl.u32 %v2279, 7
        %v2281 = vsub.s32 0, %v2280
        %v2282 = vrot.slane %v2277, %v2281
        %v2284 = vmul.f32 %v2270, %v2282
        %v2285 = vmul.f32 %v2273, %v2282
        %s2286 = scalar_lea.vmem %s464, 2 [#allocation16]
        %v2287 = vld [vmem:[%s2286] sm:$0x1]
        %v2289 = vlaneseq
        %v2290 = vshrl.u32 %v2289, 7
        %v2291 = vsub.s32 0, %v2290
        %v2292 = vrot.slane %v2287, %v2291
        %v2294 = vadd.f32 %v2284, %v2292
        %v2295 = vadd.f32 %v2285, %v2292
        %v2296 = vmax.f32 %v2294, 0.0
        %v2297 = vmax.f32 %v2295, 0.0
        %v2298 = vpack.c.bf16 %v2297, %v2296
        %v2300 = vunpack.c.l.b16 %v2298
        %v2301 = vunpack.c.h.b16 %v2298
        %v2302 = vpack.c.b16 %v2300, %v2300
        %v2303 = vpack.c.b16 %v2301, %v2301
        %2306 = vst [vmem:[#allocation2 + $0x4] sm:$0xf] %v2302
        %2307 = vst [vmem:[#allocation2 + $0x8] sm:$0xf] %v2303
        %v2308 = vld [vmem:[#allocation2 + $0x4] sm:$0xf]
        %v2309 = vld [vmem:[#allocation2 + $0x8] sm:$0xf]
        %v2310 = vld [vmem:[%s473] sm:$0xff]
        %v2311 = vld [vmem:[%s473 + $0x8] sm:$0xff]
        %v2312 = vld [vmem:[%s473 + $0x10] sm:$0xff]
        %v2313 = vld [vmem:[%s473 + $0x18] sm:$0xff]
        %v2314 = vld [vmem:[%s473 + $0x20] sm:$0xff]
        %v2315 = vld [vmem:[%s473 + $0x28] sm:$0xff]
        %v2316 = vld [vmem:[%s473 + $0x30] sm:$0xff]
        %v2317 = vld [vmem:[%s473 + $0x38] sm:$0xff]
        %v2318 = vld [vmem:[%s473 + $0x40] sm:$0xff]
        %v2319 = vld [vmem:[%s473 + $0x48] sm:$0xff]
        %v2320 = vld [vmem:[%s473 + $0x50] sm:$0xff]
        %v2321 = vld [vmem:[%s473 + $0x58] sm:$0xff]
        %v2322 = vld [vmem:[%s473 + $0x60] sm:$0xff]
        %v2323 = vld [vmem:[%s473 + $0x68] sm:$0xff]
        %v2324 = vld [vmem:[%s473 + $0x70] sm:$0xff]
        %v2325 = vld [vmem:[%s473 + $0x78] sm:$0xff]
        %v2326 = vld [vmem:[%s473 + $0x80] sm:$0xff]
        %v2327 = vld [vmem:[%s473 + $0x88] sm:$0xff]
        %v2328 = vld [vmem:[%s473 + $0x90] sm:$0xff]
        %v2329 = vld [vmem:[%s473 + $0x98] sm:$0xff]
        %v2330 = vld [vmem:[%s473 + $0xa0] sm:$0xff]
        %v2331 = vld [vmem:[%s473 + $0xa8] sm:$0xff]
        %v2332 = vld [vmem:[%s473 + $0xb0] sm:$0xff]
        %v2333 = vld [vmem:[%s473 + $0xb8] sm:$0xff]
        %v2334 = vld [vmem:[%s473 + $0xc0] sm:$0xff]
        %v2335 = vld [vmem:[%s473 + $0xc8] sm:$0xff]
        %v2336 = vld [vmem:[%s473 + $0xd0] sm:$0xff]
        %v2337 = vld [vmem:[%s473 + $0xd8] sm:$0xff]
        %v2338 = vld [vmem:[%s473 + $0xe0] sm:$0xff]
        %v2339 = vld [vmem:[%s473 + $0xe8] sm:$0xff]
        %v2340 = vld [vmem:[%s473 + $0xf0] sm:$0xff]
        %v2341 = vld [vmem:[%s473 + $0xf8] sm:$0xff]
        %v2342 = vld [vmem:[%s473 + $0x100] sm:$0xff]
        %v2343 = vld [vmem:[%s473 + $0x108] sm:$0xff]
        %v2344 = vld [vmem:[%s473 + $0x110] sm:$0xff]
        %v2345 = vld [vmem:[%s473 + $0x118] sm:$0xff]
        %v2346 = vld [vmem:[%s473 + $0x120] sm:$0xff]
        %v2347 = vld [vmem:[%s473 + $0x128] sm:$0xff]
        %v2348 = vld [vmem:[%s473 + $0x130] sm:$0xff]
        %v2349 = vld [vmem:[%s473 + $0x138] sm:$0xff]
        %v2350 = vld [vmem:[%s473 + $0x140] sm:$0xff]
        %v2351 = vld [vmem:[%s473 + $0x148] sm:$0xff]
        %v2352 = vld [vmem:[%s473 + $0x150] sm:$0xff]
        %v2353 = vld [vmem:[%s473 + $0x158] sm:$0xff]
        %v2354 = vld [vmem:[%s473 + $0x160] sm:$0xff]
        %v2355 = vld [vmem:[%s473 + $0x168] sm:$0xff]
        %v2356 = vld [vmem:[%s473 + $0x170] sm:$0xff]
        %v2357 = vld [vmem:[%s473 + $0x178] sm:$0xff]
        %v2358 = vld [vmem:[%s473 + $0x180] sm:$0xff]
        %v2359 = vld [vmem:[%s473 + $0x188] sm:$0xff]
        %v2360 = vld [vmem:[%s473 + $0x190] sm:$0xff]
        %v2361 = vld [vmem:[%s473 + $0x198] sm:$0xff]
        %v2362 = vld [vmem:[%s473 + $0x1a0] sm:$0xff]
        %v2363 = vld [vmem:[%s473 + $0x1a8] sm:$0xff]
        %v2364 = vld [vmem:[%s473 + $0x1b0] sm:$0xff]
        %v2365 = vld [vmem:[%s473 + $0x1b8] sm:$0xff]
        %v2366 = vld [vmem:[%s473 + $0x1c0] sm:$0xff]
        %v2367 = vld [vmem:[%s473 + $0x1c8] sm:$0xff]
        %v2368 = vld [vmem:[%s473 + $0x1d0] sm:$0xff]
        %v2369 = vld [vmem:[%s473 + $0x1d8] sm:$0xff]
        %v2370 = vld [vmem:[%s473 + $0x1e0] sm:$0xff]
        %v2371 = vld [vmem:[%s473 + $0x1e8] sm:$0xff]
        %v2372 = vld [vmem:[%s473 + $0x1f0] sm:$0xff]
        %v2373 = vld [vmem:[%s473 + $0x1f8] sm:$0xff]
        %v2374 = vld [vmem:[%s491] sm:$0xff]
        %v2376 = vlaneseq
        %v2377 = vshrl.u32 %v2376, 7
        %v2378 = vsub.s32 0, %v2377
        %v2379 = vrot.slane %v2374, %v2378
        %v2380 = vlaneseq
        %v2381 = vshrl.u32 %v2380, 7
        %v2382 = vsub.s32 1, %v2381
        %v2383 = vrot.slane %v2374, %v2382
        %v2384 = vlaneseq
        %v2385 = vshrl.u32 %v2384, 7
        %v2386 = vsub.s32 2, %v2385
        %v2387 = vrot.slane %v2374, %v2386
        %v2388 = vlaneseq
        %v2389 = vshrl.u32 %v2388, 7
        %v2390 = vsub.s32 3, %v2389
        %v2391 = vrot.slane %v2374, %v2390
        %v2392 = vlaneseq
        %v2393 = vshrl.u32 %v2392, 7
        %v2394 = vsub.s32 4, %v2393
        %v2395 = vrot.slane %v2374, %v2394
        %v2396 = vlaneseq
        %v2397 = vshrl.u32 %v2396, 7
        %v2398 = vsub.s32 5, %v2397
        %v2399 = vrot.slane %v2374, %v2398
        %v2400 = vlaneseq
        %v2401 = vshrl.u32 %v2400, 7
        %v2402 = vsub.s32 6, %v2401
        %v2403 = vrot.slane %v2374, %v2402
        %v2404 = vlaneseq
        %v2405 = vshrl.u32 %v2404, 7
        %v2406 = vsub.s32 7, %v2405
        %v2407 = vrot.slane %v2374, %v2406
        %v2418 = vunpack.c.l.b16 %v2308
        %v2419 = vunpack.c.l.b16 %v2309
        %v2420 = vpack.c.b16 %v2419, %v2418
        %v2486 = vunpack.c.l.b16 %v2310
        %v2487 = vunpack.c.h.b16 %v2310
        %v2488 = vunpack.c.l.b16 %v2311
        %v2489 = vunpack.c.h.b16 %v2311
        %v2490 = vunpack.c.l.b16 %v2312
        %v2491 = vunpack.c.h.b16 %v2312
        %v2492 = vunpack.c.l.b16 %v2313
        %v2493 = vunpack.c.h.b16 %v2313
        %v2494 = vunpack.c.l.b16 %v2314
        %v2495 = vunpack.c.h.b16 %v2314
        %v2496 = vunpack.c.l.b16 %v2315
        %v2497 = vunpack.c.h.b16 %v2315
        %v2498 = vunpack.c.l.b16 %v2316
        %v2499 = vunpack.c.h.b16 %v2316
        %v2500 = vunpack.c.l.b16 %v2317
        %v2501 = vunpack.c.h.b16 %v2317
        %v2502 = vunpack.c.l.b16 %v2318
        %v2503 = vunpack.c.h.b16 %v2318
        %v2504 = vunpack.c.l.b16 %v2319
        %v2505 = vunpack.c.h.b16 %v2319
        %v2506 = vunpack.c.l.b16 %v2320
        %v2507 = vunpack.c.h.b16 %v2320
        %v2508 = vunpack.c.l.b16 %v2321
        %v2509 = vunpack.c.h.b16 %v2321
        %v2510 = vunpack.c.l.b16 %v2322
        %v2511 = vunpack.c.h.b16 %v2322
        %v2512 = vunpack.c.l.b16 %v2323
        %v2513 = vunpack.c.h.b16 %v2323
        %v2514 = vunpack.c.l.b16 %v2324
        %v2515 = vunpack.c.h.b16 %v2324
        %v2516 = vunpack.c.l.b16 %v2325
        %v2517 = vunpack.c.h.b16 %v2325
        %v2518 = vunpack.c.l.b16 %v2326
        %v2519 = vunpack.c.h.b16 %v2326
        %v2520 = vunpack.c.l.b16 %v2327
        %v2521 = vunpack.c.h.b16 %v2327
        %v2522 = vunpack.c.l.b16 %v2328
        %v2523 = vunpack.c.h.b16 %v2328
        %v2524 = vunpack.c.l.b16 %v2329
        %v2525 = vunpack.c.h.b16 %v2329
        %v2526 = vunpack.c.l.b16 %v2330
        %v2527 = vunpack.c.h.b16 %v2330
        %v2528 = vunpack.c.l.b16 %v2331
        %v2529 = vunpack.c.h.b16 %v2331
        %v2530 = vunpack.c.l.b16 %v2332
        %v2531 = vunpack.c.h.b16 %v2332
        %v2532 = vunpack.c.l.b16 %v2333
        %v2533 = vunpack.c.h.b16 %v2333
        %v2534 = vunpack.c.l.b16 %v2334
        %v2535 = vunpack.c.h.b16 %v2334
        %v2536 = vunpack.c.l.b16 %v2335
        %v2537 = vunpack.c.h.b16 %v2335
        %v2538 = vunpack.c.l.b16 %v2336
        %v2539 = vunpack.c.h.b16 %v2336
        %v2540 = vunpack.c.l.b16 %v2337
        %v2541 = vunpack.c.h.b16 %v2337
        %v2542 = vunpack.c.l.b16 %v2338
        %v2543 = vunpack.c.h.b16 %v2338
        %v2544 = vunpack.c.l.b16 %v2339
        %v2545 = vunpack.c.h.b16 %v2339
        %v2546 = vunpack.c.l.b16 %v2340
        %v2547 = vunpack.c.h.b16 %v2340
        %v2548 = vunpack.c.l.b16 %v2341
        %v2549 = vunpack.c.h.b16 %v2341
        %v2550 = vunpack.c.l.b16 %v2342
        %v2551 = vunpack.c.h.b16 %v2342
        %v2552 = vunpack.c.l.b16 %v2343
        %v2553 = vunpack.c.h.b16 %v2343
        %v2554 = vunpack.c.l.b16 %v2344
        %v2555 = vunpack.c.h.b16 %v2344
        %v2556 = vunpack.c.l.b16 %v2345
        %v2557 = vunpack.c.h.b16 %v2345
        %v2558 = vunpack.c.l.b16 %v2346
        %v2559 = vunpack.c.h.b16 %v2346
        %v2560 = vunpack.c.l.b16 %v2347
        %v2561 = vunpack.c.h.b16 %v2347
        %v2562 = vunpack.c.l.b16 %v2348
        %v2563 = vunpack.c.h.b16 %v2348
        %v2564 = vunpack.c.l.b16 %v2349
        %v2565 = vunpack.c.h.b16 %v2349
        %v2566 = vunpack.c.l.b16 %v2350
        %v2567 = vunpack.c.h.b16 %v2350
        %v2568 = vunpack.c.l.b16 %v2351
        %v2569 = vunpack.c.h.b16 %v2351
        %v2570 = vunpack.c.l.b16 %v2352
        %v2571 = vunpack.c.h.b16 %v2352
        %v2572 = vunpack.c.l.b16 %v2353
        %v2573 = vunpack.c.h.b16 %v2353
        %v2574 = vunpack.c.l.b16 %v2354
        %v2575 = vunpack.c.h.b16 %v2354
        %v2576 = vunpack.c.l.b16 %v2355
        %v2577 = vunpack.c.h.b16 %v2355
        %v2578 = vunpack.c.l.b16 %v2356
        %v2579 = vunpack.c.h.b16 %v2356
        %v2580 = vunpack.c.l.b16 %v2357
        %v2581 = vunpack.c.h.b16 %v2357
        %v2582 = vunpack.c.l.b16 %v2358
        %v2583 = vunpack.c.h.b16 %v2358
        %v2584 = vunpack.c.l.b16 %v2359
        %v2585 = vunpack.c.h.b16 %v2359
        %v2586 = vunpack.c.l.b16 %v2360
        %v2587 = vunpack.c.h.b16 %v2360
        %v2588 = vunpack.c.l.b16 %v2361
        %v2589 = vunpack.c.h.b16 %v2361
        %v2590 = vunpack.c.l.b16 %v2362
        %v2591 = vunpack.c.h.b16 %v2362
        %v2592 = vunpack.c.l.b16 %v2363
        %v2593 = vunpack.c.h.b16 %v2363
        %v2594 = vunpack.c.l.b16 %v2364
        %v2595 = vunpack.c.h.b16 %v2364
        %v2596 = vunpack.c.l.b16 %v2365
        %v2597 = vunpack.c.h.b16 %v2365
        %v2598 = vunpack.c.l.b16 %v2366
        %v2599 = vunpack.c.h.b16 %v2366
        %v2600 = vunpack.c.l.b16 %v2367
        %v2601 = vunpack.c.h.b16 %v2367
        %v2602 = vunpack.c.l.b16 %v2368
        %v2603 = vunpack.c.h.b16 %v2368
        %v2604 = vunpack.c.l.b16 %v2369
        %v2605 = vunpack.c.h.b16 %v2369
        %v2606 = vunpack.c.l.b16 %v2370
        %v2607 = vunpack.c.h.b16 %v2370
        %v2608 = vunpack.c.l.b16 %v2371
        %v2609 = vunpack.c.h.b16 %v2371
        %v2610 = vunpack.c.l.b16 %v2372
        %v2611 = vunpack.c.h.b16 %v2372
        %v2612 = vunpack.c.l.b16 %v2373
        %v2613 = vunpack.c.h.b16 %v2373
        %v2614 = vpack.c.b16 %v2494, %v2486
        %v2615 = vpack.c.b16 %v2495, %v2487
        %v2616 = vpack.c.b16 %v2496, %v2488
        %v2617 = vpack.c.b16 %v2497, %v2489
        %v2618 = vpack.c.b16 %v2498, %v2490
        %v2619 = vpack.c.b16 %v2499, %v2491
        %v2620 = vpack.c.b16 %v2500, %v2492
        %v2621 = vpack.c.b16 %v2501, %v2493
        %v2622 = vpack.c.b16 %v2510, %v2502
        %v2623 = vpack.c.b16 %v2511, %v2503
        %v2624 = vpack.c.b16 %v2512, %v2504
        %v2625 = vpack.c.b16 %v2513, %v2505
        %v2626 = vpack.c.b16 %v2514, %v2506
        %v2627 = vpack.c.b16 %v2515, %v2507
        %v2628 = vpack.c.b16 %v2516, %v2508
        %v2629 = vpack.c.b16 %v2517, %v2509
        %v2630 = vpack.c.b16 %v2526, %v2518
        %v2631 = vpack.c.b16 %v2527, %v2519
        %v2632 = vpack.c.b16 %v2528, %v2520
        %v2633 = vpack.c.b16 %v2529, %v2521
        %v2634 = vpack.c.b16 %v2530, %v2522
        %v2635 = vpack.c.b16 %v2531, %v2523
        %v2636 = vpack.c.b16 %v2532, %v2524
        %v2637 = vpack.c.b16 %v2533, %v2525
        %v2638 = vpack.c.b16 %v2542, %v2534
        %v2639 = vpack.c.b16 %v2543, %v2535
        %v2640 = vpack.c.b16 %v2544, %v2536
        %v2641 = vpack.c.b16 %v2545, %v2537
        %v2642 = vpack.c.b16 %v2546, %v2538
        %v2643 = vpack.c.b16 %v2547, %v2539
        %v2644 = vpack.c.b16 %v2548, %v2540
        %v2645 = vpack.c.b16 %v2549, %v2541
        %v2646 = vpack.c.b16 %v2558, %v2550
        %v2647 = vpack.c.b16 %v2559, %v2551
        %v2648 = vpack.c.b16 %v2560, %v2552
        %v2649 = vpack.c.b16 %v2561, %v2553
        %v2650 = vpack.c.b16 %v2562, %v2554
        %v2651 = vpack.c.b16 %v2563, %v2555
        %v2652 = vpack.c.b16 %v2564, %v2556
        %v2653 = vpack.c.b16 %v2565, %v2557
        %v2654 = vpack.c.b16 %v2574, %v2566
        %v2655 = vpack.c.b16 %v2575, %v2567
        %v2656 = vpack.c.b16 %v2576, %v2568
        %v2657 = vpack.c.b16 %v2577, %v2569
        %v2658 = vpack.c.b16 %v2578, %v2570
        %v2659 = vpack.c.b16 %v2579, %v2571
        %v2660 = vpack.c.b16 %v2580, %v2572
        %v2661 = vpack.c.b16 %v2581, %v2573
        %v2662 = vpack.c.b16 %v2590, %v2582
        %v2663 = vpack.c.b16 %v2591, %v2583
        %v2664 = vpack.c.b16 %v2592, %v2584
        %v2665 = vpack.c.b16 %v2593, %v2585
        %v2666 = vpack.c.b16 %v2594, %v2586
        %v2667 = vpack.c.b16 %v2595, %v2587
        %v2668 = vpack.c.b16 %v2596, %v2588
        %v2669 = vpack.c.b16 %v2597, %v2589
        %v2670 = vpack.c.b16 %v2606, %v2598
        %v2671 = vpack.c.b16 %v2607, %v2599
        %v2672 = vpack.c.b16 %v2608, %v2600
        %v2673 = vpack.c.b16 %v2609, %v2601
        %v2674 = vpack.c.b16 %v2610, %v2602
        %v2675 = vpack.c.b16 %v2611, %v2603
        %v2676 = vpack.c.b16 %v2612, %v2604
        %v2677 = vpack.c.b16 %v2613, %v2605
        %2742 = vmatprep.subr.bf16.mxu0 %v2615
        %2743 = vmatpush1.bf16.msra.mxu0 %v2614
        %2744 = vmatprep.subr.bf16.mxu0 %v2623
        %2745 = vmatpush1.bf16.msra.mxu0 %v2622
        %2746 = vmatprep.subr.bf16.mxu0 %v2631
        %2747 = vmatpush1.bf16.msra.mxu0 %v2630
        %2748 = vmatprep.subr.bf16.mxu0 %v2639
        %2749 = vmatpush1.bf16.msra.mxu0 %v2638
        %2750 = vmatprep.subr.bf16.mxu0 %v2647
        %2751 = vmatpush1.bf16.msra.mxu0 %v2646
        %2752 = vmatprep.subr.bf16.mxu0 %v2655
        %2753 = vmatpush1.bf16.msra.mxu0 %v2654
        %2754 = vmatprep.subr.bf16.mxu0 %v2663
        %2755 = vmatpush1.bf16.msra.mxu0 %v2662
        %2756 = vmatprep.subr.bf16.mxu0 %v2671
        %2757 = vmatpush1.bf16.msra.mxu0 %v2670
        %2758 = vmatprep.subr.bf16.mxu0 0
        %2759 = vmatpush1.bf16.msra.mxu0 0
        %2760 = vmatprep.subr.bf16.mxu0 0
        %2761 = vmatpush1.bf16.msra.mxu0 0
        %2762 = vmatprep.subr.bf16.mxu0 0
        %2763 = vmatpush1.bf16.msra.mxu0 0
        %2764 = vmatprep.subr.bf16.mxu0 0
        %2765 = vmatpush1.bf16.msra.mxu0 0
        %2766 = vmatprep.subr.bf16.mxu0 0
        %2767 = vmatpush1.bf16.msra.mxu0 0
        %2768 = vmatprep.subr.bf16.mxu0 0
        %2769 = vmatpush1.bf16.msra.mxu0 0
        %2770 = vmatprep.subr.bf16.mxu0 0
        %2771 = vmatpush1.bf16.msra.mxu0 0
        %2772 = vmatprep.subr.bf16.mxu0 0
        %2773 = vmatpush1.bf16.msra.mxu0 0
        %2774 = vmatprep.mubr.bf16.mxu0 0
        %2775 = vmatmul.mubr.bf16.gmra.mrb[0].mxu0 %v2420
        %v2776 = vpop.f32.mrb[0].mxu0
        %v2777 = vadd.f32 %v2379, %v2776
        %v2778 = vpop.f32.mrb[0].mxu0
        %v2779 = vadd.f32 %v2383, %v2778
        %v2780 = vpop.f32.mrb[0].mxu0
        %v2781 = vadd.f32 %v2379, %v2780
        %v2782 = vpop.f32.mrb[0].mxu0
        %v2783 = vadd.f32 %v2383, %v2782
        %2784 = vdwg.mxu0
        %2785 = vmatprep.subr.bf16.mxu0 %v2617
        %2786 = vmatpush1.bf16.msra.mxu0 %v2616
        %2787 = vmatprep.subr.bf16.mxu0 %v2625
        %2788 = vmatpush1.bf16.msra.mxu0 %v2624
        %2789 = vmatprep.subr.bf16.mxu0 %v2633
        %2790 = vmatpush1.bf16.msra.mxu0 %v2632
        %2791 = vmatprep.subr.bf16.mxu0 %v2641
        %2792 = vmatpush1.bf16.msra.mxu0 %v2640
        %2793 = vmatprep.subr.bf16.mxu0 %v2649
        %2794 = vmatpush1.bf16.msra.mxu0 %v2648
        %2795 = vmatprep.subr.bf16.mxu0 %v2657
        %2796 = vmatpush1.bf16.msra.mxu0 %v2656
        %2797 = vmatprep.subr.bf16.mxu0 %v2665
        %2798 = vmatpush1.bf16.msra.mxu0 %v2664
        %2799 = vmatprep.subr.bf16.mxu0 %v2673
        %2800 = vmatpush1.bf16.msra.mxu0 %v2672
        %2801 = vmatprep.subr.bf16.mxu0 0
        %2802 = vmatpush1.bf16.msra.mxu0 0
        %2803 = vmatprep.subr.bf16.mxu0 0
        %2804 = vmatpush1.bf16.msra.mxu0 0
        %2805 = vmatprep.subr.bf16.mxu0 0
        %2806 = vmatpush1.bf16.msra.mxu0 0
        %2807 = vmatprep.subr.bf16.mxu0 0
        %2808 = vmatpush1.bf16.msra.mxu0 0
        %2809 = vmatprep.subr.bf16.mxu0 0
        %2810 = vmatpush1.bf16.msra.mxu0 0
        %2811 = vmatprep.subr.bf16.mxu0 0
        %2812 = vmatpush1.bf16.msra.mxu0 0
        %2813 = vmatprep.subr.bf16.mxu0 0
        %2814 = vmatpush1.bf16.msra.mxu0 0
        %2815 = vmatprep.subr.bf16.mxu0 0
        %2816 = vmatpush1.bf16.msra.mxu0 0
        %2817 = vmatprep.mubr.bf16.mxu0 0
        %2818 = vmatmul.mubr.bf16.gmra.mrb[0].mxu0 %v2420
        %v2819 = vpop.f32.mrb[0].mxu0
        %v2820 = vadd.f32 %v2387, %v2819
        %v2821 = vpop.f32.mrb[0].mxu0
        %v2822 = vadd.f32 %v2391, %v2821
        %v2823 = vpop.f32.mrb[0].mxu0
        %v2824 = vadd.f32 %v2387, %v2823
        %v2825 = vpop.f32.mrb[0].mxu0
        %v2826 = vadd.f32 %v2391, %v2825
        %2827 = vdwg.mxu0
        %2828 = vmatprep.subr.bf16.mxu0 %v2619
        %2829 = vmatpush1.bf16.msra.mxu0 %v2618
        %2830 = vmatprep.subr.bf16.mxu0 %v2627
        %2831 = vmatpush1.bf16.msra.mxu0 %v2626
        %2832 = vmatprep.subr.bf16.mxu0 %v2635
        %2833 = vmatpush1.bf16.msra.mxu0 %v2634
        %2834 = vmatprep.subr.bf16.mxu0 %v2643
        %2835 = vmatpush1.bf16.msra.mxu0 %v2642
        %2836 = vmatprep.subr.bf16.mxu0 %v2651
        %2837 = vmatpush1.bf16.msra.mxu0 %v2650
        %2838 = vmatprep.subr.bf16.mxu0 %v2659
        %2839 = vmatpush1.bf16.msra.mxu0 %v2658
        %2840 = vmatprep.subr.bf16.mxu0 %v2667
        %2841 = vmatpush1.bf16.msra.mxu0 %v2666
        %2842 = vmatprep.subr.bf16.mxu0 %v2675
        %2843 = vmatpush1.bf16.msra.mxu0 %v2674
        %2844 = vmatprep.subr.bf16.mxu0 0
        %2845 = vmatpush1.bf16.msra.mxu0 0
        %2846 = vmatprep.subr.bf16.mxu0 0
        %2847 = vmatpush1.bf16.msra.mxu0 0
        %2848 = vmatprep.subr.bf16.mxu0 0
        %2849 = vmatpush1.bf16.msra.mxu0 0
        %2850 = vmatprep.subr.bf16.mxu0 0
        %2851 = vmatpush1.bf16.msra.mxu0 0
        %2852 = vmatprep.subr.bf16.mxu0 0
        %2853 = vmatpush1.bf16.msra.mxu0 0
        %2854 = vmatprep.subr.bf16.mxu0 0
        %2855 = vmatpush1.bf16.msra.mxu0 0
        %2856 = vmatprep.subr.bf16.mxu0 0
        %2857 = vmatpush1.bf16.msra.mxu0 0
        %2858 = vmatprep.subr.bf16.mxu0 0
        %2859 = vmatpush1.bf16.msra.mxu0 0
        %2860 = vmatprep.mubr.bf16.mxu0 0
        %2861 = vmatmul.mubr.bf16.gmra.mrb[0].mxu0 %v2420
        %v2862 = vpop.f32.mrb[0].mxu0
        %v2863 = vadd.f32 %v2395, %v2862
        %v2864 = vpop.f32.mrb[0].mxu0
        %v2865 = vadd.f32 %v2399, %v2864
        %v2866 = vpop.f32.mrb[0].mxu0
        %v2867 = vadd.f32 %v2395, %v2866
        %v2868 = vpop.f32.mrb[0].mxu0
        %v2869 = vadd.f32 %v2399, %v2868
        %2870 = vdwg.mxu0
        %2871 = vmatprep.subr.bf16.mxu0 %v2621
        %2872 = vmatpush1.bf16.msra.mxu0 %v2620
        %2873 = vmatprep.subr.bf16.mxu0 %v2629
        %2874 = vmatpush1.bf16.msra.mxu0 %v2628
        %2875 = vmatprep.subr.bf16.mxu0 %v2637
        %2876 = vmatpush1.bf16.msra.mxu0 %v2636
        %2877 = vmatprep.subr.bf16.mxu0 %v2645
        %2878 = vmatpush1.bf16.msra.mxu0 %v2644
        %2879 = vmatprep.subr.bf16.mxu0 %v2653
        %2880 = vmatpush1.bf16.msra.mxu0 %v2652
        %2881 = vmatprep.subr.bf16.mxu0 %v2661
        %2882 = vmatpush1.bf16.msra.mxu0 %v2660
        %2883 = vmatprep.subr.bf16.mxu0 %v2669
        %2884 = vmatpush1.bf16.msra.mxu0 %v2668
        %2885 = vmatprep.subr.bf16.mxu0 %v2677
        %2886 = vmatpush1.bf16.msra.mxu0 %v2676
        %2887 = vmatprep.subr.bf16.mxu0 0
        %2888 = vmatpush1.bf16.msra.mxu0 0
        %2889 = vmatprep.subr.bf16.mxu0 0
        %2890 = vmatpush1.bf16.msra.mxu0 0
        %2891 = vmatprep.subr.bf16.mxu0 0
        %2892 = vmatpush1.bf16.msra.mxu0 0
        %2893 = vmatprep.subr.bf16.mxu0 0
        %2894 = vmatpush1.bf16.msra.mxu0 0
        %2895 = vmatprep.subr.bf16.mxu0 0
        %2896 = vmatpush1.bf16.msra.mxu0 0
        %2897 = vmatprep.subr.bf16.mxu0 0
        %2898 = vmatpush1.bf16.msra.mxu0 0
        %2899 = vmatprep.subr.bf16.mxu0 0
        %2900 = vmatpush1.bf16.msra.mxu0 0
        %2901 = vmatprep.subr.bf16.mxu0 0
        %2902 = vmatpush1.bf16.msra.mxu0 0
        %2903 = vmatprep.mubr.bf16.mxu0 0
        %2904 = vmatmul.mubr.bf16.gmra.mrb[0].mxu0 %v2420
        %v2905 = vpop.f32.mrb[0].mxu0
        %v2906 = vadd.f32 %v2403, %v2905
        %v2907 = vpop.f32.mrb[0].mxu0
        %v2908 = vadd.f32 %v2407, %v2907
        %v2909 = vpop.f32.mrb[0].mxu0
        %v2910 = vadd.f32 %v2403, %v2909
        %v2911 = vpop.f32.mrb[0].mxu0
        %v2912 = vadd.f32 %v2407, %v2911
        %2913 = vdwg.mxu0
        %2914 = vst [vmem:[#allocation4] sm:$0xff] %v2777
        %2915 = vst [vmem:[#allocation4 + $0x8] sm:$0xff] %v2779
        %2916 = vst [vmem:[#allocation4 + $0x10] sm:$0xff] %v2820
        %2917 = vst [vmem:[#allocation4 + $0x18] sm:$0xff] %v2822
        %2918 = vst [vmem:[#allocation4 + $0x20] sm:$0xff] %v2781
        %2919 = vst [vmem:[#allocation4 + $0x28] sm:$0xff] %v2783
        %2920 = vst [vmem:[#allocation4 + $0x30] sm:$0xff] %v2824
        %2921 = vst [vmem:[#allocation4 + $0x38] sm:$0xff] %v2826
        %2922 = vst [vmem:[#allocation5] sm:$0xff] %v2863
        %2923 = vst [vmem:[#allocation5 + $0x8] sm:$0xff] %v2865
        %2924 = vst [vmem:[#allocation5 + $0x10] sm:$0xff] %v2906
        %2925 = vst [vmem:[#allocation5 + $0x18] sm:$0xff] %v2908
        %2926 = vst [vmem:[#allocation5 + $0x20] sm:$0xff] %v2867
        %2927 = vst [vmem:[#allocation5 + $0x28] sm:$0xff] %v2869
        %2928 = vst [vmem:[#allocation5 + $0x30] sm:$0xff] %v2910
        %2929 = vst [vmem:[#allocation5 + $0x38] sm:$0xff] %v2912
        %2930 = vst [vmem:[#allocation6] sm:$0xff] 0.0
        %2931 = vst [vmem:[#allocation6 + $0x8] sm:$0xff] 0.0
        %2932 = vst [vmem:[#allocation7] sm:$0xff] 0.0
        %2933 = vst [vmem:[#allocation7 + $0x8] sm:$0xff] 0.0
        // While loop
        $region85: #{multi_encoder_forward.1} parent=51 // loop_pre_header
          _
        $region86: #{multi_encoder_forward.1} parent=51 // loop_header
          %s2935 = sphi 0, %s2937
          %p2936 = scmp.ge.s32.totalorder %s2935, %s561
          %v2940 = vphi 0.0, %v4008
          %v2941 = vphi 0.0, %v4009
          %v2942 = vphi 0.0, %v4004
          %v2943 = vphi 0.0, %v4005
        $region87: #{multi_encoder_forward.1} parent=51 // loop_header_branch
          %2939 = sbr.rel (%p2936) target = $region91
        $region88: #{multi_encoder_forward.1} parent=51 // loop_body
          %s2944 = ssub.s32 %s561, 1
          %s2945 = ssub.s32 %s2944, %s2935
          %v2946 = vpack.c.bf16 %v2940, %v2940
          %v2947 = vpack.c.bf16 %v2941, %v2941
          %v2948 = vld [vmem:[%s482] sm:$0xff]
          %v2949 = vld [vmem:[%s482 + $0x8] sm:$0xff]
          %v2950 = vld [vmem:[%s482 + $0x10] sm:$0xff]
          %v2951 = vld [vmem:[%s482 + $0x18] sm:$0xff]
          %v2952 = vld [vmem:[%s482 + $0x20] sm:$0xff]
          %v2953 = vld [vmem:[%s482 + $0x28] sm:$0xff]
          %v2954 = vld [vmem:[%s482 + $0x30] sm:$0xff]
          %v2955 = vld [vmem:[%s482 + $0x38] sm:$0xff]
          %v2956 = vld [vmem:[%s482 + $0x40] sm:$0xff]
          %v2957 = vld [vmem:[%s482 + $0x48] sm:$0xff]
          %v2958 = vld [vmem:[%s482 + $0x50] sm:$0xff]
          %v2959 = vld [vmem:[%s482 + $0x58] sm:$0xff]
          %v2960 = vld [vmem:[%s482 + $0x60] sm:$0xff]
          %v2961 = vld [vmem:[%s482 + $0x68] sm:$0xff]
          %v2962 = vld [vmem:[%s482 + $0x70] sm:$0xff]
          %v2963 = vld [vmem:[%s482 + $0x78] sm:$0xff]
          %v2964 = vld [vmem:[%s482 + $0x80] sm:$0xff]
          %v2965 = vld [vmem:[%s482 + $0x88] sm:$0xff]
          %v2966 = vld [vmem:[%s482 + $0x90] sm:$0xff]
          %v2967 = vld [vmem:[%s482 + $0x98] sm:$0xff]
          %v2968 = vld [vmem:[%s482 + $0xa0] sm:$0xff]
          %v2969 = vld [vmem:[%s482 + $0xa8] sm:$0xff]
          %v2970 = vld [vmem:[%s482 + $0xb0] sm:$0xff]
          %v2971 = vld [vmem:[%s482 + $0xb8] sm:$0xff]
          %v2972 = vld [vmem:[%s482 + $0xc0] sm:$0xff]
          %v2973 = vld [vmem:[%s482 + $0xc8] sm:$0xff]
          %v2974 = vld [vmem:[%s482 + $0xd0] sm:$0xff]
          %v2975 = vld [vmem:[%s482 + $0xd8] sm:$0xff]
          %v2976 = vld [vmem:[%s482 + $0xe0] sm:$0xff]
          %v2977 = vld [vmem:[%s482 + $0xe8] sm:$0xff]
          %v2978 = vld [vmem:[%s482 + $0xf0] sm:$0xff]
          %v2979 = vld [vmem:[%s482 + $0xf8] sm:$0xff]
          %v2980 = vld [vmem:[%s482 + $0x100] sm:$0xff]
          %v2981 = vld [vmem:[%s482 + $0x108] sm:$0xff]
          %v2982 = vld [vmem:[%s482 + $0x110] sm:$0xff]
          %v2983 = vld [vmem:[%s482 + $0x118] sm:$0xff]
          %v2984 = vld [vmem:[%s482 + $0x120] sm:$0xff]
          %v2985 = vld [vmem:[%s482 + $0x128] sm:$0xff]
          %v2986 = vld [vmem:[%s482 + $0x130] sm:$0xff]
          %v2987 = vld [vmem:[%s482 + $0x138] sm:$0xff]
          %v2988 = vld [vmem:[%s482 + $0x140] sm:$0xff]
          %v2989 = vld [vmem:[%s482 + $0x148] sm:$0xff]
          %v2990 = vld [vmem:[%s482 + $0x150] sm:$0xff]
          %v2991 = vld [vmem:[%s482 + $0x158] sm:$0xff]
          %v2992 = vld [vmem:[%s482 + $0x160] sm:$0xff]
          %v2993 = vld [vmem:[%s482 + $0x168] sm:$0xff]
          %v2994 = vld [vmem:[%s482 + $0x170] sm:$0xff]
          %v2995 = vld [vmem:[%s482 + $0x178] sm:$0xff]
          %v2996 = vld [vmem:[%s482 + $0x180] sm:$0xff]
          %v2997 = vld [vmem:[%s482 + $0x188] sm:$0xff]
          %v2998 = vld [vmem:[%s482 + $0x190] sm:$0xff]
          %v2999 = vld [vmem:[%s482 + $0x198] sm:$0xff]
          %v3000 = vld [vmem:[%s482 + $0x1a0] sm:$0xff]
          %v3001 = vld [vmem:[%s482 + $0x1a8] sm:$0xff]
          %v3002 = vld [vmem:[%s482 + $0x1b0] sm:$0xff]
          %v3003 = vld [vmem:[%s482 + $0x1b8] sm:$0xff]
          %v3004 = vld [vmem:[%s482 + $0x1c0] sm:$0xff]
          %v3005 = vld [vmem:[%s482 + $0x1c8] sm:$0xff]
          %v3006 = vld [vmem:[%s482 + $0x1d0] sm:$0xff]
          %v3007 = vld [vmem:[%s482 + $0x1d8] sm:$0xff]
          %v3008 = vld [vmem:[%s482 + $0x1e0] sm:$0xff]
          %v3009 = vld [vmem:[%s482 + $0x1e8] sm:$0xff]
          %v3010 = vld [vmem:[%s482 + $0x1f0] sm:$0xff]
          %v3011 = vld [vmem:[%s482 + $0x1f8] sm:$0xff]
          %v3012 = vld [vmem:[%s482 + $0x200] sm:$0xff]
          %v3013 = vld [vmem:[%s482 + $0x208] sm:$0xff]
          %v3014 = vld [vmem:[%s482 + $0x210] sm:$0xff]
          %v3015 = vld [vmem:[%s482 + $0x218] sm:$0xff]
          %v3016 = vld [vmem:[%s482 + $0x220] sm:$0xff]
          %v3017 = vld [vmem:[%s482 + $0x228] sm:$0xff]
          %v3018 = vld [vmem:[%s482 + $0x230] sm:$0xff]
          %v3019 = vld [vmem:[%s482 + $0x238] sm:$0xff]
          %v3020 = vld [vmem:[%s482 + $0x240] sm:$0xff]
          %v3021 = vld [vmem:[%s482 + $0x248] sm:$0xff]
          %v3022 = vld [vmem:[%s482 + $0x250] sm:$0xff]
          %v3023 = vld [vmem:[%s482 + $0x258] sm:$0xff]
          %v3024 = vld [vmem:[%s482 + $0x260] sm:$0xff]
          %v3025 = vld [vmem:[%s482 + $0x268] sm:$0xff]
          %v3026 = vld [vmem:[%s482 + $0x270] sm:$0xff]
          %v3027 = vld [vmem:[%s482 + $0x278] sm:$0xff]
          %v3028 = vld [vmem:[%s482 + $0x280] sm:$0xff]
          %v3029 = vld [vmem:[%s482 + $0x288] sm:$0xff]
          %v3030 = vld [vmem:[%s482 + $0x290] sm:$0xff]
          %v3031 = vld [vmem:[%s482 + $0x298] sm:$0xff]
          %v3032 = vld [vmem:[%s482 + $0x2a0] sm:$0xff]
          %v3033 = vld [vmem:[%s482 + $0x2a8] sm:$0xff]
          %v3034 = vld [vmem:[%s482 + $0x2b0] sm:$0xff]
          %v3035 = vld [vmem:[%s482 + $0x2b8] sm:$0xff]
          %v3036 = vld [vmem:[%s482 + $0x2c0] sm:$0xff]
          %v3037 = vld [vmem:[%s482 + $0x2c8] sm:$0xff]
          %v3038 = vld [vmem:[%s482 + $0x2d0] sm:$0xff]
          %v3039 = vld [vmem:[%s482 + $0x2d8] sm:$0xff]
          %v3040 = vld [vmem:[%s482 + $0x2e0] sm:$0xff]
          %v3041 = vld [vmem:[%s482 + $0x2e8] sm:$0xff]
          %v3042 = vld [vmem:[%s482 + $0x2f0] sm:$0xff]
          %v3043 = vld [vmem:[%s482 + $0x2f8] sm:$0xff]
          %v3044 = vld [vmem:[%s482 + $0x300] sm:$0xff]
          %v3045 = vld [vmem:[%s482 + $0x308] sm:$0xff]
          %v3046 = vld [vmem:[%s482 + $0x310] sm:$0xff]
          %v3047 = vld [vmem:[%s482 + $0x318] sm:$0xff]
          %v3048 = vld [vmem:[%s482 + $0x320] sm:$0xff]
          %v3049 = vld [vmem:[%s482 + $0x328] sm:$0xff]
          %v3050 = vld [vmem:[%s482 + $0x330] sm:$0xff]
          %v3051 = vld [vmem:[%s482 + $0x338] sm:$0xff]
          %v3052 = vld [vmem:[%s482 + $0x340] sm:$0xff]
          %v3053 = vld [vmem:[%s482 + $0x348] sm:$0xff]
          %v3054 = vld [vmem:[%s482 + $0x350] sm:$0xff]
          %v3055 = vld [vmem:[%s482 + $0x358] sm:$0xff]
          %v3056 = vld [vmem:[%s482 + $0x360] sm:$0xff]
          %v3057 = vld [vmem:[%s482 + $0x368] sm:$0xff]
          %v3058 = vld [vmem:[%s482 + $0x370] sm:$0xff]
          %v3059 = vld [vmem:[%s482 + $0x378] sm:$0xff]
          %v3060 = vld [vmem:[%s482 + $0x380] sm:$0xff]
          %v3061 = vld [vmem:[%s482 + $0x388] sm:$0xff]
          %v3062 = vld [vmem:[%s482 + $0x390] sm:$0xff]
          %v3063 = vld [vmem:[%s482 + $0x398] sm:$0xff]
          %v3064 = vld [vmem:[%s482 + $0x3a0] sm:$0xff]
          %v3065 = vld [vmem:[%s482 + $0x3a8] sm:$0xff]
          %v3066 = vld [vmem:[%s482 + $0x3b0] sm:$0xff]
          %v3067 = vld [vmem:[%s482 + $0x3b8] sm:$0xff]
          %v3068 = vld [vmem:[%s482 + $0x3c0] sm:$0xff]
          %v3069 = vld [vmem:[%s482 + $0x3c8] sm:$0xff]
          %v3070 = vld [vmem:[%s482 + $0x3d0] sm:$0xff]
          %v3071 = vld [vmem:[%s482 + $0x3d8] sm:$0xff]
          %v3072 = vld [vmem:[%s482 + $0x3e0] sm:$0xff]
          %v3073 = vld [vmem:[%s482 + $0x3e8] sm:$0xff]
          %v3074 = vld [vmem:[%s482 + $0x3f0] sm:$0xff]
          %v3075 = vld [vmem:[%s482 + $0x3f8] sm:$0xff]
          %v3204 = vunpack.c.l.b16 %v2948
          %v3205 = vunpack.c.h.b16 %v2948
          %v3206 = vunpack.c.l.b16 %v2949
          %v3207 = vunpack.c.h.b16 %v2949
          %v3208 = vunpack.c.l.b16 %v2950
          %v3209 = vunpack.c.h.b16 %v2950
          %v3210 = vunpack.c.l.b16 %v2951
          %v3211 = vunpack.c.h.b16 %v2951
          %v3212 = vunpack.c.l.b16 %v2952
          %v3213 = vunpack.c.h.b16 %v2952
          %v3214 = vunpack.c.l.b16 %v2953
          %v3215 = vunpack.c.h.b16 %v2953
          %v3216 = vunpack.c.l.b16 %v2954
          %v3217 = vunpack.c.h.b16 %v2954
          %v3218 = vunpack.c.l.b16 %v2955
          %v3219 = vunpack.c.h.b16 %v2955
          %v3220 = vunpack.c.l.b16 %v2956
          %v3221 = vunpack.c.h.b16 %v2956
          %v3222 = vunpack.c.l.b16 %v2957
          %v3223 = vunpack.c.h.b16 %v2957
          %v3224 = vunpack.c.l.b16 %v2958
          %v3225 = vunpack.c.h.b16 %v2958
          %v3226 = vunpack.c.l.b16 %v2959
          %v3227 = vunpack.c.h.b16 %v2959
          %v3228 = vunpack.c.l.b16 %v2960
          %v3229 = vunpack.c.h.b16 %v2960
          %v3230 = vunpack.c.l.b16 %v2961
          %v3231 = vunpack.c.h.b16 %v2961
          %v3232 = vunpack.c.l.b16 %v2962
          %v3233 = vunpack.c.h.b16 %v2962
          %v3234 = vunpack.c.l.b16 %v2963
          %v3235 = vunpack.c.h.b16 %v2963
          %v3236 = vunpack.c.l.b16 %v2964
          %v3237 = vunpack.c.h.b16 %v2964
          %v3238 = vunpack.c.l.b16 %v2965
          %v3239 = vunpack.c.h.b16 %v2965
          %v3240 = vunpack.c.l.b16 %v2966
          %v3241 = vunpack.c.h.b16 %v2966
          %v3242 = vunpack.c.l.b16 %v2967
          %v3243 = vunpack.c.h.b16 %v2967
          %v3244 = vunpack.c.l.b16 %v2968
          %v3245 = vunpack.c.h.b16 %v2968
          %v3246 = vunpack.c.l.b16 %v2969
          %v3247 = vunpack.c.h.b16 %v2969
          %v3248 = vunpack.c.l.b16 %v2970
          %v3249 = vunpack.c.h.b16 %v2970
          %v3250 = vunpack.c.l.b16 %v2971
          %v3251 = vunpack.c.h.b16 %v2971
          %v3252 = vunpack.c.l.b16 %v2972
          %v3253 = vunpack.c.h.b16 %v2972
          %v3254 = vunpack.c.l.b16 %v2973
          %v3255 = vunpack.c.h.b16 %v2973
          %v3256 = vunpack.c.l.b16 %v2974
          %v3257 = vunpack.c.h.b16 %v2974
          %v3258 = vunpack.c.l.b16 %v2975
          %v3259 = vunpack.c.h.b16 %v2975
          %v3260 = vunpack.c.l.b16 %v2976
          %v3261 = vunpack.c.h.b16 %v2976
          %v3262 = vunpack.c.l.b16 %v2977
          %v3263 = vunpack.c.h.b16 %v2977
          %v3264 = vunpack.c.l.b16 %v2978
          %v3265 = vunpack.c.h.b16 %v2978
          %v3266 = vunpack.c.l.b16 %v2979
          %v3267 = vunpack.c.h.b16 %v2979
          %v3268 = vunpack.c.l.b16 %v2980
          %v3269 = vunpack.c.h.b16 %v2980
          %v3270 = vunpack.c.l.b16 %v2981
          %v3271 = vunpack.c.h.b16 %v2981
          %v3272 = vunpack.c.l.b16 %v2982
          %v3273 = vunpack.c.h.b16 %v2982
          %v3274 = vunpack.c.l.b16 %v2983
          %v3275 = vunpack.c.h.b16 %v2983
          %v3276 = vunpack.c.l.b16 %v2984
          %v3277 = vunpack.c.h.b16 %v2984
          %v3278 = vunpack.c.l.b16 %v2985
          %v3279 = vunpack.c.h.b16 %v2985
          %v3280 = vunpack.c.l.b16 %v2986
          %v3281 = vunpack.c.h.b16 %v2986
          %v3282 = vunpack.c.l.b16 %v2987
          %v3283 = vunpack.c.h.b16 %v2987
          %v3284 = vunpack.c.l.b16 %v2988
          %v3285 = vunpack.c.h.b16 %v2988
          %v3286 = vunpack.c.l.b16 %v2989
          %v3287 = vunpack.c.h.b16 %v2989
          %v3288 = vunpack.c.l.b16 %v2990
          %v3289 = vunpack.c.h.b16 %v2990
          %v3290 = vunpack.c.l.b16 %v2991
          %v3291 = vunpack.c.h.b16 %v2991
          %v3292 = vunpack.c.l.b16 %v2992
          %v3293 = vunpack.c.h.b16 %v2992
          %v3294 = vunpack.c.l.b16 %v2993
          %v3295 = vunpack.c.h.b16 %v2993
          %v3296 = vunpack.c.l.b16 %v2994
          %v3297 = vunpack.c.h.b16 %v2994
          %v3298 = vunpack.c.l.b16 %v2995
          %v3299 = vunpack.c.h.b16 %v2995
          %v3300 = vunpack.c.l.b16 %v2996
          %v3301 = vunpack.c.h.b16 %v2996
          %v3302 = vunpack.c.l.b16 %v2997
          %v3303 = vunpack.c.h.b16 %v2997
          %v3304 = vunpack.c.l.b16 %v2998
          %v3305 = vunpack.c.h.b16 %v2998
          %v3306 = vunpack.c.l.b16 %v2999
          %v3307 = vunpack.c.h.b16 %v2999
          %v3308 = vunpack.c.l.b16 %v3000
          %v3309 = vunpack.c.h.b16 %v3000
          %v3310 = vunpack.c.l.b16 %v3001
          %v3311 = vunpack.c.h.b16 %v3001
          %v3312 = vunpack.c.l.b16 %v3002
          %v3313 = vunpack.c.h.b16 %v3002
          %v3314 = vunpack.c.l.b16 %v3003
          %v3315 = vunpack.c.h.b16 %v3003
          %v3316 = vunpack.c.l.b16 %v3004
          %v3317 = vunpack.c.h.b16 %v3004
          %v3318 = vunpack.c.l.b16 %v3005
          %v3319 = vunpack.c.h.b16 %v3005
          %v3320 = vunpack.c.l.b16 %v3006
          %v3321 = vunpack.c.h.b16 %v3006
          %v3322 = vunpack.c.l.b16 %v3007
          %v3323 = vunpack.c.h.b16 %v3007
          %v3324 = vunpack.c.l.b16 %v3008
          %v3325 = vunpack.c.h.b16 %v3008
          %v3326 = vunpack.c.l.b16 %v3009
          %v3327 = vunpack.c.h.b16 %v3009
          %v3328 = vunpack.c.l.b16 %v3010
          %v3329 = vunpack.c.h.b16 %v3010
          %v3330 = vunpack.c.l.b16 %v3011
          %v3331 = vunpack.c.h.b16 %v3011
          %v3332 = vunpack.c.l.b16 %v3012
          %v3333 = vunpack.c.h.b16 %v3012
          %v3334 = vunpack.c.l.b16 %v3013
          %v3335 = vunpack.c.h.b16 %v3013
          %v3336 = vunpack.c.l.b16 %v3014
          %v3337 = vunpack.c.h.b16 %v3014
          %v3338 = vunpack.c.l.b16 %v3015
          %v3339 = vunpack.c.h.b16 %v3015
          %v3340 = vunpack.c.l.b16 %v3016
          %v3341 = vunpack.c.h.b16 %v3016
          %v3342 = vunpack.c.l.b16 %v3017
          %v3343 = vunpack.c.h.b16 %v3017
          %v3344 = vunpack.c.l.b16 %v3018
          %v3345 = vunpack.c.h.b16 %v3018
          %v3346 = vunpack.c.l.b16 %v3019
          %v3347 = vunpack.c.h.b16 %v3019
          %v3348 = vunpack.c.l.b16 %v3020
          %v3349 = vunpack.c.h.b16 %v3020
          %v3350 = vunpack.c.l.b16 %v3021
          %v3351 = vunpack.c.h.b16 %v3021
          %v3352 = vunpack.c.l.b16 %v3022
          %v3353 = vunpack.c.h.b16 %v3022
          %v3354 = vunpack.c.l.b16 %v3023
          %v3355 = vunpack.c.h.b16 %v3023
          %v3356 = vunpack.c.l.b16 %v3024
          %v3357 = vunpack.c.h.b16 %v3024
          %v3358 = vunpack.c.l.b16 %v3025
          %v3359 = vunpack.c.h.b16 %v3025
          %v3360 = vunpack.c.l.b16 %v3026
          %v3361 = vunpack.c.h.b16 %v3026
          %v3362 = vunpack.c.l.b16 %v3027
          %v3363 = vunpack.c.h.b16 %v3027
          %v3364 = vunpack.c.l.b16 %v3028
          %v3365 = vunpack.c.h.b16 %v3028
          %v3366 = vunpack.c.l.b16 %v3029
          %v3367 = vunpack.c.h.b16 %v3029
          %v3368 = vunpack.c.l.b16 %v3030
          %v3369 = vunpack.c.h.b16 %v3030
          %v3370 = vunpack.c.l.b16 %v3031
          %v3371 = vunpack.c.h.b16 %v3031
          %v3372 = vunpack.c.l.b16 %v3032
          %v3373 = vunpack.c.h.b16 %v3032
          %v3374 = vunpack.c.l.b16 %v3033
          %v3375 = vunpack.c.h.b16 %v3033
          %v3376 = vunpack.c.l.b16 %v3034
          %v3377 = vunpack.c.h.b16 %v3034
          %v3378 = vunpack.c.l.b16 %v3035
          %v3379 = vunpack.c.h.b16 %v3035
          %v3380 = vunpack.c.l.b16 %v3036
          %v3381 = vunpack.c.h.b16 %v3036
          %v3382 = vunpack.c.l.b16 %v3037
          %v3383 = vunpack.c.h.b16 %v3037
          %v3384 = vunpack.c.l.b16 %v3038
          %v3385 = vunpack.c.h.b16 %v3038
          %v3386 = vunpack.c.l.b16 %v3039
          %v3387 = vunpack.c.h.b16 %v3039
          %v3388 = vunpack.c.l.b16 %v3040
          %v3389 = vunpack.c.h.b16 %v3040
          %v3390 = vunpack.c.l.b16 %v3041
          %v3391 = vunpack.c.h.b16 %v3041
          %v3392 = vunpack.c.l.b16 %v3042
          %v3393 = vunpack.c.h.b16 %v3042
          %v3394 = vunpack.c.l.b16 %v3043
          %v3395 = vunpack.c.h.b16 %v3043
          %v3396 = vunpack.c.l.b16 %v3044
          %v3397 = vunpack.c.h.b16 %v3044
          %v3398 = vunpack.c.l.b16 %v3045
          %v3399 = vunpack.c.h.b16 %v3045
          %v3400 = vunpack.c.l.b16 %v3046
          %v3401 = vunpack.c.h.b16 %v3046
          %v3402 = vunpack.c.l.b16 %v3047
          %v3403 = vunpack.c.h.b16 %v3047
          %v3404 = vunpack.c.l.b16 %v3048
          %v3405 = vunpack.c.h.b16 %v3048
          %v3406 = vunpack.c.l.b16 %v3049
          %v3407 = vunpack.c.h.b16 %v3049
          %v3408 = vunpack.c.l.b16 %v3050
          %v3409 = vunpack.c.h.b16 %v3050
          %v3410 = vunpack.c.l.b16 %v3051
          %v3411 = vunpack.c.h.b16 %v3051
          %v3412 = vunpack.c.l.b16 %v3052
          %v3413 = vunpack.c.h.b16 %v3052
          %v3414 = vunpack.c.l.b16 %v3053
          %v3415 = vunpack.c.h.b16 %v3053
          %v3416 = vunpack.c.l.b16 %v3054
          %v3417 = vunpack.c.h.b16 %v3054
          %v3418 = vunpack.c.l.b16 %v3055
          %v3419 = vunpack.c.h.b16 %v3055
          %v3420 = vunpack.c.l.b16 %v3056
          %v3421 = vunpack.c.h.b16 %v3056
          %v3422 = vunpack.c.l.b16 %v3057
          %v3423 = vunpack.c.h.b16 %v3057
          %v3424 = vunpack.c.l.b16 %v3058
          %v3425 = vunpack.c.h.b16 %v3058
          %v3426 = vunpack.c.l.b16 %v3059
          %v3427 = vunpack.c.h.b16 %v3059
          %v3428 = vunpack.c.l.b16 %v3060
          %v3429 = vunpack.c.h.b16 %v3060
          %v3430 = vunpack.c.l.b16 %v3061
          %v3431 = vunpack.c.h.b16 %v3061
          %v3432 = vunpack.c.l.b16 %v3062
          %v3433 = vunpack.c.h.b16 %v3062
          %v3434 = vunpack.c.l.b16 %v3063
          %v3435 = vunpack.c.h.b16 %v3063
          %v3436 = vunpack.c.l.b16 %v3064
          %v3437 = vunpack.c.h.b16 %v3064
          %v3438 = vunpack.c.l.b16 %v3065
          %v3439 = vunpack.c.h.b16 %v3065
          %v3440 = vunpack.c.l.b16 %v3066
          %v3441 = vunpack.c.h.b16 %v3066
          %v3442 = vunpack.c.l.b16 %v3067
          %v3443 = vunpack.c.h.b16 %v3067
          %v3444 = vunpack.c.l.b16 %v3068
          %v3445 = vunpack.c.h.b16 %v3068
          %v3446 = vunpack.c.l.b16 %v3069
          %v3447 = vunpack.c.h.b16 %v3069
          %v3448 = vunpack.c.l.b16 %v3070
          %v3449 = vunpack.c.h.b16 %v3070
          %v3450 = vunpack.c.l.b16 %v3071
          %v3451 = vunpack.c.h.b16 %v3071
          %v3452 = vunpack.c.l.b16 %v3072
          %v3453 = vunpack.c.h.b16 %v3072
          %v3454 = vunpack.c.l.b16 %v3073
          %v3455 = vunpack.c.h.b16 %v3073
          %v3456 = vunpack.c.l.b16 %v3074
          %v3457 = vunpack.c.h.b16 %v3074
          %v3458 = vunpack.c.l.b16 %v3075
          %v3459 = vunpack.c.h.b16 %v3075
          %v3460 = vpack.c.b16 %v3212, %v3204
          %v3461 = vpack.c.b16 %v3213, %v3205
          %v3462 = vpack.c.b16 %v3214, %v3206
          %v3463 = vpack.c.b16 %v3215, %v3207
          %v3464 = vpack.c.b16 %v3216, %v3208
          %v3465 = vpack.c.b16 %v3217, %v3209
          %v3466 = vpack.c.b16 %v3218, %v3210
          %v3467 = vpack.c.b16 %v3219, %v3211
          %v3468 = vpack.c.b16 %v3228, %v3220
          %v3469 = vpack.c.b16 %v3229, %v3221
          %v3470 = vpack.c.b16 %v3230, %v3222
          %v3471 = vpack.c.b16 %v3231, %v3223
          %v3472 = vpack.c.b16 %v3232, %v3224
          %v3473 = vpack.c.b16 %v3233, %v3225
          %v3474 = vpack.c.b16 %v3234, %v3226
          %v3475 = vpack.c.b16 %v3235, %v3227
          %v3476 = vpack.c.b16 %v3244, %v3236
          %v3477 = vpack.c.b16 %v3245, %v3237
          %v3478 = vpack.c.b16 %v3246, %v3238
          %v3479 = vpack.c.b16 %v3247, %v3239
          %v3480 = vpack.c.b16 %v3248, %v3240
          %v3481 = vpack.c.b16 %v3249, %v3241
          %v3482 = vpack.c.b16 %v3250, %v3242
          %v3483 = vpack.c.b16 %v3251, %v3243
          %v3484 = vpack.c.b16 %v3260, %v3252
          %v3485 = vpack.c.b16 %v3261, %v3253
          %v3486 = vpack.c.b16 %v3262, %v3254
          %v3487 = vpack.c.b16 %v3263, %v3255
          %v3488 = vpack.c.b16 %v3264, %v3256
          %v3489 = vpack.c.b16 %v3265, %v3257
          %v3490 = vpack.c.b16 %v3266, %v3258
          %v3491 = vpack.c.b16 %v3267, %v3259
          %v3492 = vpack.c.b16 %v3276, %v3268
          %v3493 = vpack.c.b16 %v3277, %v3269
          %v3494 = vpack.c.b16 %v3278, %v3270
          %v3495 = vpack.c.b16 %v3279, %v3271
          %v3496 = vpack.c.b16 %v3280, %v3272
          %v3497 = vpack.c.b16 %v3281, %v3273
          %v3498 = vpack.c.b16 %v3282, %v3274
          %v3499 = vpack.c.b16 %v3283, %v3275
          %v3500 = vpack.c.b16 %v3292, %v3284
          %v3501 = vpack.c.b16 %v3293, %v3285
          %v3502 = vpack.c.b16 %v3294, %v3286
          %v3503 = vpack.c.b16 %v3295, %v3287
          %v3504 = vpack.c.b16 %v3296, %v3288
          %v3505 = vpack.c.b16 %v3297, %v3289
          %v3506 = vpack.c.b16 %v3298, %v3290
          %v3507 = vpack.c.b16 %v3299, %v3291
          %v3508 = vpack.c.b16 %v3308, %v3300
          %v3509 = vpack.c.b16 %v3309, %v3301
          %v3510 = vpack.c.b16 %v3310, %v3302
          %v3511 = vpack.c.b16 %v3311, %v3303
          %v3512 = vpack.c.b16 %v3312, %v3304
          %v3513 = vpack.c.b16 %v3313, %v3305
          %v3514 = vpack.c.b16 %v3314, %v3306
          %v3515 = vpack.c.b16 %v3315, %v3307
          %v3516 = vpack.c.b16 %v3324, %v3316
          %v3517 = vpack.c.b16 %v3325, %v3317
          %v3518 = vpack.c.b16 %v3326, %v3318
          %v3519 = vpack.c.b16 %v3327, %v3319
          %v3520 = vpack.c.b16 %v3328, %v3320
          %v3521 = vpack.c.b16 %v3329, %v3321
          %v3522 = vpack.c.b16 %v3330, %v3322
          %v3523 = vpack.c.b16 %v3331, %v3323
          %v3524 = vpack.c.b16 %v3340, %v3332
          %v3525 = vpack.c.b16 %v3341, %v3333
          %v3526 = vpack.c.b16 %v3342, %v3334
          %v3527 = vpack.c.b16 %v3343, %v3335
          %v3528 = vpack.c.b16 %v3344, %v3336
          %v3529 = vpack.c.b16 %v3345, %v3337
          %v3530 = vpack.c.b16 %v3346, %v3338
          %v3531 = vpack.c.b16 %v3347, %v3339
          %v3532 = vpack.c.b16 %v3356, %v3348
          %v3533 = vpack.c.b16 %v3357, %v3349
          %v3534 = vpack.c.b16 %v3358, %v3350
          %v3535 = vpack.c.b16 %v3359, %v3351
          %v3536 = vpack.c.b16 %v3360, %v3352
          %v3537 = vpack.c.b16 %v3361, %v3353
          %v3538 = vpack.c.b16 %v3362, %v3354
          %v3539 = vpack.c.b16 %v3363, %v3355
          %v3540 = vpack.c.b16 %v3372, %v3364
          %v3541 = vpack.c.b16 %v3373, %v3365
          %v3542 = vpack.c.b16 %v3374, %v3366
          %v3543 = vpack.c.b16 %v3375, %v3367
          %v3544 = vpack.c.b16 %v3376, %v3368
          %v3545 = vpack.c.b16 %v3377, %v3369
          %v3546 = vpack.c.b16 %v3378, %v3370
          %v3547 = vpack.c.b16 %v3379, %v3371
          %v3548 = vpack.c.b16 %v3388, %v3380
          %v3549 = vpack.c.b16 %v3389, %v3381
          %v3550 = vpack.c.b16 %v3390, %v3382
          %v3551 = vpack.c.b16 %v3391, %v3383
          %v3552 = vpack.c.b16 %v3392, %v3384
          %v3553 = vpack.c.b16 %v3393, %v3385
          %v3554 = vpack.c.b16 %v3394, %v3386
          %v3555 = vpack.c.b16 %v3395, %v3387
          %v3556 = vpack.c.b16 %v3404, %v3396
          %v3557 = vpack.c.b16 %v3405, %v3397
          %v3558 = vpack.c.b16 %v3406, %v3398
          %v3559 = vpack.c.b16 %v3407, %v3399
          %v3560 = vpack.c.b16 %v3408, %v3400
          %v3561 = vpack.c.b16 %v3409, %v3401
          %v3562 = vpack.c.b16 %v3410, %v3402
          %v3563 = vpack.c.b16 %v3411, %v3403
          %v3564 = vpack.c.b16 %v3420, %v3412
          %v3565 = vpack.c.b16 %v3421, %v3413
          %v3566 = vpack.c.b16 %v3422, %v3414
          %v3567 = vpack.c.b16 %v3423, %v3415
          %v3568 = vpack.c.b16 %v3424, %v3416
          %v3569 = vpack.c.b16 %v3425, %v3417
          %v3570 = vpack.c.b16 %v3426, %v3418
          %v3571 = vpack.c.b16 %v3427, %v3419
          %v3572 = vpack.c.b16 %v3436, %v3428
          %v3573 = vpack.c.b16 %v3437, %v3429
          %v3574 = vpack.c.b16 %v3438, %v3430
          %v3575 = vpack.c.b16 %v3439, %v3431
          %v3576 = vpack.c.b16 %v3440, %v3432
          %v3577 = vpack.c.b16 %v3441, %v3433
          %v3578 = vpack.c.b16 %v3442, %v3434
          %v3579 = vpack.c.b16 %v3443, %v3435
          %v3580 = vpack.c.b16 %v3452, %v3444
          %v3581 = vpack.c.b16 %v3453, %v3445
          %v3582 = vpack.c.b16 %v3454, %v3446
          %v3583 = vpack.c.b16 %v3455, %v3447
          %v3584 = vpack.c.b16 %v3456, %v3448
          %v3585 = vpack.c.b16 %v3457, %v3449
          %v3586 = vpack.c.b16 %v3458, %v3450
          %v3587 = vpack.c.b16 %v3459, %v3451
          %3716 = vmatprep.subr.bf16.mxu0 %v3461
          %3717 = vmatpush1.bf16.msra.mxu0 %v3460
          %3718 = vmatprep.subr.bf16.mxu0 %v3469
          %3719 = vmatpush1.bf16.msra.mxu0 %v3468
          %3720 = vmatprep.subr.bf16.mxu0 %v3477
          %3721 = vmatpush1.bf16.msra.mxu0 %v3476
          %3722 = vmatprep.subr.bf16.mxu0 %v3485
          %3723 = vmatpush1.bf16.msra.mxu0 %v3484
          %3724 = vmatprep.subr.bf16.mxu0 %v3493
          %3725 = vmatpush1.bf16.msra.mxu0 %v3492
          %3726 = vmatprep.subr.bf16.mxu0 %v3501
          %3727 = vmatpush1.bf16.msra.mxu0 %v3500
          %3728 = vmatprep.subr.bf16.mxu0 %v3509
          %3729 = vmatpush1.bf16.msra.mxu0 %v3508
          %3730 = vmatprep.subr.bf16.mxu0 %v3517
          %3731 = vmatpush1.bf16.msra.mxu0 %v3516
          %3732 = vmatprep.subr.bf16.mxu0 %v3525
          %3733 = vmatpush1.bf16.msra.mxu0 %v3524
          %3734 = vmatprep.subr.bf16.mxu0 %v3533
          %3735 = vmatpush1.bf16.msra.mxu0 %v3532
          %3736 = vmatprep.subr.bf16.mxu0 %v3541
          %3737 = vmatpush1.bf16.msra.mxu0 %v3540
          %3738 = vmatprep.subr.bf16.mxu0 %v3549
          %3739 = vmatpush1.bf16.msra.mxu0 %v3548
          %3740 = vmatprep.subr.bf16.mxu0 %v3557
          %3741 = vmatpush1.bf16.msra.mxu0 %v3556
          %3742 = vmatprep.subr.bf16.mxu0 %v3565
          %3743 = vmatpush1.bf16.msra.mxu0 %v3564
          %3744 = vmatprep.subr.bf16.mxu0 %v3573
          %3745 = vmatpush1.bf16.msra.mxu0 %v3572
          %3746 = vmatprep.subr.bf16.mxu0 %v3581
          %3747 = vmatpush1.bf16.msra.mxu0 %v3580
          %3748 = vmatprep.mubr.bf16.mxu0 %v2947
          %3749 = vmatmul.mubr.bf16.gmra.mrb[0].mxu0 %v2946
          %v3750 = vpop.f32.mrb[0].mxu0
          %v3751 = vadd.f32 0.0, %v3750
          %v3752 = vpop.f32.mrb[0].mxu0
          %v3753 = vadd.f32 0.0, %v3752
          %v3754 = vpop.f32.mrb[0].mxu0
          %v3755 = vpop.f32.mrb[0].mxu0
          %3756 = vdwg.mxu0
          %3757 = vmatprep.subr.bf16.mxu0 %v3463
          %3758 = vmatpush1.bf16.msra.mxu0 %v3462
          %3759 = vmatprep.subr.bf16.mxu0 %v3471
          %3760 = vmatpush1.bf16.msra.mxu0 %v3470
          %3761 = vmatprep.subr.bf16.mxu0 %v3479
          %3762 = vmatpush1.bf16.msra.mxu0 %v3478
          %3763 = vmatprep.subr.bf16.mxu0 %v3487
          %3764 = vmatpush1.bf16.msra.mxu0 %v3486
          %3765 = vmatprep.subr.bf16.mxu0 %v3495
          %3766 = vmatpush1.bf16.msra.mxu0 %v3494
          %3767 = vmatprep.subr.bf16.mxu0 %v3503
          %3768 = vmatpush1.bf16.msra.mxu0 %v3502
          %3769 = vmatprep.subr.bf16.mxu0 %v3511
          %3770 = vmatpush1.bf16.msra.mxu0 %v3510
          %3771 = vmatprep.subr.bf16.mxu0 %v3519
          %3772 = vmatpush1.bf16.msra.mxu0 %v3518
          %3773 = vmatprep.subr.bf16.mxu0 %v3527
          %3774 = vmatpush1.bf16.msra.mxu0 %v3526
          %3775 = vmatprep.subr.bf16.mxu0 %v3535
          %3776 = vmatpush1.bf16.msra.mxu0 %v3534
          %3777 = vmatprep.subr.bf16.mxu0 %v3543
          %3778 = vmatpush1.bf16.msra.mxu0 %v3542
          %3779 = vmatprep.subr.bf16.mxu0 %v3551
          %3780 = vmatpush1.bf16.msra.mxu0 %v3550
          %3781 = vmatprep.subr.bf16.mxu0 %v3559
          %3782 = vmatpush1.bf16.msra.mxu0 %v3558
          %3783 = vmatprep.subr.bf16.mxu0 %v3567
          %3784 = vmatpush1.bf16.msra.mxu0 %v3566
          %3785 = vmatprep.subr.bf16.mxu0 %v3575
          %3786 = vmatpush1.bf16.msra.mxu0 %v3574
          %3787 = vmatprep.subr.bf16.mxu0 %v3583
          %3788 = vmatpush1.bf16.msra.mxu0 %v3582
          %3789 = vmatprep.mubr.bf16.mxu0 %v2947
          %3790 = vmatmul.mubr.bf16.gmra.mrb[0].mxu0 %v2946
          %v3791 = vpop.f32.mrb[0].mxu0
          %v3792 = vadd.f32 0.0, %v3791
          %v3793 = vpop.f32.mrb[0].mxu0
          %v3794 = vadd.f32 0.0, %v3793
          %v3795 = vpop.f32.mrb[0].mxu0
          %v3796 = vpop.f32.mrb[0].mxu0
          %3797 = vdwg.mxu0
          %3798 = vmatprep.subr.bf16.mxu0 %v3465
          %3799 = vmatpush1.bf16.msra.mxu0 %v3464
          %3800 = vmatprep.subr.bf16.mxu0 %v3473
          %3801 = vmatpush1.bf16.msra.mxu0 %v3472
          %3802 = vmatprep.subr.bf16.mxu0 %v3481
          %3803 = vmatpush1.bf16.msra.mxu0 %v3480
          %3804 = vmatprep.subr.bf16.mxu0 %v3489
          %3805 = vmatpush1.bf16.msra.mxu0 %v3488
          %3806 = vmatprep.subr.bf16.mxu0 %v3497
          %3807 = vmatpush1.bf16.msra.mxu0 %v3496
          %3808 = vmatprep.subr.bf16.mxu0 %v3505
          %3809 = vmatpush1.bf16.msra.mxu0 %v3504
          %3810 = vmatprep.subr.bf16.mxu0 %v3513
          %3811 = vmatpush1.bf16.msra.mxu0 %v3512
          %3812 = vmatprep.subr.bf16.mxu0 %v3521
          %3813 = vmatpush1.bf16.msra.mxu0 %v3520
          %3814 = vmatprep.subr.bf16.mxu0 %v3529
          %3815 = vmatpush1.bf16.msra.mxu0 %v3528
          %3816 = vmatprep.subr.bf16.mxu0 %v3537
          %3817 = vmatpush1.bf16.msra.mxu0 %v3536
          %3818 = vmatprep.subr.bf16.mxu0 %v3545
          %3819 = vmatpush1.bf16.msra.mxu0 %v3544
          %3820 = vmatprep.subr.bf16.mxu0 %v3553
          %3821 = vmatpush1.bf16.msra.mxu0 %v3552
          %3822 = vmatprep.subr.bf16.mxu0 %v3561
          %3823 = vmatpush1.bf16.msra.mxu0 %v3560
          %3824 = vmatprep.subr.bf16.mxu0 %v3569
          %3825 = vmatpush1.bf16.msra.mxu0 %v3568
          %3826 = vmatprep.subr.bf16.mxu0 %v3577
          %3827 = vmatpush1.bf16.msra.mxu0 %v3576
          %3828 = vmatprep.subr.bf16.mxu0 %v3585
          %3829 = vmatpush1.bf16.msra.mxu0 %v3584
          %3830 = vmatprep.mubr.bf16.mxu0 %v2947
          %3831 = vmatmul.mubr.bf16.gmra.mrb[0].mxu0 %v2946
          %v3832 = vpop.f32.mrb[0].mxu0
          %v3833 = vadd.f32 0.0, %v3832
          %v3834 = vpop.f32.mrb[0].mxu0
          %v3835 = vadd.f32 0.0, %v3834
          %v3836 = vpop.f32.mrb[0].mxu0
          %v3837 = vpop.f32.mrb[0].mxu0
          %3838 = vdwg.mxu0
          %3839 = vmatprep.subr.bf16.mxu0 %v3467
          %3840 = vmatpush1.bf16.msra.mxu0 %v3466
          %3841 = vmatprep.subr.bf16.mxu0 %v3475
          %3842 = vmatpush1.bf16.msra.mxu0 %v3474
          %3843 = vmatprep.subr.bf16.mxu0 %v3483
          %3844 = vmatpush1.bf16.msra.mxu0 %v3482
          %3845 = vmatprep.subr.bf16.mxu0 %v3491
          %3846 = vmatpush1.bf16.msra.mxu0 %v3490
          %3847 = vmatprep.subr.bf16.mxu0 %v3499
          %3848 = vmatpush1.bf16.msra.mxu0 %v3498
          %3849 = vmatprep.subr.bf16.mxu0 %v3507
          %3850 = vmatpush1.bf16.msra.mxu0 %v3506
          %3851 = vmatprep.subr.bf16.mxu0 %v3515
          %3852 = vmatpush1.bf16.msra.mxu0 %v3514
          %3853 = vmatprep.subr.bf16.mxu0 %v3523
          %3854 = vmatpush1.bf16.msra.mxu0 %v3522
          %3855 = vmatprep.subr.bf16.mxu0 %v3531
          %3856 = vmatpush1.bf16.msra.mxu0 %v3530
          %3857 = vmatprep.subr.bf16.mxu0 %v3539
          %3858 = vmatpush1.bf16.msra.mxu0 %v3538
          %3859 = vmatprep.subr.bf16.mxu0 %v3547
          %3860 = vmatpush1.bf16.msra.mxu0 %v3546
          %3861 = vmatprep.subr.bf16.mxu0 %v3555
          %3862 = vmatpush1.bf16.msra.mxu0 %v3554
          %3863 = vmatprep.subr.bf16.mxu0 %v3563
          %3864 = vmatpush1.bf16.msra.mxu0 %v3562
          %3865 = vmatprep.subr.bf16.mxu0 %v3571
          %3866 = vmatpush1.bf16.msra.mxu0 %v3570
          %3867 = vmatprep.subr.bf16.mxu0 %v3579
          %3868 = vmatpush1.bf16.msra.mxu0 %v3578
          %3869 = vmatprep.subr.bf16.mxu0 %v3587
          %3870 = vmatpush1.bf16.msra.mxu0 %v3586
          %3871 = vmatprep.mubr.bf16.mxu0 %v2947
          %3872 = vmatmul.mubr.bf16.gmra.mrb[0].mxu0 %v2946
          %v3873 = vpop.f32.mrb[0].mxu0
          %v3874 = vadd.f32 0.0, %v3873
          %v3875 = vpop.f32.mrb[0].mxu0
          %v3876 = vadd.f32 0.0, %v3875
          %v3877 = vpop.f32.mrb[0].mxu0
          %v3878 = vpop.f32.mrb[0].mxu0
          %3879 = vdwg.mxu0
          %s3880 = sshra.s32 %s2935, 3
          %s3881 = sand.u32 %s2935, 7
          %s3882 = sshra.s32 %s2935, 3
          %s3883 = sand.u32 %s2935, 7
          %s3884 = smul.u32 %s3880, 4
          %s3885 = smul.u32 %s3884, 8
          %s3886 = sadd.s32 %s3885, %s3883
          %s3887 = scalar_lea.vmem [#allocation4], %s3886
          %v3888 = vld [vmem:[%s3887] ss:$8 sm:$0xf]
          %s3889 = sshra.s32 %s2945, 3
          %s3890 = sand.u32 %s2945, 7
          %s3891 = sshra.s32 %s2945, 3
          %s3892 = sand.u32 %s2945, 7
          %s3893 = smul.u32 %s3889, 4
          %s3894 = smul.u32 %s3893, 8
          %s3895 = sadd.s32 %s3894, %s3892
          %s3896 = scalar_lea.vmem [#allocation5], %s3895
          %v3897 = vld [vmem:[%s3896] ss:$8 sm:$0xf]
          %v3899 = vlaneseq
          %v3900 = vshrl.u32 %v3899, 7
          %v3901 = vsub.s32 0, %v3900
          %v3902 = vrot.slane %v3888, %v3901
          %v3903 = vlaneseq
          %v3904 = vshrl.u32 %v3903, 7
          %v3905 = vsub.s32 1, %v3904
          %v3906 = vrot.slane %v3888, %v3905
          %v3907 = vlaneseq
          %v3908 = vshrl.u32 %v3907, 7
          %v3909 = vsub.s32 2, %v3908
          %v3910 = vrot.slane %v3888, %v3909
          %v3911 = vlaneseq
          %v3912 = vshrl.u32 %v3911, 7
          %v3913 = vsub.s32 3, %v3912
          %v3914 = vrot.slane %v3888, %v3913
          %v3920 = vlaneseq
          %v3921 = vshrl.u32 %v3920, 7
          %v3922 = vsub.s32 0, %v3921
          %v3923 = vrot.slane %v3897, %v3922
          %v3924 = vlaneseq
          %v3925 = vshrl.u32 %v3924, 7
          %v3926 = vsub.s32 1, %v3925
          %v3927 = vrot.slane %v3897, %v3926
          %v3928 = vlaneseq
          %v3929 = vshrl.u32 %v3928, 7
          %v3930 = vsub.s32 2, %v3929
          %v3931 = vrot.slane %v3897, %v3930
          %v3932 = vlaneseq
          %v3933 = vshrl.u32 %v3932, 7
          %v3934 = vsub.s32 3, %v3933
          %v3935 = vrot.slane %v3897, %v3934
          %v3940 = vadd.f32 %v3902, %v3751
          %v3941 = vadd.f32 %v3906, %v3753
          %v3942 = vadd.f32 %v3910, %v3792
          %v3943 = vadd.f32 %v3914, %v3794
          %v3944 = vadd.f32 %v3923, %v3833
          %v3945 = vadd.f32 %v3927, %v3835
          %v3946 = vadd.f32 %v3931, %v3874
          %v3947 = vadd.f32 %v3935, %v3876
          %v3948 = vxor.u32 %v3940, 2147483648
          %v3949 = vxor.u32 %v3941, 2147483648
          %v3950 = vxor.u32 %v3942, 2147483648
          %v3951 = vxor.u32 %v3943, 2147483648
          %v3952 = vxor.u32 %v3944, 2147483648
          %v3953 = vxor.u32 %v3945, 2147483648
          %v3954 = vxor.u32 %v3946, 2147483648
          %v3955 = vxor.u32 %v3947, 2147483648
          %v3956 = vmul.f32 %v3948, 1.442695
          %v3957 = vpow.pop %v3956
          %v3958 = vmul.f32 %v3949, 1.442695
          %v3959 = vpow.pop %v3958
          %v3960 = vmul.f32 %v3950, 1.442695
          %v3961 = vpow.pop %v3960
          %v3962 = vmul.f32 %v3951, 1.442695
          %v3963 = vpow.pop %v3962
          %v3964 = vmul.f32 %v3952, 1.442695
          %v3965 = vpow.pop %v3964
          %v3966 = vmul.f32 %v3953, 1.442695
          %v3967 = vpow.pop %v3966
          %v3968 = vmul.f32 %v3954, 1.442695
          %v3969 = vpow.pop %v3968
          %v3970 = vmul.f32 %v3955, 1.442695
          %v3971 = vpow.pop %v3970
          %v3972 = vadd.f32 %v3957, 1.0
          %v3973 = vadd.f32 %v3959, 1.0
          %v3974 = vadd.f32 %v3961, 1.0
          %v3975 = vadd.f32 %v3963, 1.0
          %v3976 = vadd.f32 %v3965, 1.0
          %v3977 = vadd.f32 %v3967, 1.0
          %v3978 = vadd.f32 %v3969, 1.0
          %v3979 = vadd.f32 %v3971, 1.0
          %v3980 = vrcp.pop %v3972
          %v3981 = vmul.f32 1.0, %v3980
          %v3982 = vrcp.pop %v3973
          %v3983 = vmul.f32 1.0, %v3982
          %v3984 = vrcp.pop %v3974
          %v3985 = vmul.f32 1.0, %v3984
          %v3986 = vrcp.pop %v3975
          %v3987 = vmul.f32 1.0, %v3986
          %v3988 = vrcp.pop %v3976
          %v3989 = vmul.f32 1.0, %v3988
          %v3990 = vrcp.pop %v3977
          %v3991 = vmul.f32 1.0, %v3990
          %v3992 = vrcp.pop %v3978
          %v3993 = vmul.f32 1.0, %v3992
          %v3994 = vrcp.pop %v3979
          %v3995 = vmul.f32 1.0, %v3994
          %v3996 = vmul.f32 %v3985, 2.0
          %v3997 = vmul.f32 %v3993, 2.0
          %v3998 = vsub.f32 %v3996, 1.0
          %v3999 = vsub.f32 %v3997, 1.0
          %v4000 = vmul.f32 %v3983, %v2942
          %v4001 = vmul.f32 %v3991, %v2943
          %v4002 = vmul.f32 %v3981, %v3998
          %v4003 = vmul.f32 %v3989, %v3999
          %v4004 = vadd.f32 %v4000, %v4002
          %v4005 = vadd.f32 %v4001, %v4003
          %v4006 = vtanh.pop %v4004
          %v4007 = vtanh.pop %v4005
          %v4008 = vmul.f32 %v3987, %v4006
          %v4009 = vmul.f32 %v3995, %v4007
          %s4010 = scalar_lea.vmem [#allocation6], %s2935
          %4011 = vst [vmem:[%s4010] sm:$0x1] %v4008
          %s4012 = scalar_lea.vmem [#allocation7], %s2945
          %4013 = vst [vmem:[%s4012] sm:$0x1] %v4009
        $region89: #{multi_encoder_forward.1} parent=51 // loop_footer
          %s2937 = sadd.s32 %s2935, 1
        $region90: #{multi_encoder_forward.1} parent=51 // loop_footer_branch
          %2934 = sbr.rel target = $region86
        $region91: #{multi_encoder_forward.1} parent=51 // loop_exit
          _
        %p4014 = scmp.eq.s32.totalorder %s35, 0
        // Predicated region
        $region92: #{multi_encoder_forward.1} parent=51 // pred_check
          %p4015 = pneg %p4014
        $region93: #{multi_encoder_forward.1} parent=51 // pred_check_branch
          %4017 = sbr.rel (%p4015) target = $region95
        $region94: #{multi_encoder_forward.1} parent=51 // pred_region
          %4018 = vst [vmem:[#allocation24] sm:$0xff] 0.0
          %4019 = vst [vmem:[#allocation24 + $0x8] sm:$0xff] 0.0
          %4020 = vst [vmem:[#allocation24 + $0x10] sm:$0xff] 0.0
          %4021 = vst [vmem:[#allocation24 + $0x18] sm:$0xff] 0.0
        $region95: #{multi_encoder_forward.1} parent=51 // pred_fallthru
          _
        %v4022 = vld [vmem:[#allocation6] sm:$0xff]
        %v4023 = vld [vmem:[#allocation6 + $0x8] sm:$0xff]
        %v4024 = vld [vmem:[#allocation7] sm:$0xff]
        %v4025 = vld [vmem:[#allocation7 + $0x8] sm:$0xff]
        %v4026 = vld [vmem:[#allocation24] sm:$0xff]
        %v4027 = vld [vmem:[#allocation24 + $0x8] sm:$0xff]
        %v4028 = vld [vmem:[#allocation24 + $0x10] sm:$0xff]
        %v4029 = vld [vmem:[#allocation24 + $0x18] sm:$0xff]
        %v4030 = vld [vmem:[%s500] sm:$0xff]
        %v4031 = vld [vmem:[%s500 + $0x8] sm:$0xff]
        %4033 = vset.pattern.permute.xlu0 0
        %4034 = vperm.xlu0 %4033, %v4030
        %v4035 = vpop.permute.xlu0 %4034
        %4038 = vset.pattern.permute.xlu0 0
        %4039 = vperm.xlu0 %4038, %v4031
        %v4040 = vpop.permute.xlu0 %4039
        %v4042 = vmul.f32 %v4035, %v4022
        %v4043 = vmul.f32 %v4035, %v4024
        %v4044 = vmul.f32 %v4040, %v4023
        %v4045 = vmul.f32 %v4040, %v4025
        %v4046 = vadd.f32 %v4026, %v4042
        %v4047 = vadd.f32 %v4027, %v4043
        %v4048 = vadd.f32 %v4028, %v4044
        %v4049 = vadd.f32 %v4029, %v4045
        %4050 = vst [vmem:[#allocation24] sm:$0xff] %v4046
        %4051 = vst [vmem:[#allocation24 + $0x8] sm:$0xff] %v4047
        %4052 = vst [vmem:[#allocation24 + $0x10] sm:$0xff] %v4048
        %4053 = vst [vmem:[#allocation24 + $0x18] sm:$0xff] %v4049
        // Predicated region
        $region96: #{multi_encoder_forward.1} parent=51 // pred_check
          %p4054 = pneg %p251
        $region97: #{multi_encoder_forward.1} parent=51 // pred_check_branch
          %4056 = sbr.rel (%p4054) target = $region99
        $region98: #{multi_encoder_forward.1} parent=51 // pred_region
          %s4058 = ssub.s32 512, 512
          %4059 = vsyncadd [#allocation12], %s4058
          %s4060 = sshll.u32 [#allocation24], 4
          %s4061 = int_to_ptr.vmem [resolvable:$true] %s4060
          %4066 = dma.vmem_to_hbm [thread:$0]  %s4061, 512, %s9, [#allocation12], 256, 256, 16
        $region99: #{multi_encoder_forward.1} parent=51 // pred_fallthru
          _
        // Predicated region
        $region100: #{multi_encoder_forward.1} parent=51 // pred_check
          %p4067 = pneg %p251
        $region101: #{multi_encoder_forward.1} parent=51 // pred_check_branch
          %4069 = sbr.rel (%p4067) target = $region103
        $region102: #{multi_encoder_forward.1} parent=51 // pred_region
          %4070 = dma.done [#allocation12], 512
        $region103: #{multi_encoder_forward.1} parent=51 // pred_fallthru
          _
      $region52: #{multi_encoder_forward.1} parent=5 // pred_fallthru
        _
      %p4071 = scmp.le.s32.totalorder 2, %s30
      // Predicated region
      $region104: #{multi_encoder_forward.1} parent=5 // pred_check
        %p4072 = pneg %p4071
      $region105: #{multi_encoder_forward.1} parent=5 // pred_check_branch
        %4074 = sbr.rel (%p4072) target = $region107
      $region106: #{multi_encoder_forward.1} parent=5 // pred_region
        %s4075 = ssub.s32 %s30, 2
      $region107: #{multi_encoder_forward.1} parent=5 // pred_fallthru
        _
    $region6: #{multi_encoder_forward.1} parent=1 // loop_footer
      %s34 = sadd.s32 1, %s30
    $region7: #{multi_encoder_forward.1} parent=1 // loop_footer_branch
      %29 = sbr.rel target = $region3
    $region8: #{multi_encoder_forward.1} parent=1 // loop_exit
      _
    %4076 = vsyncpa [#allocation11], 1
    %s4077 = scalar_lea.sflag [#allocation11], 1
    %4078 = vsyncpa %s4077, 1
    %4079 = vsyncpa [#allocation14], 1
    %s4080 = scalar_lea.sflag [#allocation14], 1
    %4081 = vsyncpa %s4080, 1
    %4082 = vsyncpa [#allocation17], 1
    %s4083 = scalar_lea.sflag [#allocation17], 1
    %4084 = vsyncpa %s4083, 1
    %4085 = vsyncpa [#allocation20], 1
    %s4086 = scalar_lea.sflag [#allocation20], 1
    %4087 = vsyncpa %s4086, 1
    %4088 = vsyncpa [#allocation23], 1
    %s4089 = scalar_lea.sflag [#allocation23], 1
    %4090 = vsyncpa %s4089, 1
    %4091 = vsyncpa [#allocation12], 1
    %s4092 = scalar_lea.sflag [#allocation12], 1
    %4093 = vsyncpa %s4092, 1

</llo_original>
